<compile_context>
chip_gen: v7x
topology: tpu7x:2x2x1
jax: 0.10.0
libtpu: 0.0.40
codegen_flags: <defaults>
</compile_context>

<pallas_src>
import jax
import jax.numpy as jnp
from jax.experimental import pallas as pl
from jax.experimental.pallas import tpu as pltpu

EPS = 1e-5
SUBLANE = 8
LANE = 128


def _round_up(x, m):
    return ((x + m - 1) // m) * m


# ----------------------------------------------------------------------------
# Pallas kernel (transposed [feature, sample] layout)
# ----------------------------------------------------------------------------
def _build_fgn_kernel(num_layers, layer_in_dims, gb_offsets, matmul_dtype):
    """Kernel over one (batch b, sample-tile s) grid cell.

    Ref order:
      x      [D0, 1]                  (this batch element's input column)
      noise  [L, tile_s]              (this sample tile, transposed)
      WnT [L, L], bnT [L, 1]          (noise encoder, resident)
      WgbT [GB, L], bgbT [GB, 1]      (fused cond-norm projections, resident)
      per layer i: WiT [D_{i+1}, D_i], biT [D_{i+1}, 1]   (resident)
      out    [D_out, tile_s]
    """

    def kernel(*refs):
        x_ref, noise_ref, wn_ref, bn_ref, wgb_ref, bgb_ref = refs[:6]
        out_ref = refs[-1]
        lrefs = refs[6:-1]  # 2 refs per layer: WiT, biT

        # Noise encoder: enc = Wn^T @ noise + bn   -> [L, tile_s]
        enc = (
            jnp.dot(wn_ref[...], noise_ref[...],
                    preferred_element_type=jnp.float32)
            + bn_ref[...]
        )

        # All conditional-norm gamma/beta projections in ONE matmul, hoisted
        # out of the layer loop (gamma+bg / beta+bb already folded into bgb).
        gb = (
            jnp.dot(wgb_ref[...], enc.astype(matmul_dtype),
                    preferred_element_type=jnp.float32)
            + bgb_ref[...]
        )

        # Layer-0 LayerNorm on the single [D0, 1] input column (identical for
        # every sample); two-pass variance; broadcast across sample lanes via
        # the per-sample gamma/beta below.
        xc = x_ref[...]                                       # [D0, 1] f32
        m0 = jnp.mean(xc, axis=0, keepdims=True)
        d0 = xc - m0
        v0 = jnp.mean(d0 * d0, axis=0, keepdims=True)
        x_norm = d0 * jax.lax.rsqrt(v0 + EPS)                 # [D0, 1]

        h = None
        for i in range(num_layers):
            di = layer_in_dims[i]
            g_off, b_off = gb_offsets[i]
            gamma_c = gb[g_off:g_off + di, :]                 # [di, tile_s]
            beta_c = gb[b_off:b_off + di, :]

            if i == 0:
                h = gamma_c * x_norm + beta_c                 # lane broadcast
            else:
                # Conditional LayerNorm (reduction over the sublane/feature
                # axis), two-pass variance (unbiased=False).
                m = jnp.mean(h, axis=0, keepdims=True)
                d = h - m
                var = jnp.mean(d * d, axis=0, keepdims=True)
                h_norm = d * jax.lax.rsqrt(var + EPS)
                h = gamma_c * h_norm + beta_c

            # Linear layer: h <- W_i^T @ h + b_i
            w_ref, b_ref = lrefs[2 * i], lrefs[2 * i + 1]
            h = (
                jnp.dot(w_ref[...], h.astype(matmul_dtype),
                        preferred_element_type=jnp.float32)
                + b_ref[...]
            )

            # ReLU on all but the last layer (non_linear=True, 'relu').
            if i < num_layers - 1:
                h = jnp.maximum(h, 0.0)

        out_ref[...] = h                                      # [D_out, tile_s]

    return kernel


# ----------------------------------------------------------------------------
# One-time parameter fusion (build time, NOT per forward call)
# ----------------------------------------------------------------------------
def fuse_params(params, matmul_dtype=jnp.float32):
    """Fuses per-layer cond-norm projections into one wide (transposed) matmul.

    Each layer's gamma/beta chunk is padded only to an 8-row sublane boundary
    (chunks sit on the sublane axis in the transposed layout), and
    gamma_i + bg_i / beta_i + bb_i are folded into a single bias column.
    Matmul weights are stored transposed and cast once to `matmul_dtype`.
    """
    layers = params["layers"]
    L = params["Wn"].shape[0]
    w_rows, b_rows, offsets = [], [], []
    off = 0
    for lp in layers:
        di = lp["W"].shape[0]
        dpad = _round_up(di, SUBLANE)
        wg = jnp.zeros((dpad, L), jnp.float32).at[:di, :].set(lp["Wg"].T)
        bg = jnp.zeros((dpad, 1), jnp.float32).at[:di, :].set((lp["gamma"] + lp["bg"]).T)
        wb = jnp.zeros((dpad, L), jnp.float32).at[:di, :].set(lp["Wb"].T)
        bb = jnp.zeros((dpad, 1), jnp.float32).at[:di, :].set((lp["beta"] + lp["bb"]).T)
        w_rows += [wg, wb]
        b_rows += [bg, bb]
        offsets.append((off, off + dpad))
        off += 2 * dpad

    return dict(
        WnT=params["Wn"].T.astype(matmul_dtype),
        bnT=params["bn"].T.astype(jnp.float32),               # [L, 1]
        WgbT=jnp.concatenate(w_rows, axis=0).astype(matmul_dtype),
        bgbT=jnp.concatenate(b_rows, axis=0).astype(jnp.float32),
        WsT=[lp["W"].T.astype(matmul_dtype) for lp in layers],
        bsT=[lp["b"].T.astype(jnp.float32) for lp in layers],
        gb_offsets=tuple(offsets),
        layer_in_dims=tuple(int(lp["W"].shape[0]) for lp in layers),
        out_dim=int(layers[-1]["W"].shape[1]),
        matmul_dtype=matmul_dtype,
    )


# ----------------------------------------------------------------------------
# Forward wrapper
# ----------------------------------------------------------------------------
def fgn_encoder_sampler_forward(x, noise, fused, *, max_tile_rows=2048):
    """x: [B, D0], noise: [B, S, L] -> samples [B, S, out_dim]."""
    B, S, L = noise.shape
    D0 = x.shape[-1]
    num_layers = len(fused["WsT"])
    out_dim = fused["out_dim"]
    gb_tot = fused["WgbT"].shape[0]
    mdt = fused["matmul_dtype"]
    mdt_size = jnp.dtype(mdt).itemsize

    # Generation-aware VMEM budget (<= ~75% of physical VMEM; leaves room for
    # Mosaic internal scratch): ~48 MiB on v7x, ~96 MiB on v5e/v6e.
    try:
        vmem_cap = int(pltpu.get_tpu_info().vmem_capacity_bytes)
    except Exception:
        vmem_cap = 64 * 2**20          # conservative default == v7x
    vmem_budget = vmem_cap * 3 // 4

    weight_arrays = [fused["WnT"], fused["bnT"], fused["WgbT"], fused["bgbT"]]
    for WT, bT in zip(fused["WsT"], fused["bsT"]):
        weight_arrays += [WT, bT]
    weight_bytes = sum(int(a.size) * a.dtype.itemsize for a in weight_arrays)

    # Per sample-column working bytes: gb temp (dominant) + a few live
    # activations + double-buffered streamed noise/out tiles.
    max_d = max([D0, out_dim] + list(fused["layer_in_dims"]))
    bytes_per_col = 4 * (gb_tot + 3 * max_d) + 2 * (L * mdt_size + out_dim * 4)

    # Sample-tile size: either all of S in one tile, or a budget-derived
    # multiple of 128 lanes (so multi-tile blocks stay lane-aligned).
    s8 = _round_up(S, 8)
    budget_cols = (vmem_budget - 2 * weight_bytes - (4 << 20)) // max(bytes_per_col, 1)
    if s8 <= max_tile_rows and s8 <= max(budget_cols, 8):
        tile_s = s8
    else:
        tile_s = int(max(LANE, (min(max_tile_rows, max(budget_cols, LANE)) // LANE) * LANE))
    S_pad = _round_up(S, tile_s)

    # Transposed, lane-dense inputs (layout plumbing only).
    x_col = x.astype(jnp.float32)[:, :, None]                 # [B, D0, 1]
    noise_t = jnp.swapaxes(noise, 1, 2).astype(mdt)           # [B, L, S]
    if S_pad != S:
        noise_t = jnp.pad(noise_t, ((0, 0), (0, 0), (0, S_pad - S)))

    kernel = _build_fgn_kernel(num_layers, fused["layer_in_dims"],
                               fused["gb_offsets"], mdt)

    # VMEM limit: resident weights + per-tile working set, clamped to budget.
    per_tile_bytes = tile_s * bytes_per_col
    need = 2 * weight_bytes + per_tile_bytes + (4 << 20)
    vmem_limit = int(min(vmem_budget, max(2 * need, 32 << 20)))

    # Advisory cost estimate for XLA scheduling around the kernel.
    N = B * S_pad
    dims = list(fused["layer_in_dims"]) + [out_dim]
    flops = 2 * N * (L * L + L * gb_tot)
    for i in range(num_layers):
        flops += 2 * N * dims[i] * dims[i + 1] + 10 * N * dims[i]
    bytes_accessed = (weight_bytes + int(x_col.size) * 4
                      + int(noise_t.size) * mdt_size + N * out_dim * 4)
    cost = pl.CostEstimate(flops=int(flops),
                           transcendentals=int((num_layers - 1) * N + B),
                           bytes_accessed=int(bytes_accessed))

    inputs = [x_col, noise_t] + weight_arrays

    def build_call(single_buffer_weights):
        def resident(arr):
            ndim = arr.ndim
            kwargs = {}
            if single_buffer_weights:
                # Constant index_map -> single-buffer the resident weights.
                kwargs["pipeline_mode"] = pl.Buffered(buffer_count=1)
            return pl.BlockSpec(tuple(arr.shape), lambda b, s: (0,) * ndim, **kwargs)

        in_specs = [
            pl.BlockSpec((None, D0, 1), lambda b, s: (b, 0, 0)),       # x column
            pl.BlockSpec((None, L, tile_s), lambda b, s: (b, 0, s)),   # noise tile
            resident(fused["WnT"]), resident(fused["bnT"]),
            resident(fused["WgbT"]), resident(fused["bgbT"]),
        ]
        for WT, bT in zip(fused["WsT"], fused["bsT"]):
            in_specs += [resident(WT), resident(bT)]
        out_spec = pl.BlockSpec((None, out_dim, tile_s), lambda b, s: (b, 0, s))

        # Both grid axes independent; with B even (or a single sample tile) at
        # least one parallel extent is divisible by 2 for v7x megacore balance.
        return pl.pallas_call(
            kernel,
            out_shape=jax.ShapeDtypeStruct((B, out_dim, S_pad), jnp.float32),
            grid=(B, S_pad // tile_s),
            in_specs=in_specs,
            out_specs=out_spec,
            compiler_params=pltpu.CompilerParams(
                dimension_semantics=("parallel", "parallel"),
                vmem_limit_bytes=vmem_limit),
            cost_estimate=cost,
        )

    try:
        out_t = build_call(True)(*inputs)
    except Exception:
        # Older jax without single-buffer pipeline_mode support on pallas_call.
        out_t = build_call(False)(*inputs)

    out = jnp.swapaxes(out_t, 1, 2)            # [B, S_pad, out_dim]
    if S_pad != S:
        out = out[:, :S, :]
    return out


# ----------------------------------------------------------------------------
# Deterministic parameter construction (PyTorch-shaped, synthetic init)
# ----------------------------------------------------------------------------
def make_params(key, input_size, hidden_sizes, output_size, latent_dim):
    """Linear weights stored as [in, out]; biases/gamma/beta as [1, dim] rows."""

    def linear(k, fan_in, fan_out):
        kw, kb = jax.random.split(k)
        scale = 1.0 / jnp.sqrt(jnp.float32(fan_in))
        W = jax.random.uniform(kw, (fan_in, fan_out), jnp.float32, -scale, scale)
        b = jax.random.uniform(kb, (1, fan_out), jnp.float32, -scale, scale)
        return W, b

    keys = jax.random.split(key, 2 + 3 * (len(hidden_sizes) + 1))
    ki = iter(keys)

    Wn, bn = linear(next(ki), latent_dim, latent_dim)

    layer_sizes = [input_size] + list(hidden_sizes) + [output_size]
    layers = []
    for i in range(len(layer_sizes) - 1):
        din, dout = layer_sizes[i], layer_sizes[i + 1]
        Wg, bg = linear(next(ki), latent_dim, din)
        Wb, bb = linear(next(ki), latent_dim, din)
        W, b = linear(next(ki), din, dout)
        layers.append(dict(
            gamma=jnp.ones((1, din), jnp.float32),
            beta=jnp.zeros((1, din), jnp.float32),
            Wg=Wg, bg=bg, Wb=Wb, bb=bb, W=W, b=b,
        ))
    return dict(Wn=Wn, bn=bn, layers=layers)


# ----------------------------------------------------------------------------
# Pure-JAX reference (mirrors the PyTorch forward, uses UNFUSED params)
# ----------------------------------------------------------------------------
def reference_forward(x, noise, params):
    batch, n_samples, latent_dim = noise.shape
    N = batch * n_samples
    x_rep = jnp.broadcast_to(x[:, None, :], (batch, n_samples, x.shape[-1]))
    h = x_rep.reshape(N, -1)
    noise_flat = noise.reshape(N, latent_dim)
    enc = noise_flat @ params["Wn"] + params["bn"]
    layers = params["layers"]
    for i, lp in enumerate(layers):
        mean = h.mean(-1, keepdims=True)
        var = ((h - mean) ** 2).mean(-1, keepdims=True)
        hn = (h - mean) / jnp.sqrt(var + 1e-5)
        gc = lp["gamma"] + enc @ lp["Wg"] + lp["bg"]
        bc = lp["beta"] + enc @ lp["Wb"] + lp["bb"]
        h = gc * hn + bc
        h = h @ lp["W"] + lp["b"]
        if i < len(layers) - 1:
            h = jnp.maximum(h, 0.0)
    return h.reshape(batch, n_samples, -1)


# ----------------------------------------------------------------------------
if __name__ == "__main__":
    # Small, module-consistent config.
    batch_size = 2
    n_samples = 8
    input_size = 4
    hidden_sizes = [32, 32]   # n_layers = 2
    latent_dim = 16
    output_size = 2

    key = jax.random.PRNGKey(0)
    k_param, k_x, k_noise = jax.random.split(key, 3)

    params = make_params(k_param, input_size, hidden_sizes, output_size, latent_dim)
    x = jax.random.normal(k_x, (batch_size, input_size), jnp.float32)
    # Gaussian noise that torch.randn would produce inside forward().
    noise = jax.random.normal(k_noise, (batch_size, n_samples, latent_dim), jnp.float32)

    ref = reference_forward(x, noise, params)

    # f32 matmul operands: tight check against the reference.
    fused_f32 = fuse_params(params, matmul_dtype=jnp.float32)
    out = jax.block_until_ready(fgn_encoder_sampler_forward(x, noise, fused_f32))
    assert out.shape == (batch_size, n_samples, output_size), out.shape
    assert jnp.allclose(out, ref, atol=2e-4, rtol=2e-4), (
        "Pallas kernel (f32) does not match reference; max abs diff = "
        f"{float(jnp.max(jnp.abs(out - ref)))}"
    )

    # bf16 matmul operands (v6e/v7x fast path): loose check only.
    fused_bf16 = fuse_params(params, matmul_dtype=jnp.bfloat16)
    out_bf16 = jax.block_until_ready(fgn_encoder_sampler_forward(x, noise, fused_bf16))
    assert jnp.allclose(out_bf16, ref, atol=1e-1, rtol=1e-1), (
        "Pallas kernel (bf16 matmuls) deviates too far from reference; "
        f"max abs diff = {float(jnp.max(jnp.abs(out_bf16 - ref)))}"
    )

    print("KERNEL_OK")
</pallas_src>

<mosaic_0001>
module attributes {stable_mosaic.version = 11 : i64} {
  func.func @kernel(%arg0: i32, %arg1: i32, %arg2: memref<1x4x1xf32, #tpu.memory_space<vmem>>, %arg3: memref<1x16x8xf32, #tpu.memory_space<vmem>>, %arg4: memref<16x16xf32, #tpu.memory_space<vmem>>, %arg5: memref<16x1xf32, #tpu.memory_space<vmem>>, %arg6: memref<144x16xf32, #tpu.memory_space<vmem>>, %arg7: memref<144x1xf32, #tpu.memory_space<vmem>>, %arg8: memref<32x4xf32, #tpu.memory_space<vmem>>, %arg9: memref<32x1xf32, #tpu.memory_space<vmem>>, %arg10: memref<32x32xf32, #tpu.memory_space<vmem>>, %arg11: memref<32x1xf32, #tpu.memory_space<vmem>>, %arg12: memref<2x32xf32, #tpu.memory_space<vmem>>, %arg13: memref<2x1xf32, #tpu.memory_space<vmem>>, %arg14: memref<1x2x8xf32, #tpu.memory_space<vmem>>) attributes {dimension_semantics = [#tpu.dimension_semantics<parallel>, #tpu.dimension_semantics<parallel>], iteration_bounds = array<i64: 2, 1>, scalar_prefetch = 0 : i64, scratch_operands = 0 : i64, tpu.core_type = #tpu.core_type<tc>, window_params = [{transform_indices = @transform_0, window_bounds = array<i64: 1, 4, 1>}, {transform_indices = @transform_1, window_bounds = array<i64: 1, 16, 8>}, {pipeline_mode = #tpu.pipeline_mode<synchronous>, transform_indices = @transform_2, window_bounds = array<i64: 16, 16>}, {pipeline_mode = #tpu.pipeline_mode<synchronous>, transform_indices = @transform_3, window_bounds = array<i64: 16, 1>}, {pipeline_mode = #tpu.pipeline_mode<synchronous>, transform_indices = @transform_4, window_bounds = array<i64: 144, 16>}, {pipeline_mode = #tpu.pipeline_mode<synchronous>, transform_indices = @transform_5, window_bounds = array<i64: 144, 1>}, {pipeline_mode = #tpu.pipeline_mode<synchronous>, transform_indices = @transform_6, window_bounds = array<i64: 32, 4>}, {pipeline_mode = #tpu.pipeline_mode<synchronous>, transform_indices = @transform_7, window_bounds = array<i64: 32, 1>}, {pipeline_mode = #tpu.pipeline_mode<synchronous>, transform_indices = @transform_8, window_bounds = array<i64: 32, 32>}, {pipeline_mode = #tpu.pipeline_mode<synchronous>, transform_indices = @transform_9, window_bounds = array<i64: 32, 1>}, {pipeline_mode = #tpu.pipeline_mode<synchronous>, transform_indices = @transform_10, window_bounds = array<i64: 2, 32>}, {pipeline_mode = #tpu.pipeline_mode<synchronous>, transform_indices = @transform_11, window_bounds = array<i64: 2, 1>}, {transform_indices = @transform_12, window_bounds = array<i64: 1, 2, 8>}]} {
    %c0 = arith.constant 0 : index
    %c0_0 = arith.constant 0 : index
    %0 = vector.load %arg4[%c0, %c0_0] : memref<16x16xf32, #tpu.memory_space<vmem>>, vector<16x16xf32>
    %c0_1 = arith.constant 0 : index
    %c0_2 = arith.constant 0 : index
    %c0_3 = arith.constant 0 : index
    %1 = vector.load %arg3[%c0_1, %c0_2, %c0_3] : memref<1x16x8xf32, #tpu.memory_space<vmem>>, vector<1x16x8xf32>
    %2 = vector.shape_cast %1 : vector<1x16x8xf32> to vector<16x8xf32>
    %cst = arith.constant dense<0.000000e+00> : vector<16x8xf32>
    %3 = tpu.matmul %0, %2, %cst {dimension_numbers = #tpu.dot_dimension_numbers<[1], [0], [0], [1], [0, 0, 1, 1], [], []>} : vector<16x16xf32>, vector<16x8xf32>, vector<16x8xf32> -> vector<16x8xf32>
    %c0_4 = arith.constant 0 : index
    %c0_5 = arith.constant 0 : index
    %4 = vector.load %arg5[%c0_4, %c0_5] : memref<16x1xf32, #tpu.memory_space<vmem>>, vector<16x1xf32>
    %5 = vector.broadcast %4 : vector<16x1xf32> to vector<16x8xf32>
    %6 = arith.addf %3, %5 : vector<16x8xf32>
    %c0_6 = arith.constant 0 : index
    %c0_7 = arith.constant 0 : index
    %7 = vector.load %arg6[%c0_6, %c0_7] : memref<144x16xf32, #tpu.memory_space<vmem>>, vector<144x16xf32>
    %cst_8 = arith.constant dense<0.000000e+00> : vector<144x8xf32>
    %8 = tpu.matmul %7, %6, %cst_8 {dimension_numbers = #tpu.dot_dimension_numbers<[1], [0], [0], [1], [0, 0, 1, 1], [], []>} : vector<144x16xf32>, vector<16x8xf32>, vector<144x8xf32> -> vector<144x8xf32>
    %c0_9 = arith.constant 0 : index
    %c0_10 = arith.constant 0 : index
    %9 = vector.load %arg7[%c0_9, %c0_10] : memref<144x1xf32, #tpu.memory_space<vmem>>, vector<144x1xf32>
    %10 = vector.broadcast %9 : vector<144x1xf32> to vector<144x8xf32>
    %11 = arith.addf %8, %10 : vector<144x8xf32>
    %c0_11 = arith.constant 0 : index
    %c0_12 = arith.constant 0 : index
    %c0_13 = arith.constant 0 : index
    %12 = vector.load %arg2[%c0_11, %c0_12, %c0_13] : memref<1x4x1xf32, #tpu.memory_space<vmem>>, vector<1x4x1xf32>
    %13 = vector.shape_cast %12 : vector<1x4x1xf32> to vector<4x1xf32>
    %cst_14 = arith.constant dense<0.000000e+00> : vector<1xf32>
    %14 = vector.multi_reduction <add>, %13, %cst_14 [0] : vector<4x1xf32> to vector<1xf32>
    %15 = vector.shape_cast %14 : vector<1xf32> to vector<1x1xf32>
    %cst_15 = arith.constant 4.000000e+00 : f32
    %16 = vector.broadcast %cst_15 : f32 to vector<1x1xf32>
    %17 = arith.divf %15, %16 : vector<1x1xf32>
    %18 = vector.broadcast %17 : vector<1x1xf32> to vector<4x1xf32>
    %19 = arith.subf %13, %18 : vector<4x1xf32>
    %20 = arith.mulf %19, %19 : vector<4x1xf32>
    %cst_16 = arith.constant dense<0.000000e+00> : vector<1xf32>
    %21 = vector.multi_reduction <add>, %20, %cst_16 [0] : vector<4x1xf32> to vector<1xf32>
    %22 = vector.shape_cast %21 : vector<1xf32> to vector<1x1xf32>
    %cst_17 = arith.constant 4.000000e+00 : f32
    %23 = vector.broadcast %cst_17 : f32 to vector<1x1xf32>
    %24 = arith.divf %22, %23 : vector<1x1xf32>
    %cst_18 = arith.constant 9.99999974E-6 : f32
    %25 = vector.broadcast %cst_18 : f32 to vector<1x1xf32>
    %26 = arith.addf %24, %25 : vector<1x1xf32>
    %27 = math.rsqrt %26 : vector<1x1xf32>
    %28 = vector.broadcast %27 : vector<1x1xf32> to vector<4x1xf32>
    %29 = arith.mulf %19, %28 : vector<4x1xf32>
    %30 = vector.extract_strided_slice %11 {offsets = [0, 0], sizes = [4, 8], strides = [1, 1]} : vector<144x8xf32> to vector<4x8xf32>
    %31 = vector.extract_strided_slice %11 {offsets = [8, 0], sizes = [4, 8], strides = [1, 1]} : vector<144x8xf32> to vector<4x8xf32>
    %32 = vector.broadcast %29 : vector<4x1xf32> to vector<4x8xf32>
    %33 = arith.mulf %30, %32 : vector<4x8xf32>
    %34 = arith.addf %33, %31 : vector<4x8xf32>
    %c0_19 = arith.constant 0 : index
    %c0_20 = arith.constant 0 : index
    %35 = vector.load %arg8[%c0_19, %c0_20] : memref<32x4xf32, #tpu.memory_space<vmem>>, vector<32x4xf32>
    %cst_21 = arith.constant dense<0.000000e+00> : vector<32x8xf32>
    %36 = tpu.matmul %35, %34, %cst_21 {dimension_numbers = #tpu.dot_dimension_numbers<[1], [0], [0], [1], [0, 0, 1, 1], [], []>} : vector<32x4xf32>, vector<4x8xf32>, vector<32x8xf32> -> vector<32x8xf32>
    %c0_22 = arith.constant 0 : index
    %c0_23 = arith.constant 0 : index
    %37 = vector.load %arg9[%c0_22, %c0_23] : memref<32x1xf32, #tpu.memory_space<vmem>>, vector<32x1xf32>
    %38 = vector.broadcast %37 : vector<32x1xf32> to vector<32x8xf32>
    %39 = arith.addf %36, %38 : vector<32x8xf32>
    %cst_24 = arith.constant 0.000000e+00 : f32
    %40 = vector.broadcast %cst_24 : f32 to vector<32x8xf32>
    %41 = arith.maximumf %39, %40 : vector<32x8xf32>
    %42 = vector.extract_strided_slice %11 {offsets = [16, 0], sizes = [32, 8], strides = [1, 1]} : vector<144x8xf32> to vector<32x8xf32>
    %43 = vector.extract_strided_slice %11 {offsets = [48, 0], sizes = [32, 8], strides = [1, 1]} : vector<144x8xf32> to vector<32x8xf32>
    %cst_25 = arith.constant dense<0.000000e+00> : vector<8xf32>
    %44 = vector.multi_reduction <add>, %41, %cst_25 [0] : vector<32x8xf32> to vector<8xf32>
    %45 = vector.shape_cast %44 : vector<8xf32> to vector<1x8xf32>
    %cst_26 = arith.constant 3.200000e+01 : f32
    %46 = vector.broadcast %cst_26 : f32 to vector<1x8xf32>
    %47 = arith.divf %45, %46 : vector<1x8xf32>
    %48 = vector.broadcast %47 : vector<1x8xf32> to vector<32x8xf32>
    %49 = arith.subf %41, %48 : vector<32x8xf32>
    %50 = arith.mulf %49, %49 : vector<32x8xf32>
    %cst_27 = arith.constant dense<0.000000e+00> : vector<8xf32>
    %51 = vector.multi_reduction <add>, %50, %cst_27 [0] : vector<32x8xf32> to vector<8xf32>
    %52 = vector.shape_cast %51 : vector<8xf32> to vector<1x8xf32>
    %cst_28 = arith.constant 3.200000e+01 : f32
    %53 = vector.broadcast %cst_28 : f32 to vector<1x8xf32>
    %54 = arith.divf %52, %53 : vector<1x8xf32>
    %cst_29 = arith.constant 9.99999974E-6 : f32
    %55 = vector.broadcast %cst_29 : f32 to vector<1x8xf32>
    %56 = arith.addf %54, %55 : vector<1x8xf32>
    %57 = math.rsqrt %56 : vector<1x8xf32>
    %58 = vector.broadcast %57 : vector<1x8xf32> to vector<32x8xf32>
    %59 = arith.mulf %49, %58 : vector<32x8xf32>
    %60 = arith.mulf %42, %59 : vector<32x8xf32>
    %61 = arith.addf %60, %43 : vector<32x8xf32>
    %c0_30 = arith.constant 0 : index
    %c0_31 = arith.constant 0 : index
    %62 = vector.load %arg10[%c0_30, %c0_31] : memref<32x32xf32, #tpu.memory_space<vmem>>, vector<32x32xf32>
    %cst_32 = arith.constant dense<0.000000e+00> : vector<32x8xf32>
    %63 = tpu.matmul %62, %61, %cst_32 {dimension_numbers = #tpu.dot_dimension_numbers<[1], [0], [0], [1], [0, 0, 1, 1], [], []>} : vector<32x32xf32>, vector<32x8xf32>, vector<32x8xf32> -> vector<32x8xf32>
    %c0_33 = arith.constant 0 : index
    %c0_34 = arith.constant 0 : index
    %64 = vector.load %arg11[%c0_33, %c0_34] : memref<32x1xf32, #tpu.memory_space<vmem>>, vector<32x1xf32>
    %65 = vector.broadcast %64 : vector<32x1xf32> to vector<32x8xf32>
    %66 = arith.addf %63, %65 : vector<32x8xf32>
    %cst_35 = arith.constant 0.000000e+00 : f32
    %67 = vector.broadcast %cst_35 : f32 to vector<32x8xf32>
    %68 = arith.maximumf %66, %67 : vector<32x8xf32>
    %69 = vector.extract_strided_slice %11 {offsets = [80, 0], sizes = [32, 8], strides = [1, 1]} : vector<144x8xf32> to vector<32x8xf32>
    %70 = vector.extract_strided_slice %11 {offsets = [112, 0], sizes = [32, 8], strides = [1, 1]} : vector<144x8xf32> to vector<32x8xf32>
    %cst_36 = arith.constant dense<0.000000e+00> : vector<8xf32>
    %71 = vector.multi_reduction <add>, %68, %cst_36 [0] : vector<32x8xf32> to vector<8xf32>
    %72 = vector.shape_cast %71 : vector<8xf32> to vector<1x8xf32>
    %cst_37 = arith.constant 3.200000e+01 : f32
    %73 = vector.broadcast %cst_37 : f32 to vector<1x8xf32>
    %74 = arith.divf %72, %73 : vector<1x8xf32>
    %75 = vector.broadcast %74 : vector<1x8xf32> to vector<32x8xf32>
    %76 = arith.subf %68, %75 : vector<32x8xf32>
    %77 = arith.mulf %76, %76 : vector<32x8xf32>
    %cst_38 = arith.constant dense<0.000000e+00> : vector<8xf32>
    %78 = vector.multi_reduction <add>, %77, %cst_38 [0] : vector<32x8xf32> to vector<8xf32>
    %79 = vector.shape_cast %78 : vector<8xf32> to vector<1x8xf32>
    %cst_39 = arith.constant 3.200000e+01 : f32
    %80 = vector.broadcast %cst_39 : f32 to vector<1x8xf32>
    %81 = arith.divf %79, %80 : vector<1x8xf32>
    %cst_40 = arith.constant 9.99999974E-6 : f32
    %82 = vector.broadcast %cst_40 : f32 to vector<1x8xf32>
    %83 = arith.addf %81, %82 : vector<1x8xf32>
    %84 = math.rsqrt %83 : vector<1x8xf32>
    %85 = vector.broadcast %84 : vector<1x8xf32> to vector<32x8xf32>
    %86 = arith.mulf %76, %85 : vector<32x8xf32>
    %87 = arith.mulf %69, %86 : vector<32x8xf32>
    %88 = arith.addf %87, %70 : vector<32x8xf32>
    %c0_41 = arith.constant 0 : index
    %c0_42 = arith.constant 0 : index
    %89 = vector.load %arg12[%c0_41, %c0_42] : memref<2x32xf32, #tpu.memory_space<vmem>>, vector<2x32xf32>
    %cst_43 = arith.constant dense<0.000000e+00> : vector<2x8xf32>
    %90 = tpu.matmul %89, %88, %cst_43 {dimension_numbers = #tpu.dot_dimension_numbers<[1], [0], [0], [1], [0, 0, 1, 1], [], []>} : vector<2x32xf32>, vector<32x8xf32>, vector<2x8xf32> -> vector<2x8xf32>
    %c0_44 = arith.constant 0 : index
    %c0_45 = arith.constant 0 : index
    %91 = vector.load %arg13[%c0_44, %c0_45] : memref<2x1xf32, #tpu.memory_space<vmem>>, vector<2x1xf32>
    %92 = vector.broadcast %91 : vector<2x1xf32> to vector<2x8xf32>
    %93 = arith.addf %90, %92 : vector<2x8xf32>
    %c0_46 = arith.constant 0 : index
    %c0_47 = arith.constant 0 : index
    %c0_48 = arith.constant 0 : index
    %94 = vector.load %arg14[%c0_46, %c0_47, %c0_48] : memref<1x2x8xf32, #tpu.memory_space<vmem>>, vector<1x2x8xf32>
    %95 = vector.shape_cast %94 : vector<1x2x8xf32> to vector<2x8xf32>
    %96 = vector.shape_cast %93 : vector<2x8xf32> to vector<1x2x8xf32>
    tpu.vector_store %arg14[%c0_46, %c0_47, %c0_48], %96 {strides = array<i32>} : memref<1x2x8xf32, #tpu.memory_space<vmem>>, vector<1x2x8xf32>,
    return
  }
  func.func @transform_0(%arg0: i32, %arg1: i32) -> (i32, i32, i32) {
    %c0_i32 = arith.constant 0 : i32
    %c0_i32_0 = arith.constant 0 : i32
    %c0_i32_1 = arith.constant 0 : i32
    return %arg0, %c0_i32, %c0_i32_0 : i32, i32, i32
  }
  func.func @transform_1(%arg0: i32, %arg1: i32) -> (i32, i32, i32) {
    %c0_i32 = arith.constant 0 : i32
    %c0_i32_0 = arith.constant 0 : i32
    return %arg0, %c0_i32, %arg1 : i32, i32, i32
  }
  func.func @transform_2(%arg0: i32, %arg1: i32) -> (i32, i32) {
    %c0_i32 = arith.constant 0 : i32
    %c0_i32_0 = arith.constant 0 : i32
    %c0_i32_1 = arith.constant 0 : i32
    return %c0_i32, %c0_i32_0 : i32, i32
  }
  func.func @transform_3(%arg0: i32, %arg1: i32) -> (i32, i32) {
    %c0_i32 = arith.constant 0 : i32
    %c0_i32_0 = arith.constant 0 : i32
    %c0_i32_1 = arith.constant 0 : i32
    return %c0_i32, %c0_i32_0 : i32, i32
  }
  func.func @transform_4(%arg0: i32, %arg1: i32) -> (i32, i32) {
    %c0_i32 = arith.constant 0 : i32
    %c0_i32_0 = arith.constant 0 : i32
    %c0_i32_1 = arith.constant 0 : i32
    return %c0_i32, %c0_i32_0 : i32, i32
  }
  func.func @transform_5(%arg0: i32, %arg1: i32) -> (i32, i32) {
    %c0_i32 = arith.constant 0 : i32
    %c0_i32_0 = arith.constant 0 : i32
    %c0_i32_1 = arith.constant 0 : i32
    return %c0_i32, %c0_i32_0 : i32, i32
  }
  func.func @transform_6(%arg0: i32, %arg1: i32) -> (i32, i32) {
    %c0_i32 = arith.constant 0 : i32
    %c0_i32_0 = arith.constant 0 : i32
    %c0_i32_1 = arith.constant 0 : i32
    return %c0_i32, %c0_i32_0 : i32, i32
  }
  func.func @transform_7(%arg0: i32, %arg1: i32) -> (i32, i32) {
    %c0_i32 = arith.constant 0 : i32
    %c0_i32_0 = arith.constant 0 : i32
    %c0_i32_1 = arith.constant 0 : i32
    return %c0_i32, %c0_i32_0 : i32, i32
  }
  func.func @transform_8(%arg0: i32, %arg1: i32) -> (i32, i32) {
    %c0_i32 = arith.constant 0 : i32
    %c0_i32_0 = arith.constant 0 : i32
    %c0_i32_1 = arith.constant 0 : i32
    return %c0_i32, %c0_i32_0 : i32, i32
  }
  func.func @transform_9(%arg0: i32, %arg1: i32) -> (i32, i32) {
    %c0_i32 = arith.constant 0 : i32
    %c0_i32_0 = arith.constant 0 : i32
    %c0_i32_1 = arith.constant 0 : i32
    return %c0_i32, %c0_i32_0 : i32, i32
  }
  func.func @transform_10(%arg0: i32, %arg1: i32) -> (i32, i32) {
    %c0_i32 = arith.constant 0 : i32
    %c0_i32_0 = arith.constant 0 : i32
    %c0_i32_1 = arith.constant 0 : i32
    return %c0_i32, %c0_i32_0 : i32, i32
  }
  func.func @transform_11(%arg0: i32, %arg1: i32) -> (i32, i32) {
    %c0_i32 = arith.constant 0 : i32
    %c0_i32_0 = arith.constant 0 : i32
    %c0_i32_1 = arith.constant 0 : i32
    return %c0_i32, %c0_i32_0 : i32, i32
  }
  func.func @transform_12(%arg0: i32, %arg1: i32) -> (i32, i32, i32) {
    %c0_i32 = arith.constant 0 : i32
    %c0_i32_0 = arith.constant 0 : i32
    return %arg0, %c0_i32, %arg1 : i32, i32, i32
  }
}

module attributes {stable_mosaic.version = 11 : i64} {
  func.func @kernel(%arg0: i32, %arg1: i32, %arg2: memref<1x4x1xf32, #tpu.memory_space<vmem>>, %arg3: memref<1x16x8xf32, #tpu.memory_space<vmem>>, %arg4: memref<16x16xf32, #tpu.memory_space<vmem>>, %arg5: memref<16x1xf32, #tpu.memory_space<vmem>>, %arg6: memref<144x16xf32, #tpu.memory_space<vmem>>, %arg7: memref<144x1xf32, #tpu.memory_space<vmem>>, %arg8: memref<32x4xf32, #tpu.memory_space<vmem>>, %arg9: memref<32x1xf32, #tpu.memory_space<vmem>>, %arg10: memref<32x32xf32, #tpu.memory_space<vmem>>, %arg11: memref<32x1xf32, #tpu.memory_space<vmem>>, %arg12: memref<2x32xf32, #tpu.memory_space<vmem>>, %arg13: memref<2x1xf32, #tpu.memory_space<vmem>>, %arg14: memref<1x2x8xf32, #tpu.memory_space<vmem>>) attributes {dimension_semantics = [#tpu.dimension_semantics<parallel>, #tpu.dimension_semantics<parallel>], iteration_bounds = array<i64: 2, 1>, scalar_prefetch = 0 : i64, scratch_operands = 0 : i64, tpu.core_type = #tpu.core_type<tc>, window_params = [{transform_indices = @transform_0, window_bounds = array<i64: 1, 4, 1>}, {transform_indices = @transform_1, window_bounds = array<i64: 1, 16, 8>}, {pipeline_mode = #tpu.pipeline_mode<synchronous>, transform_indices = @transform_2, window_bounds = array<i64: 16, 16>}, {pipeline_mode = #tpu.pipeline_mode<synchronous>, transform_indices = @transform_3, window_bounds = array<i64: 16, 1>}, {pipeline_mode = #tpu.pipeline_mode<synchronous>, transform_indices = @transform_4, window_bounds = array<i64: 144, 16>}, {pipeline_mode = #tpu.pipeline_mode<synchronous>, transform_indices = @transform_5, window_bounds = array<i64: 144, 1>}, {pipeline_mode = #tpu.pipeline_mode<synchronous>, transform_indices = @transform_6, window_bounds = array<i64: 32, 4>}, {pipeline_mode = #tpu.pipeline_mode<synchronous>, transform_indices = @transform_7, window_bounds = array<i64: 32, 1>}, {pipeline_mode = #tpu.pipeline_mode<synchronous>, transform_indices = @transform_8, window_bounds = array<i64: 32, 32>}, {pipeline_mode = #tpu.pipeline_mode<synchronous>, transform_indices = @transform_9, window_bounds = array<i64: 32, 1>}, {pipeline_mode = #tpu.pipeline_mode<synchronous>, transform_indices = @transform_10, window_bounds = array<i64: 2, 32>}, {pipeline_mode = #tpu.pipeline_mode<synchronous>, transform_indices = @transform_11, window_bounds = array<i64: 2, 1>}, {transform_indices = @transform_12, window_bounds = array<i64: 1, 2, 8>}]} {
    %c0 = arith.constant 0 : index
    %c0_0 = arith.constant 0 : index
    %0 = vector.load %arg4[%c0, %c0_0] : memref<16x16xf32, #tpu.memory_space<vmem>>, vector<16x16xf32>
    %c0_1 = arith.constant 0 : index
    %c0_2 = arith.constant 0 : index
    %c0_3 = arith.constant 0 : index
    %1 = vector.load %arg3[%c0_1, %c0_2, %c0_3] : memref<1x16x8xf32, #tpu.memory_space<vmem>>, vector<1x16x8xf32>
    %2 = vector.shape_cast %1 : vector<1x16x8xf32> to vector<16x8xf32>
    %cst = arith.constant dense<0.000000e+00> : vector<16x8xf32>
    %3 = tpu.matmul %0, %2, %cst {dimension_numbers = #tpu.dot_dimension_numbers<[1], [0], [0], [1], [0, 0, 1, 1], [], []>} : vector<16x16xf32>, vector<16x8xf32>, vector<16x8xf32> -> vector<16x8xf32>
    %c0_4 = arith.constant 0 : index
    %c0_5 = arith.constant 0 : index
    %4 = vector.load %arg5[%c0_4, %c0_5] : memref<16x1xf32, #tpu.memory_space<vmem>>, vector<16x1xf32>
    %5 = vector.broadcast %4 : vector<16x1xf32> to vector<16x8xf32>
    %6 = arith.addf %3, %5 : vector<16x8xf32>
    %c0_6 = arith.constant 0 : index
    %c0_7 = arith.constant 0 : index
    %7 = vector.load %arg6[%c0_6, %c0_7] : memref<144x16xf32, #tpu.memory_space<vmem>>, vector<144x16xf32>
    %cst_8 = arith.constant dense<0.000000e+00> : vector<144x8xf32>
    %8 = tpu.matmul %7, %6, %cst_8 {dimension_numbers = #tpu.dot_dimension_numbers<[1], [0], [0], [1], [0, 0, 1, 1], [], []>} : vector<144x16xf32>, vector<16x8xf32>, vector<144x8xf32> -> vector<144x8xf32>
    %c0_9 = arith.constant 0 : index
    %c0_10 = arith.constant 0 : index
    %9 = vector.load %arg7[%c0_9, %c0_10] : memref<144x1xf32, #tpu.memory_space<vmem>>, vector<144x1xf32>
    %10 = vector.broadcast %9 : vector<144x1xf32> to vector<144x8xf32>
    %11 = arith.addf %8, %10 : vector<144x8xf32>
    %c0_11 = arith.constant 0 : index
    %c0_12 = arith.constant 0 : index
    %c0_13 = arith.constant 0 : index
    %12 = vector.load %arg2[%c0_11, %c0_12, %c0_13] : memref<1x4x1xf32, #tpu.memory_space<vmem>>, vector<1x4x1xf32>
    %13 = vector.shape_cast %12 : vector<1x4x1xf32> to vector<4x1xf32>
    %cst_14 = arith.constant dense<0.000000e+00> : vector<1xf32>
    %14 = vector.multi_reduction <add>, %13, %cst_14 [0] : vector<4x1xf32> to vector<1xf32>
    %15 = vector.shape_cast %14 : vector<1xf32> to vector<1x1xf32>
    %cst_15 = arith.constant 4.000000e+00 : f32
    %16 = vector.broadcast %cst_15 : f32 to vector<1x1xf32>
    %17 = arith.divf %15, %16 : vector<1x1xf32>
    %18 = vector.broadcast %17 : vector<1x1xf32> to vector<4x1xf32>
    %19 = arith.subf %13, %18 : vector<4x1xf32>
    %20 = arith.mulf %19, %19 : vector<4x1xf32>
    %cst_16 = arith.constant dense<0.000000e+00> : vector<1xf32>
    %21 = vector.multi_reduction <add>, %20, %cst_16 [0] : vector<4x1xf32> to vector<1xf32>
    %22 = vector.shape_cast %21 : vector<1xf32> to vector<1x1xf32>
    %cst_17 = arith.constant 4.000000e+00 : f32
    %23 = vector.broadcast %cst_17 : f32 to vector<1x1xf32>
    %24 = arith.divf %22, %23 : vector<1x1xf32>
    %cst_18 = arith.constant 9.99999974E-6 : f32
    %25 = vector.broadcast %cst_18 : f32 to vector<1x1xf32>
    %26 = arith.addf %24, %25 : vector<1x1xf32>
    %27 = math.rsqrt %26 : vector<1x1xf32>
    %28 = vector.broadcast %27 : vector<1x1xf32> to vector<4x1xf32>
    %29 = arith.mulf %19, %28 : vector<4x1xf32>
    %30 = vector.extract_strided_slice %11 {offsets = [0, 0], sizes = [4, 8], strides = [1, 1]} : vector<144x8xf32> to vector<4x8xf32>
    %31 = vector.extract_strided_slice %11 {offsets = [8, 0], sizes = [4, 8], strides = [1, 1]} : vector<144x8xf32> to vector<4x8xf32>
    %32 = vector.broadcast %29 : vector<4x1xf32> to vector<4x8xf32>
    %33 = arith.mulf %30, %32 : vector<4x8xf32>
    %34 = arith.addf %33, %31 : vector<4x8xf32>
    %c0_19 = arith.constant 0 : index
    %c0_20 = arith.constant 0 : index
    %35 = vector.load %arg8[%c0_19, %c0_20] : memref<32x4xf32, #tpu.memory_space<vmem>>, vector<32x4xf32>
    %cst_21 = arith.constant dense<0.000000e+00> : vector<32x8xf32>
    %36 = tpu.matmul %35, %34, %cst_21 {dimension_numbers = #tpu.dot_dimension_numbers<[1], [0], [0], [1], [0, 0, 1, 1], [], []>} : vector<32x4xf32>, vector<4x8xf32>, vector<32x8xf32> -> vector<32x8xf32>
    %c0_22 = arith.constant 0 : index
    %c0_23 = arith.constant 0 : index
    %37 = vector.load %arg9[%c0_22, %c0_23] : memref<32x1xf32, #tpu.memory_space<vmem>>, vector<32x1xf32>
    %38 = vector.broadcast %37 : vector<32x1xf32> to vector<32x8xf32>
    %39 = arith.addf %36, %38 : vector<32x8xf32>
    %cst_24 = arith.constant 0.000000e+00 : f32
    %40 = vector.broadcast %cst_24 : f32 to vector<32x8xf32>
    %41 = arith.maximumf %39, %40 : vector<32x8xf32>
    %42 = vector.extract_strided_slice %11 {offsets = [16, 0], sizes = [32, 8], strides = [1, 1]} : vector<144x8xf32> to vector<32x8xf32>
    %43 = vector.extract_strided_slice %11 {offsets = [48, 0], sizes = [32, 8], strides = [1, 1]} : vector<144x8xf32> to vector<32x8xf32>
    %cst_25 = arith.constant dense<0.000000e+00> : vector<8xf32>
    %44 = vector.multi_reduction <add>, %41, %cst_25 [0] : vector<32x8xf32> to vector<8xf32>
    %45 = vector.shape_cast %44 : vector<8xf32> to vector<1x8xf32>
    %cst_26 = arith.constant 3.200000e+01 : f32
    %46 = vector.broadcast %cst_26 : f32 to vector<1x8xf32>
    %47 = arith.divf %45, %46 : vector<1x8xf32>
    %48 = vector.broadcast %47 : vector<1x8xf32> to vector<32x8xf32>
    %49 = arith.subf %41, %48 : vector<32x8xf32>
    %50 = arith.mulf %49, %49 : vector<32x8xf32>
    %cst_27 = arith.constant dense<0.000000e+00> : vector<8xf32>
    %51 = vector.multi_reduction <add>, %50, %cst_27 [0] : vector<32x8xf32> to vector<8xf32>
    %52 = vector.shape_cast %51 : vector<8xf32> to vector<1x8xf32>
    %cst_28 = arith.constant 3.200000e+01 : f32
    %53 = vector.broadcast %cst_28 : f32 to vector<1x8xf32>
    %54 = arith.divf %52, %53 : vector<1x8xf32>
    %cst_29 = arith.constant 9.99999974E-6 : f32
    %55 = vector.broadcast %cst_29 : f32 to vector<1x8xf32>
    %56 = arith.addf %54, %55 : vector<1x8xf32>
    %57 = math.rsqrt %56 : vector<1x8xf32>
    %58 = vector.broadcast %57 : vector<1x8xf32> to vector<32x8xf32>
    %59 = arith.mulf %49, %58 : vector<32x8xf32>
    %60 = arith.mulf %42, %59 : vector<32x8xf32>
    %61 = arith.addf %60, %43 : vector<32x8xf32>
    %c0_30 = arith.constant 0 : index
    %c0_31 = arith.constant 0 : index
    %62 = vector.load %arg10[%c0_30, %c0_31] : memref<32x32xf32, #tpu.memory_space<vmem>>, vector<32x32xf32>
    %cst_32 = arith.constant dense<0.000000e+00> : vector<32x8xf32>
    %63 = tpu.matmul %62, %61, %cst_32 {dimension_numbers = #tpu.dot_dimension_numbers<[1], [0], [0], [1], [0, 0, 1, 1], [], []>} : vector<32x32xf32>, vector<32x8xf32>, vector<32x8xf32> -> vector<32x8xf32>
    %c0_33 = arith.constant 0 : index
    %c0_34 = arith.constant 0 : index
    %64 = vector.load %arg11[%c0_33, %c0_34] : memref<32x1xf32, #tpu.memory_space<vmem>>, vector<32x1xf32>
    %65 = vector.broadcast %64 : vector<32x1xf32> to vector<32x8xf32>
    %66 = arith.addf %63, %65 : vector<32x8xf32>
    %cst_35 = arith.constant 0.000000e+00 : f32
    %67 = vector.broadcast %cst_35 : f32 to vector<32x8xf32>
    %68 = arith.maximumf %66, %67 : vector<32x8xf32>
    %69 = vector.extract_strided_slice %11 {offsets = [80, 0], sizes = [32, 8], strides = [1, 1]} : vector<144x8xf32> to vector<32x8xf32>
    %70 = vector.extract_strided_slice %11 {offsets = [112, 0], sizes = [32, 8], strides = [1, 1]} : vector<144x8xf32> to vector<32x8xf32>
    %cst_36 = arith.constant dense<0.000000e+00> : vector<8xf32>
    %71 = vector.multi_reduction <add>, %68, %cst_36 [0] : vector<32x8xf32> to vector<8xf32>
    %72 = vector.shape_cast %71 : vector<8xf32> to vector<1x8xf32>
    %cst_37 = arith.constant 3.200000e+01 : f32
    %73 = vector.broadcast %cst_37 : f32 to vector<1x8xf32>
    %74 = arith.divf %72, %73 : vector<1x8xf32>
    %75 = vector.broadcast %74 : vector<1x8xf32> to vector<32x8xf32>
    %76 = arith.subf %68, %75 : vector<32x8xf32>
    %77 = arith.mulf %76, %76 : vector<32x8xf32>
    %cst_38 = arith.constant dense<0.000000e+00> : vector<8xf32>
    %78 = vector.multi_reduction <add>, %77, %cst_38 [0] : vector<32x8xf32> to vector<8xf32>
    %79 = vector.shape_cast %78 : vector<8xf32> to vector<1x8xf32>
    %cst_39 = arith.constant 3.200000e+01 : f32
    %80 = vector.broadcast %cst_39 : f32 to vector<1x8xf32>
    %81 = arith.divf %79, %80 : vector<1x8xf32>
    %cst_40 = arith.constant 9.99999974E-6 : f32
    %82 = vector.broadcast %cst_40 : f32 to vector<1x8xf32>
    %83 = arith.addf %81, %82 : vector<1x8xf32>
    %84 = math.rsqrt %83 : vector<1x8xf32>
    %85 = vector.broadcast %84 : vector<1x8xf32> to vector<32x8xf32>
    %86 = arith.mulf %76, %85 : vector<32x8xf32>
    %87 = arith.mulf %69, %86 : vector<32x8xf32>
    %88 = arith.addf %87, %70 : vector<32x8xf32>
    %c0_41 = arith.constant 0 : index
    %c0_42 = arith.constant 0 : index
    %89 = vector.load %arg12[%c0_41, %c0_42] : memref<2x32xf32, #tpu.memory_space<vmem>>, vector<2x32xf32>
    %cst_43 = arith.constant dense<0.000000e+00> : vector<2x8xf32>
    %90 = tpu.matmul %89, %88, %cst_43 {dimension_numbers = #tpu.dot_dimension_numbers<[1], [0], [0], [1], [0, 0, 1, 1], [], []>} : vector<2x32xf32>, vector<32x8xf32>, vector<2x8xf32> -> vector<2x8xf32>
    %c0_44 = arith.constant 0 : index
    %c0_45 = arith.constant 0 : index
    %91 = vector.load %arg13[%c0_44, %c0_45] : memref<2x1xf32, #tpu.memory_space<vmem>>, vector<2x1xf32>
    %92 = vector.broadcast %91 : vector<2x1xf32> to vector<2x8xf32>
    %93 = arith.addf %90, %92 : vector<2x8xf32>
    %c0_46 = arith.constant 0 : index
    %c0_47 = arith.constant 0 : index
    %c0_48 = arith.constant 0 : index
    %94 = vector.load %arg14[%c0_46, %c0_47, %c0_48] : memref<1x2x8xf32, #tpu.memory_space<vmem>>, vector<1x2x8xf32>
    %95 = vector.shape_cast %94 : vector<1x2x8xf32> to vector<2x8xf32>
    %96 = vector.shape_cast %93 : vector<2x8xf32> to vector<1x2x8xf32>
    tpu.vector_store %arg14[%c0_46, %c0_47, %c0_48], %96 {strides = array<i32>} : memref<1x2x8xf32, #tpu.memory_space<vmem>>, vector<1x2x8xf32>,
    return
  }
  func.func @transform_0(%arg0: i32, %arg1: i32) -> (i32, i32, i32) {
    %c0_i32 = arith.constant 0 : i32
    %c0_i32_0 = arith.constant 0 : i32
    %c0_i32_1 = arith.constant 0 : i32
    return %arg0, %c0_i32, %c0_i32_0 : i32, i32, i32
  }
  func.func @transform_1(%arg0: i32, %arg1: i32) -> (i32, i32, i32) {
    %c0_i32 = arith.constant 0 : i32
    %c0_i32_0 = arith.constant 0 : i32
    return %arg0, %c0_i32, %arg1 : i32, i32, i32
  }
  func.func @transform_2(%arg0: i32, %arg1: i32) -> (i32, i32) {
    %c0_i32 = arith.constant 0 : i32
    %c0_i32_0 = arith.constant 0 : i32
    %c0_i32_1 = arith.constant 0 : i32
    return %c0_i32, %c0_i32_0 : i32, i32
  }
  func.func @transform_3(%arg0: i32, %arg1: i32) -> (i32, i32) {
    %c0_i32 = arith.constant 0 : i32
    %c0_i32_0 = arith.constant 0 : i32
    %c0_i32_1 = arith.constant 0 : i32
    return %c0_i32, %c0_i32_0 : i32, i32
  }
  func.func @transform_4(%arg0: i32, %arg1: i32) -> (i32, i32) {
    %c0_i32 = arith.constant 0 : i32
    %c0_i32_0 = arith.constant 0 : i32
    %c0_i32_1 = arith.constant 0 : i32
    return %c0_i32, %c0_i32_0 : i32, i32
  }
  func.func @transform_5(%arg0: i32, %arg1: i32) -> (i32, i32) {
    %c0_i32 = arith.constant 0 : i32
    %c0_i32_0 = arith.constant 0 : i32
    %c0_i32_1 = arith.constant 0 : i32
    return %c0_i32, %c0_i32_0 : i32, i32
  }
  func.func @transform_6(%arg0: i32, %arg1: i32) -> (i32, i32) {
    %c0_i32 = arith.constant 0 : i32
    %c0_i32_0 = arith.constant 0 : i32
    %c0_i32_1 = arith.constant 0 : i32
    return %c0_i32, %c0_i32_0 : i32, i32
  }
  func.func @transform_7(%arg0: i32, %arg1: i32) -> (i32, i32) {
    %c0_i32 = arith.constant 0 : i32
    %c0_i32_0 = arith.constant 0 : i32
    %c0_i32_1 = arith.constant 0 : i32
    return %c0_i32, %c0_i32_0 : i32, i32
  }
  func.func @transform_8(%arg0: i32, %arg1: i32) -> (i32, i32) {
    %c0_i32 = arith.constant 0 : i32
    %c0_i32_0 = arith.constant 0 : i32
    %c0_i32_1 = arith.constant 0 : i32
    return %c0_i32, %c0_i32_0 : i32, i32
  }
  func.func @transform_9(%arg0: i32, %arg1: i32) -> (i32, i32) {
    %c0_i32 = arith.constant 0 : i32
    %c0_i32_0 = arith.constant 0 : i32
    %c0_i32_1 = arith.constant 0 : i32
    return %c0_i32, %c0_i32_0 : i32, i32
  }
  func.func @transform_10(%arg0: i32, %arg1: i32) -> (i32, i32) {
    %c0_i32 = arith.constant 0 : i32
    %c0_i32_0 = arith.constant 0 : i32
    %c0_i32_1 = arith.constant 0 : i32
    return %c0_i32, %c0_i32_0 : i32, i32
  }
  func.func @transform_11(%arg0: i32, %arg1: i32) -> (i32, i32) {
    %c0_i32 = arith.constant 0 : i32
    %c0_i32_0 = arith.constant 0 : i32
    %c0_i32_1 = arith.constant 0 : i32
    return %c0_i32, %c0_i32_0 : i32, i32
  }
  func.func @transform_12(%arg0: i32, %arg1: i32) -> (i32, i32, i32) {
    %c0_i32 = arith.constant 0 : i32
    %c0_i32_0 = arith.constant 0 : i32
    return %arg0, %c0_i32, %arg1 : i32, i32, i32
  }
}

</mosaic_0001>

<llo_original>
// kernel: tpu_custom_call.1
$region0: #{tpu_custom_call.1}
  #allocation0 [shape = 'u32[]', space=smem, size = 0x4, offset = 0x4, fixed_abs, tag = 'smem constant byte address 0x4 - core index']
  #allocation1 [shape = 'u32[144,128]{1,0:T(1,128)}', space=vmem, size = 0x12000, scoped, tag = 'internal scratch']
  %s0 = inlined_call_operand.vmem [shape: f32[2,4,1], index: 0, kind: input, shape index: {}]
  %s1 = inlined_call_operand.vmem [shape: f32[2,16,8], index: 1, kind: input, shape index: {}]
  %s2 = inlined_call_operand.vmem [shape: f32[16,16], index: 2, kind: input, shape index: {}]
  %s3 = inlined_call_operand.vmem [shape: f32[16,1], index: 3, kind: input, shape index: {}]
  %s4 = inlined_call_operand.vmem [shape: f32[144,16], index: 4, kind: input, shape index: {}]
  %s5 = inlined_call_operand.vmem [shape: f32[144,1], index: 5, kind: input, shape index: {}]
  %s6 = inlined_call_operand.vmem [shape: f32[32,4], index: 6, kind: input, shape index: {}]
  %s7 = inlined_call_operand.vmem [shape: f32[32,1], index: 7, kind: input, shape index: {}]
  %s8 = inlined_call_operand.vmem [shape: f32[32,32], index: 8, kind: input, shape index: {}]
  %s9 = inlined_call_operand.vmem [shape: f32[32,1], index: 9, kind: input, shape index: {}]
  %s10 = inlined_call_operand.vmem [shape: f32[2,32], index: 10, kind: input, shape index: {}]
  %s11 = inlined_call_operand.vmem [shape: f32[2,1], index: 11, kind: input, shape index: {}]
  %s12 = inlined_call_operand.hbm [shape: f32[2,2,8], index: 12, kind: output, shape index: {}]
  %s13 = sld [smem:[#allocation0]]
  $region81: #{tpu_custom_call.1} parent=0
    _
  %s15 = ssub.s32 1, %s13
  %s16 = scalar_select 0, %s15, %s13
  $region1: #{tpu_custom_call.1} parent=0
    #allocation2 [shape = 'u8[2048]{0}', space=vmem, size = 0x800, scoped, tag = 'output window, operand 0']
    #allocation3 [shape = 's32[2]{0}', space=sflag, size = 0x8, scoped, tag = 'scoped memory for tpu_custom_call.1']
    %17 = vsyncpa [#allocation3], 0
    %s18 = scalar_lea.sflag [#allocation3], 1
    %19 = vsyncpa %s18, 0
    loop: start=0, step=1, limit=4
    $region2: #{tpu_custom_call.1} parent=1 // loop_pre_header
      _
    $region3: #{tpu_custom_call.1} parent=1 // loop_header
      %s21 = sphi 0, %s25
      %p22 = scmp.ge.s32.totalorder %s21, 4
      %s28 = sphi 0, %s40
      %s29 = sphi 0, %s36
      %s30 = sphi 0, %s28
      %s31 = sphi 0, %s29
      %s32 = sphi 0, %s30
      %s33 = sphi 0, %s31
      %s43 = sphi 0, %s45
      %s46 = sphi 0, %s43
      %s47 = sphi 0, %s46
      %s63 = sphi 0, %s47
      %s71 = sphi 0, %s73
      %s74 = sphi 0, %s71
      %s75 = sphi 0, %s74
      %s91 = sphi 0, %s75
      %s95 = sphi 0, %s95
      %s97 = sphi 0, %s95
      %s98 = sphi 0, %s97
      %s112 = sphi 0, %s98
      %s116 = sphi 0, %s116
      %s118 = sphi 0, %s116
      %s119 = sphi 0, %s118
      %s133 = sphi 0, %s119
      %s137 = sphi 0, %s137
      %s139 = sphi 0, %s137
      %s140 = sphi 0, %s139
      %s154 = sphi 0, %s140
      %s158 = sphi 0, %s158
      %s160 = sphi 0, %s158
      %s161 = sphi 0, %s160
      %s175 = sphi 0, %s161
      %s179 = sphi 0, %s179
      %s181 = sphi 0, %s179
      %s182 = sphi 0, %s181
      %s196 = sphi 0, %s182
      %s200 = sphi 0, %s200
      %s202 = sphi 0, %s200
      %s203 = sphi 0, %s202
      %s217 = sphi 0, %s203
      %s221 = sphi 0, %s221
      %s223 = sphi 0, %s221
      %s224 = sphi 0, %s223
      %s238 = sphi 0, %s224
      %s242 = sphi 0, %s242
      %s244 = sphi 0, %s242
      %s245 = sphi 0, %s244
      %s259 = sphi 0, %s245
      %s263 = sphi 0, %s263
      %s265 = sphi 0, %s263
      %s266 = sphi 0, %s265
      %s280 = sphi 0, %s266
      %s284 = sphi 0, %s284
      %s286 = sphi 0, %s284
      %s287 = sphi 0, %s286
      %s301 = sphi 0, %s287
      %s309 = sphi 0, %s311
      %s312 = sphi 0, %s309
      %s313 = sphi 0, %s312
      %s329 = sphi 0, %s313
    $region4: #{tpu_custom_call.1} parent=1 // loop_header_branch
      %24 = sbr.rel (%p22) target = $region8
    $region5: #{tpu_custom_call.1} parent=1 // loop_body
      %s26 = ssub.s32 %s21, 1
      %s27 = ssub.s32 %s21, 2
      %s34 = sadd.s32 1, %s29
      %p35 = scmp.ge.s32.totalorder %s34, 1
      %s36 = scalar_select %p35, 0, %s34
      %s37 = sadd.s32 1, %s28
      %s38 = scalar_select %p35, %s37, %s28
      %p39 = scmp.ge.s32.totalorder %s38, 2
      %s40 = scalar_select %p39, 0, %s38
      %s41 = ssub.s32 %s28, %s40
      %p42 = scmp.eq.s32.totalorder %s41, 0
      %s44 = sadd.s32 %s43, 1
      %s45 = scalar_select %p42, %s43, %s44
      %p48 = pneg %p42
      %p49 = scmp.eq.s32.totalorder %s21, 1
      %p50 = por %p48, %p49
      %p51 = scmp.ne.s32.totalorder %s43, %s46
      %p52 = scmp.eq.s32.totalorder %s21, 0
      %p53 = por %p51, %p52
      %p54 = scmp.ne.s32.totalorder %s43, %s46
      %p55 = scmp.eq.s32.totalorder %s26, 1
      %p56 = por %p54, %p55
      %p57 = scmp.ne.s32.totalorder %s46, %s47
      %p58 = scmp.eq.s32.totalorder %s26, 0
      %p59 = por %p57, %p58
      %p60 = scmp.ne.s32.totalorder %s46, %s47
      %p61 = scmp.eq.s32.totalorder %s27, 1
      %p62 = por %p60, %p61
      %p64 = scmp.ne.s32.totalorder %s47, %s63
      %p65 = scmp.eq.s32.totalorder %s27, 0
      %p66 = por %p64, %p65
      %s67 = ssub.s32 %s28, %s40
      %s68 = ssub.s32 %s29, %s36
      %s69 = sor.u32 %s67, %s68
      %p70 = scmp.eq.s32.totalorder %s69, 0
      %s72 = sadd.s32 %s71, 1
      %s73 = scalar_select %p70, %s71, %s72
      %p76 = pneg %p70
      %p77 = scmp.eq.s32.totalorder %s21, 1
      %p78 = por %p76, %p77
      %p79 = scmp.ne.s32.totalorder %s71, %s74
      %p80 = scmp.eq.s32.totalorder %s21, 0
      %p81 = por %p79, %p80
      %p82 = scmp.ne.s32.totalorder %s71, %s74
      %p83 = scmp.eq.s32.totalorder %s26, 1
      %p84 = por %p82, %p83
      %p85 = scmp.ne.s32.totalorder %s74, %s75
      %p86 = scmp.eq.s32.totalorder %s26, 0
      %p87 = por %p85, %p86
      %p88 = scmp.ne.s32.totalorder %s74, %s75
      %p89 = scmp.eq.s32.totalorder %s27, 1
      %p90 = por %p88, %p89
      %p92 = scmp.ne.s32.totalorder %s75, %s91
      %p93 = scmp.eq.s32.totalorder %s27, 0
      %p94 = por %p92, %p93
      %s96 = sadd.s32 %s95, 1
      %p99 = scmp.eq.s32.totalorder %s21, 1
      %p100 = scmp.ne.s32.totalorder %s95, %s97
      %p101 = scmp.eq.s32.totalorder %s21, 0
      %p102 = por %p100, %p101
      %p103 = scmp.ne.s32.totalorder %s95, %s97
      %p104 = scmp.eq.s32.totalorder %s26, 1
      %p105 = por %p103, %p104
      %p106 = scmp.ne.s32.totalorder %s97, %s98
      %p107 = scmp.eq.s32.totalorder %s26, 0
      %p108 = por %p106, %p107
      %p109 = scmp.ne.s32.totalorder %s97, %s98
      %p110 = scmp.eq.s32.totalorder %s27, 1
      %p111 = por %p109, %p110
      %p113 = scmp.ne.s32.totalorder %s98, %s112
      %p114 = scmp.eq.s32.totalorder %s27, 0
      %p115 = por %p113, %p114
      %s117 = sadd.s32 %s116, 1
      %p120 = scmp.eq.s32.totalorder %s21, 1
      %p121 = scmp.ne.s32.totalorder %s116, %s118
      %p122 = scmp.eq.s32.totalorder %s21, 0
      %p123 = por %p121, %p122
      %p124 = scmp.ne.s32.totalorder %s116, %s118
      %p125 = scmp.eq.s32.totalorder %s26, 1
      %p126 = por %p124, %p125
      %p127 = scmp.ne.s32.totalorder %s118, %s119
      %p128 = scmp.eq.s32.totalorder %s26, 0
      %p129 = por %p127, %p128
      %p130 = scmp.ne.s32.totalorder %s118, %s119
      %p131 = scmp.eq.s32.totalorder %s27, 1
      %p132 = por %p130, %p131
      %p134 = scmp.ne.s32.totalorder %s119, %s133
      %p135 = scmp.eq.s32.totalorder %s27, 0
      %p136 = por %p134, %p135
      %s138 = sadd.s32 %s137, 1
      %p141 = scmp.eq.s32.totalorder %s21, 1
      %p142 = scmp.ne.s32.totalorder %s137, %s139
      %p143 = scmp.eq.s32.totalorder %s21, 0
      %p144 = por %p142, %p143
      %p145 = scmp.ne.s32.totalorder %s137, %s139
      %p146 = scmp.eq.s32.totalorder %s26, 1
      %p147 = por %p145, %p146
      %p148 = scmp.ne.s32.totalorder %s139, %s140
      %p149 = scmp.eq.s32.totalorder %s26, 0
      %p150 = por %p148, %p149
      %p151 = scmp.ne.s32.totalorder %s139, %s140
      %p152 = scmp.eq.s32.totalorder %s27, 1
      %p153 = por %p151, %p152
      %p155 = scmp.ne.s32.totalorder %s140, %s154
      %p156 = scmp.eq.s32.totalorder %s27, 0
      %p157 = por %p155, %p156
      %s159 = sadd.s32 %s158, 1
      %p162 = scmp.eq.s32.totalorder %s21, 1
      %p163 = scmp.ne.s32.totalorder %s158, %s160
      %p164 = scmp.eq.s32.totalorder %s21, 0
      %p165 = por %p163, %p164
      %p166 = scmp.ne.s32.totalorder %s158, %s160
      %p167 = scmp.eq.s32.totalorder %s26, 1
      %p168 = por %p166, %p167
      %p169 = scmp.ne.s32.totalorder %s160, %s161
      %p170 = scmp.eq.s32.totalorder %s26, 0
      %p171 = por %p169, %p170
      %p172 = scmp.ne.s32.totalorder %s160, %s161
      %p173 = scmp.eq.s32.totalorder %s27, 1
      %p174 = por %p172, %p173
      %p176 = scmp.ne.s32.totalorder %s161, %s175
      %p177 = scmp.eq.s32.totalorder %s27, 0
      %p178 = por %p176, %p177
      %s180 = sadd.s32 %s179, 1
      %p183 = scmp.eq.s32.totalorder %s21, 1
      %p184 = scmp.ne.s32.totalorder %s179, %s181
      %p185 = scmp.eq.s32.totalorder %s21, 0
      %p186 = por %p184, %p185
      %p187 = scmp.ne.s32.totalorder %s179, %s181
      %p188 = scmp.eq.s32.totalorder %s26, 1
      %p189 = por %p187, %p188
      %p190 = scmp.ne.s32.totalorder %s181, %s182
      %p191 = scmp.eq.s32.totalorder %s26, 0
      %p192 = por %p190, %p191
      %p193 = scmp.ne.s32.totalorder %s181, %s182
      %p194 = scmp.eq.s32.totalorder %s27, 1
      %p195 = por %p193, %p194
      %p197 = scmp.ne.s32.totalorder %s182, %s196
      %p198 = scmp.eq.s32.totalorder %s27, 0
      %p199 = por %p197, %p198
      %s201 = sadd.s32 %s200, 1
      %p204 = scmp.eq.s32.totalorder %s21, 1
      %p205 = scmp.ne.s32.totalorder %s200, %s202
      %p206 = scmp.eq.s32.totalorder %s21, 0
      %p207 = por %p205, %p206
      %p208 = scmp.ne.s32.totalorder %s200, %s202
      %p209 = scmp.eq.s32.totalorder %s26, 1
      %p210 = por %p208, %p209
      %p211 = scmp.ne.s32.totalorder %s202, %s203
      %p212 = scmp.eq.s32.totalorder %s26, 0
      %p213 = por %p211, %p212
      %p214 = scmp.ne.s32.totalorder %s202, %s203
      %p215 = scmp.eq.s32.totalorder %s27, 1
      %p216 = por %p214, %p215
      %p218 = scmp.ne.s32.totalorder %s203, %s217
      %p219 = scmp.eq.s32.totalorder %s27, 0
      %p220 = por %p218, %p219
      %s222 = sadd.s32 %s221, 1
      %p225 = scmp.eq.s32.totalorder %s21, 1
      %p226 = scmp.ne.s32.totalorder %s221, %s223
      %p227 = scmp.eq.s32.totalorder %s21, 0
      %p228 = por %p226, %p227
      %p229 = scmp.ne.s32.totalorder %s221, %s223
      %p230 = scmp.eq.s32.totalorder %s26, 1
      %p231 = por %p229, %p230
      %p232 = scmp.ne.s32.totalorder %s223, %s224
      %p233 = scmp.eq.s32.totalorder %s26, 0
      %p234 = por %p232, %p233
      %p235 = scmp.ne.s32.totalorder %s223, %s224
      %p236 = scmp.eq.s32.totalorder %s27, 1
      %p237 = por %p235, %p236
      %p239 = scmp.ne.s32.totalorder %s224, %s238
      %p240 = scmp.eq.s32.totalorder %s27, 0
      %p241 = por %p239, %p240
      %s243 = sadd.s32 %s242, 1
      %p246 = scmp.eq.s32.totalorder %s21, 1
      %p247 = scmp.ne.s32.totalorder %s242, %s244
      %p248 = scmp.eq.s32.totalorder %s21, 0
      %p249 = por %p247, %p248
      %p250 = scmp.ne.s32.totalorder %s242, %s244
      %p251 = scmp.eq.s32.totalorder %s26, 1
      %p252 = por %p250, %p251
      %p253 = scmp.ne.s32.totalorder %s244, %s245
      %p254 = scmp.eq.s32.totalorder %s26, 0
      %p255 = por %p253, %p254
      %p256 = scmp.ne.s32.totalorder %s244, %s245
      %p257 = scmp.eq.s32.totalorder %s27, 1
      %p258 = por %p256, %p257
      %p260 = scmp.ne.s32.totalorder %s245, %s259
      %p261 = scmp.eq.s32.totalorder %s27, 0
      %p262 = por %p260, %p261
      %s264 = sadd.s32 %s263, 1
      %p267 = scmp.eq.s32.totalorder %s21, 1
      %p268 = scmp.ne.s32.totalorder %s263, %s265
      %p269 = scmp.eq.s32.totalorder %s21, 0
      %p270 = por %p268, %p269
      %p271 = scmp.ne.s32.totalorder %s263, %s265
      %p272 = scmp.eq.s32.totalorder %s26, 1
      %p273 = por %p271, %p272
      %p274 = scmp.ne.s32.totalorder %s265, %s266
      %p275 = scmp.eq.s32.totalorder %s26, 0
      %p276 = por %p274, %p275
      %p277 = scmp.ne.s32.totalorder %s265, %s266
      %p278 = scmp.eq.s32.totalorder %s27, 1
      %p279 = por %p277, %p278
      %p281 = scmp.ne.s32.totalorder %s266, %s280
      %p282 = scmp.eq.s32.totalorder %s27, 0
      %p283 = por %p281, %p282
      %s285 = sadd.s32 %s284, 1
      %p288 = scmp.eq.s32.totalorder %s21, 1
      %p289 = scmp.ne.s32.totalorder %s284, %s286
      %p290 = scmp.eq.s32.totalorder %s21, 0
      %p291 = por %p289, %p290
      %p292 = scmp.ne.s32.totalorder %s284, %s286
      %p293 = scmp.eq.s32.totalorder %s26, 1
      %p294 = por %p292, %p293
      %p295 = scmp.ne.s32.totalorder %s286, %s287
      %p296 = scmp.eq.s32.totalorder %s26, 0
      %p297 = por %p295, %p296
      %p298 = scmp.ne.s32.totalorder %s286, %s287
      %p299 = scmp.eq.s32.totalorder %s27, 1
      %p300 = por %p298, %p299
      %p302 = scmp.ne.s32.totalorder %s287, %s301
      %p303 = scmp.eq.s32.totalorder %s27, 0
      %p304 = por %p302, %p303
      %s305 = ssub.s32 %s28, %s40
      %s306 = ssub.s32 %s29, %s36
      %s307 = sor.u32 %s305, %s306
      %p308 = scmp.eq.s32.totalorder %s307, 0
      %s310 = sadd.s32 %s309, 1
      %s311 = scalar_select %p308, %s309, %s310
      %p314 = pneg %p308
      %p315 = scmp.eq.s32.totalorder %s21, 1
      %p316 = por %p314, %p315
      %p317 = scmp.ne.s32.totalorder %s309, %s312
      %p318 = scmp.eq.s32.totalorder %s21, 0
      %p319 = por %p317, %p318
      %p320 = scmp.ne.s32.totalorder %s309, %s312
      %p321 = scmp.eq.s32.totalorder %s26, 1
      %p322 = por %p320, %p321
      %p323 = scmp.ne.s32.totalorder %s312, %s313
      %p324 = scmp.eq.s32.totalorder %s26, 0
      %p325 = por %p323, %p324
      %p326 = scmp.ne.s32.totalorder %s312, %s313
      %p327 = scmp.eq.s32.totalorder %s27, 1
      %p328 = por %p326, %p327
      %p330 = scmp.ne.s32.totalorder %s313, %s329
      %p331 = scmp.eq.s32.totalorder %s27, 0
      %p332 = por %p330, %p331
      %p333 = scmp.le.s32.totalorder 1, %s21
      %p334 = scmp.lt.s32.totalorder %s21, 3
      %p335 = pnand %p333, %p334
      %p336 = pneg %p335
      // Predicated region
      $region9: #{tpu_custom_call.1} parent=5 // pred_check
        _
      $region10: #{tpu_custom_call.1} parent=5 // pred_check_branch
        %338 = sbr.rel (%p335) target = $region12
      $region11: #{tpu_custom_call.1} parent=5 // pred_region
        %s339 = ssub.s32 %s21, 1
        // Predicated region
        $region13: #{tpu_custom_call.1} parent=11 // pred_check
          %p340 = pneg %p108
        $region14: #{tpu_custom_call.1} parent=11 // pred_check_branch
          %342 = sbr.rel (%p340) target = $region16
        $region15: #{tpu_custom_call.1} parent=11 // pred_region
          _
        $region16: #{tpu_custom_call.1} parent=11 // pred_fallthru
          _
        // Predicated region
        $region17: #{tpu_custom_call.1} parent=11 // pred_check
          %p343 = pneg %p129
        $region18: #{tpu_custom_call.1} parent=11 // pred_check_branch
          %345 = sbr.rel (%p343) target = $region20
        $region19: #{tpu_custom_call.1} parent=11 // pred_region
          _
        $region20: #{tpu_custom_call.1} parent=11 // pred_fallthru
          _
        // Predicated region
        $region21: #{tpu_custom_call.1} parent=11 // pred_check
          %p346 = pneg %p150
        $region22: #{tpu_custom_call.1} parent=11 // pred_check_branch
          %348 = sbr.rel (%p346) target = $region24
        $region23: #{tpu_custom_call.1} parent=11 // pred_region
          _
        $region24: #{tpu_custom_call.1} parent=11 // pred_fallthru
          _
        // Predicated region
        $region25: #{tpu_custom_call.1} parent=11 // pred_check
          %p349 = pneg %p171
        $region26: #{tpu_custom_call.1} parent=11 // pred_check_branch
          %351 = sbr.rel (%p349) target = $region28
        $region27: #{tpu_custom_call.1} parent=11 // pred_region
          _
        $region28: #{tpu_custom_call.1} parent=11 // pred_fallthru
          _
        // Predicated region
        $region29: #{tpu_custom_call.1} parent=11 // pred_check
          %p352 = pneg %p192
        $region30: #{tpu_custom_call.1} parent=11 // pred_check_branch
          %354 = sbr.rel (%p352) target = $region32
        $region31: #{tpu_custom_call.1} parent=11 // pred_region
          _
        $region32: #{tpu_custom_call.1} parent=11 // pred_fallthru
          _
        // Predicated region
        $region33: #{tpu_custom_call.1} parent=11 // pred_check
          %p355 = pneg %p213
        $region34: #{tpu_custom_call.1} parent=11 // pred_check_branch
          %357 = sbr.rel (%p355) target = $region36
        $region35: #{tpu_custom_call.1} parent=11 // pred_region
          _
        $region36: #{tpu_custom_call.1} parent=11 // pred_fallthru
          _
        // Predicated region
        $region37: #{tpu_custom_call.1} parent=11 // pred_check
          %p358 = pneg %p234
        $region38: #{tpu_custom_call.1} parent=11 // pred_check_branch
          %360 = sbr.rel (%p358) target = $region40
        $region39: #{tpu_custom_call.1} parent=11 // pred_region
          _
        $region40: #{tpu_custom_call.1} parent=11 // pred_fallthru
          _
        // Predicated region
        $region41: #{tpu_custom_call.1} parent=11 // pred_check
          %p361 = pneg %p255
        $region42: #{tpu_custom_call.1} parent=11 // pred_check_branch
          %363 = sbr.rel (%p361) target = $region44
        $region43: #{tpu_custom_call.1} parent=11 // pred_region
          _
        $region44: #{tpu_custom_call.1} parent=11 // pred_fallthru
          _
        // Predicated region
        $region45: #{tpu_custom_call.1} parent=11 // pred_check
          %p364 = pneg %p276
        $region46: #{tpu_custom_call.1} parent=11 // pred_check_branch
          %366 = sbr.rel (%p364) target = $region48
        $region47: #{tpu_custom_call.1} parent=11 // pred_region
          _
        $region48: #{tpu_custom_call.1} parent=11 // pred_fallthru
          _
        // Predicated region
        $region49: #{tpu_custom_call.1} parent=11 // pred_check
          %p367 = pneg %p297
        $region50: #{tpu_custom_call.1} parent=11 // pred_check_branch
          %369 = sbr.rel (%p367) target = $region52
        $region51: #{tpu_custom_call.1} parent=11 // pred_region
          _
        $region52: #{tpu_custom_call.1} parent=11 // pred_fallthru
          _
      $region12: #{tpu_custom_call.1} parent=5 // pred_fallthru
        _
      %p370 = scmp.lt.s32.totalorder %s21, 2
      // Predicated region
      $region53: #{tpu_custom_call.1} parent=5 // pred_check
        %p371 = pneg %p370
      $region54: #{tpu_custom_call.1} parent=5 // pred_check_branch
        %373 = sbr.rel (%p371) target = $region56
      $region55: #{tpu_custom_call.1} parent=5 // pred_region
        // Predicated region
        $region57: #{tpu_custom_call.1} parent=55 // pred_check
          %p374 = pneg %p53
        $region58: #{tpu_custom_call.1} parent=55 // pred_check_branch
          %376 = sbr.rel (%p374) target = $region60
        $region59: #{tpu_custom_call.1} parent=55 // pred_region
          %p377 = scmp.lt.s32.totalorder %s28, 1
          %s378 = scalar_select %p377, %s28, 1
          %s379 = smul.addr %s378, 4
          %s380 = scalar_lea.vmem %s0, %s379
        $region60: #{tpu_custom_call.1} parent=55 // pred_fallthru
          _
        // Predicated region
        $region61: #{tpu_custom_call.1} parent=55 // pred_check
          %p381 = pneg %p81
        $region62: #{tpu_custom_call.1} parent=55 // pred_check_branch
          %383 = sbr.rel (%p381) target = $region64
        $region63: #{tpu_custom_call.1} parent=55 // pred_region
          %p384 = scmp.lt.s32.totalorder %s28, 1
          %s385 = scalar_select %p384, %s28, 1
          %p386 = scmp.lt.s32.totalorder %s29, 0
          %s387 = scalar_select %p386, %s29, 0
          %s388 = smul.addr %s385, 2
          %s389 = sadd.s32 %s387, %s388
          %s390 = smul.addr %s389, 8
          %s391 = scalar_lea.vmem %s1, %s390
        $region64: #{tpu_custom_call.1} parent=55 // pred_fallthru
          _
      $region56: #{tpu_custom_call.1} parent=5 // pred_fallthru
        _
      %p392 = scmp.le.s32.totalorder 1, %s21
      %p393 = scmp.lt.s32.totalorder %s21, 3
      %p394 = pnand %p392, %p393
      %p395 = pneg %p394
      // Predicated region
      $region65: #{tpu_custom_call.1} parent=5 // pred_check
        _
      $region66: #{tpu_custom_call.1} parent=5 // pred_check_branch
        %397 = sbr.rel (%p394) target = $region68
      $region67: #{tpu_custom_call.1} parent=5 // pred_region
        %s398 = ssub.s32 %s21, 1
        %p399 = scmp.lt.s32.totalorder %s30, 1
        %s400 = scalar_select %p399, %s30, 1
        %s401 = smul.addr %s400, 4
        %s402 = scalar_lea.vmem %s0, %s401
        %p403 = pneg %p59
        %p404 = pneg %p56
        %p405 = scmp.lt.s32.totalorder %s30, 1
        %s406 = scalar_select %p405, %s30, 1
        %p407 = scmp.lt.s32.totalorder %s31, 0
        %s408 = scalar_select %p407, %s31, 0
        %s409 = smul.addr %s406, 2
        %s410 = sadd.s32 %s408, %s409
        %s411 = smul.addr %s410, 8
        %s412 = scalar_lea.vmem %s1, %s411
        %p413 = pneg %p87
        %p414 = pneg %p84
        %p415 = pneg %p108
        %p416 = pneg %p105
        %p417 = pneg %p129
        %p418 = pneg %p126
        %p419 = pneg %p150
        %p420 = pneg %p147
        %p421 = pneg %p171
        %p422 = pneg %p168
        %p423 = pneg %p192
        %p424 = pneg %p189
        %p425 = pneg %p213
        %p426 = pneg %p210
        %p427 = pneg %p234
        %p428 = pneg %p231
        %p429 = pneg %p255
        %p430 = pneg %p252
        %p431 = pneg %p276
        %p432 = pneg %p273
        %p433 = pneg %p297
        %p434 = pneg %p294
        %p435 = pneg %p325
        %p436 = pneg %p322
        %s437 = sand.u32 %s312, 1
        %s438 = scalar_lea.sflag [#allocation3], %s437
        %s439 = sand.u32 %s312, 1
        %s440 = smul.addr %s439, 2
        %s441 = scalar_lea.vmem [#allocation2], %s440
        %p442 = scmp.lt.s32.totalorder %s30, 1
        %s443 = scalar_select %p442, %s30, 1
        %s444 = smul.addr %s443, 4
        %s445 = scalar_lea.vmem %s0, %s444
        %p446 = scmp.lt.s32.totalorder %s30, 1
        %s447 = scalar_select %p446, %s30, 1
        %p448 = scmp.lt.s32.totalorder %s31, 0
        %s449 = scalar_select %p448, %s31, 0
        %s450 = smul.addr %s447, 2
        %s451 = sadd.s32 %s449, %s450
        %s452 = smul.addr %s451, 8
        %s453 = scalar_lea.vmem %s1, %s452
        %v454 = vld [vmem:[%s2] sm:$0xff]
        %v455 = vld [vmem:[%s2 + $0x8] sm:$0xff]
        %v456 = vld [vmem:[%s453] sm:$0xff]
        %v457 = vld [vmem:[%s453 + $0x8] sm:$0xff]
        %v458 = vld [vmem:[%s3] sm:$0xff]
        %v459 = vld [vmem:[%s3 + $0x8] sm:$0xff]
        %461 = vset.pattern.permute.xlu0 0
        %462 = vperm.xlu0 %461, %v458
        %v463 = vpop.permute.xlu0 %462
        %466 = vset.pattern.permute.xlu0 0
        %467 = vperm.xlu0 %466, %v459
        %v468 = vpop.permute.xlu0 %467
        %vm470 = vcmask 130048
        %v472 = vsel %vm470, %v454, 0
        %v475 = vsel %vm470, %v455, 0
        %477 = vmatprep.subr.mxu0 0.0
        %478 = vmatpush1.msra.mxu0 %v456
        %479 = vmatprep.subr.mxu0 0.0
        %480 = vmatpush1.msra.mxu0 %v457
        %481 = vmatprep.subr.mxu0 0.0
        %482 = vmatpush1.msra.mxu0 0.0
        %483 = vmatprep.subr.mxu0 0.0
        %484 = vmatpush1.msra.mxu0 0.0
        %485 = vmatprep.subr.mxu0 0.0
        %486 = vmatpush1.msra.mxu0 0.0
        %487 = vmatprep.subr.mxu0 0.0
        %488 = vmatpush1.msra.mxu0 0.0
        %489 = vmatprep.subr.mxu0 0.0
        %490 = vmatpush1.msra.mxu0 0.0
        %491 = vmatprep.subr.mxu0 0.0
        %492 = vmatpush1.msra.mxu0 0.0
        %493 = vmatprep.subr.mxu0 0.0
        %494 = vmatpush1.msra.mxu0 0.0
        %495 = vmatprep.subr.mxu0 0.0
        %496 = vmatpush1.msra.mxu0 0.0
        %497 = vmatprep.subr.mxu0 0.0
        %498 = vmatpush1.msra.mxu0 0.0
        %499 = vmatprep.subr.mxu0 0.0
        %500 = vmatpush1.msra.mxu0 0.0
        %501 = vmatprep.subr.mxu0 0.0
        %502 = vmatpush1.msra.mxu0 0.0
        %503 = vmatprep.subr.mxu0 0.0
        %504 = vmatpush1.msra.mxu0 0.0
        %505 = vmatprep.subr.mxu0 0.0
        %506 = vmatpush1.msra.mxu0 0.0
        %507 = vmatprep.subr.mxu0 0.0
        %508 = vmatpush1.msra.mxu0 0.0
        %509 = vmatprep.subr.mxu0 0.0
        %510 = vmatpush1.msra.mxu0 0.0
        %511 = vmatprep.subr.mxu0 0.0
        %512 = vmatpush1.msra.mxu0 0.0
        %513 = vmatprep.subr.mxu0 0.0
        %514 = vmatpush1.msra.mxu0 0.0
        %515 = vmatprep.subr.mxu0 0.0
        %516 = vmatpush1.msra.mxu0 0.0
        %517 = vmatprep.subr.mxu0 0.0
        %518 = vmatpush1.msra.mxu0 0.0
        %519 = vmatprep.subr.mxu0 0.0
        %520 = vmatpush1.msra.mxu0 0.0
        %521 = vmatprep.subr.mxu0 0.0
        %522 = vmatpush1.msra.mxu0 0.0
        %523 = vmatprep.subr.mxu0 0.0
        %524 = vmatpush1.msra.mxu0 0.0
        %525 = vmatprep.subr.mxu0 0.0
        %526 = vmatpush1.msra.mxu0 0.0
        %527 = vmatprep.subr.mxu0 0.0
        %528 = vmatpush1.msra.mxu0 0.0
        %529 = vmatprep.subr.mxu0 0.0
        %530 = vmatpush1.msra.mxu0 0.0
        %531 = vmatprep.subr.mxu0 0.0
        %532 = vmatpush1.msra.mxu0 0.0
        %533 = vmatprep.subr.mxu0 0.0
        %534 = vmatpush1.msra.mxu0 0.0
        %535 = vmatprep.subr.mxu0 0.0
        %536 = vmatpush1.msra.mxu0 0.0
        %537 = vmatprep.subr.mxu0 0.0
        %538 = vmatpush1.msra.mxu0 0.0
        %539 = vmatprep.subr.mxu0 0.0
        %540 = vmatpush1.msra.mxu0 0.0
        %541 = vmatprep.mubr.f32.mxu0 0.0
        %542 = vmatmul.mubr.f32.gmra.mrb[0].mxu0 %v472
        %v543 = vpop.f32.mrb[0].mxu0
        %v544 = vadd.f32 %v463, %v543
        %v545 = vpop.f32.mrb[0].mxu0
        %546 = vmatprep.mubr.f32.mxu0 0.0
        %547 = vmatmul.mubr.f32.gmra.mrb[0].mxu0 %v475
        %v548 = vpop.f32.mrb[0].mxu0
        %v549 = vadd.f32 %v468, %v548
        %v550 = vpop.f32.mrb[0].mxu0
        %551 = vdwg.mxu0
        %v552 = vld [vmem:[%s4] sm:$0xff]
        %v553 = vld [vmem:[%s4 + $0x8] sm:$0xff]
        %v554 = vld [vmem:[%s4 + $0x10] sm:$0xff]
        %v555 = vld [vmem:[%s4 + $0x18] sm:$0xff]
        %v556 = vld [vmem:[%s4 + $0x20] sm:$0xff]
        %v557 = vld [vmem:[%s4 + $0x28] sm:$0xff]
        %v558 = vld [vmem:[%s4 + $0x30] sm:$0xff]
        %v559 = vld [vmem:[%s4 + $0x38] sm:$0xff]
        %v560 = vld [vmem:[%s4 + $0x40] sm:$0xff]
        %v561 = vld [vmem:[%s4 + $0x48] sm:$0xff]
        %v562 = vld [vmem:[%s4 + $0x50] sm:$0xff]
        %v563 = vld [vmem:[%s4 + $0x58] sm:$0xff]
        %v564 = vld [vmem:[%s4 + $0x60] sm:$0xff]
        %v565 = vld [vmem:[%s4 + $0x68] sm:$0xff]
        %v566 = vld [vmem:[%s4 + $0x70] sm:$0xff]
        %v567 = vld [vmem:[%s4 + $0x78] sm:$0xff]
        %v568 = vld [vmem:[%s4 + $0x80] sm:$0xff]
        %v569 = vld [vmem:[%s4 + $0x88] sm:$0xff]
        %v570 = vld [vmem:[%s5] sm:$0xff]
        %v571 = vld [vmem:[%s5 + $0x8] sm:$0xff]
        %v572 = vld [vmem:[%s5 + $0x10] sm:$0xff]
        %v573 = vld [vmem:[%s5 + $0x18] sm:$0xff]
        %v574 = vld [vmem:[%s5 + $0x20] sm:$0xff]
        %v575 = vld [vmem:[%s5 + $0x28] sm:$0xff]
        %v576 = vld [vmem:[%s5 + $0x30] sm:$0xff]
        %v577 = vld [vmem:[%s5 + $0x38] sm:$0xff]
        %v578 = vld [vmem:[%s5 + $0x40] sm:$0xff]
        %v579 = vld [vmem:[%s5 + $0x48] sm:$0xff]
        %v580 = vld [vmem:[%s5 + $0x50] sm:$0xff]
        %v581 = vld [vmem:[%s5 + $0x58] sm:$0xff]
        %v582 = vld [vmem:[%s5 + $0x60] sm:$0xff]
        %v583 = vld [vmem:[%s5 + $0x68] sm:$0xff]
        %v584 = vld [vmem:[%s5 + $0x70] sm:$0xff]
        %v585 = vld [vmem:[%s5 + $0x78] sm:$0xff]
        %v586 = vld [vmem:[%s5 + $0x80] sm:$0xff]
        %v587 = vld [vmem:[%s5 + $0x88] sm:$0xff]
        %589 = vset.pattern.permute.xlu0 0
        %590 = vperm.xlu0 %589, %v570
        %v591 = vpop.permute.xlu0 %590
        %594 = vset.pattern.permute.xlu0 0
        %595 = vperm.xlu0 %594, %v571
        %v596 = vpop.permute.xlu0 %595
        %599 = vset.pattern.permute.xlu0 0
        %600 = vperm.xlu0 %599, %v572
        %v601 = vpop.permute.xlu0 %600
        %604 = vset.pattern.permute.xlu0 0
        %605 = vperm.xlu0 %604, %v573
        %v606 = vpop.permute.xlu0 %605
        %609 = vset.pattern.permute.xlu0 0
        %610 = vperm.xlu0 %609, %v574
        %v611 = vpop.permute.xlu0 %610
        %614 = vset.pattern.permute.xlu0 0
        %615 = vperm.xlu0 %614, %v575
        %v616 = vpop.permute.xlu0 %615
        %619 = vset.pattern.permute.xlu0 0
        %620 = vperm.xlu0 %619, %v576
        %v621 = vpop.permute.xlu0 %620
        %624 = vset.pattern.permute.xlu0 0
        %625 = vperm.xlu0 %624, %v577
        %v626 = vpop.permute.xlu0 %625
        %629 = vset.pattern.permute.xlu0 0
        %630 = vperm.xlu0 %629, %v578
        %v631 = vpop.permute.xlu0 %630
        %634 = vset.pattern.permute.xlu0 0
        %635 = vperm.xlu0 %634, %v579
        %v636 = vpop.permute.xlu0 %635
        %639 = vset.pattern.permute.xlu0 0
        %640 = vperm.xlu0 %639, %v580
        %v641 = vpop.permute.xlu0 %640
        %644 = vset.pattern.permute.xlu0 0
        %645 = vperm.xlu0 %644, %v581
        %v646 = vpop.permute.xlu0 %645
        %649 = vset.pattern.permute.xlu0 0
        %650 = vperm.xlu0 %649, %v582
        %v651 = vpop.permute.xlu0 %650
        %654 = vset.pattern.permute.xlu0 0
        %655 = vperm.xlu0 %654, %v583
        %v656 = vpop.permute.xlu0 %655
        %659 = vset.pattern.permute.xlu0 0
        %660 = vperm.xlu0 %659, %v584
        %v661 = vpop.permute.xlu0 %660
        %664 = vset.pattern.permute.xlu0 0
        %665 = vperm.xlu0 %664, %v585
        %v666 = vpop.permute.xlu0 %665
        %669 = vset.pattern.permute.xlu0 0
        %670 = vperm.xlu0 %669, %v586
        %v671 = vpop.permute.xlu0 %670
        %674 = vset.pattern.permute.xlu0 0
        %675 = vperm.xlu0 %674, %v587
        %v676 = vpop.permute.xlu0 %675
        %v679 = vsel %vm470, %v552, 0
        %v682 = vsel %vm470, %v553, 0
        %v685 = vsel %vm470, %v554, 0
        %v688 = vsel %vm470, %v555, 0
        %v691 = vsel %vm470, %v556, 0
        %v694 = vsel %vm470, %v557, 0
        %v697 = vsel %vm470, %v558, 0
        %v700 = vsel %vm470, %v559, 0
        %v703 = vsel %vm470, %v560, 0
        %v706 = vsel %vm470, %v561, 0
        %v709 = vsel %vm470, %v562, 0
        %v712 = vsel %vm470, %v563, 0
        %v715 = vsel %vm470, %v564, 0
        %v718 = vsel %vm470, %v565, 0
        %v721 = vsel %vm470, %v566, 0
        %v724 = vsel %vm470, %v567, 0
        %v727 = vsel %vm470, %v568, 0
        %v730 = vsel %vm470, %v569, 0
        %732 = vmatprep.subr.mxu0 0.0
        %733 = vmatpush1.msra.mxu0 %v544
        %734 = vmatprep.subr.mxu0 0.0
        %735 = vmatpush1.msra.mxu0 %v549
        %736 = vmatprep.subr.mxu0 0.0
        %737 = vmatpush1.msra.mxu0 0.0
        %738 = vmatprep.subr.mxu0 0.0
        %739 = vmatpush1.msra.mxu0 0.0
        %740 = vmatprep.subr.mxu0 0.0
        %741 = vmatpush1.msra.mxu0 0.0
        %742 = vmatprep.subr.mxu0 0.0
        %743 = vmatpush1.msra.mxu0 0.0
        %744 = vmatprep.subr.mxu0 0.0
        %745 = vmatpush1.msra.mxu0 0.0
        %746 = vmatprep.subr.mxu0 0.0
        %747 = vmatpush1.msra.mxu0 0.0
        %748 = vmatprep.subr.mxu0 0.0
        %749 = vmatpush1.msra.mxu0 0.0
        %750 = vmatprep.subr.mxu0 0.0
        %751 = vmatpush1.msra.mxu0 0.0
        %752 = vmatprep.subr.mxu0 0.0
        %753 = vmatpush1.msra.mxu0 0.0
        %754 = vmatprep.subr.mxu0 0.0
        %755 = vmatpush1.msra.mxu0 0.0
        %756 = vmatprep.subr.mxu0 0.0
        %757 = vmatpush1.msra.mxu0 0.0
        %758 = vmatprep.subr.mxu0 0.0
        %759 = vmatpush1.msra.mxu0 0.0
        %760 = vmatprep.subr.mxu0 0.0
        %761 = vmatpush1.msra.mxu0 0.0
        %762 = vmatprep.subr.mxu0 0.0
        %763 = vmatpush1.msra.mxu0 0.0
        %764 = vmatprep.subr.mxu0 0.0
        %765 = vmatpush1.msra.mxu0 0.0
        %766 = vmatprep.subr.mxu0 0.0
        %767 = vmatpush1.msra.mxu0 0.0
        %768 = vmatprep.subr.mxu0 0.0
        %769 = vmatpush1.msra.mxu0 0.0
        %770 = vmatprep.subr.mxu0 0.0
        %771 = vmatpush1.msra.mxu0 0.0
        %772 = vmatprep.subr.mxu0 0.0
        %773 = vmatpush1.msra.mxu0 0.0
        %774 = vmatprep.subr.mxu0 0.0
        %775 = vmatpush1.msra.mxu0 0.0
        %776 = vmatprep.subr.mxu0 0.0
        %777 = vmatpush1.msra.mxu0 0.0
        %778 = vmatprep.subr.mxu0 0.0
        %779 = vmatpush1.msra.mxu0 0.0
        %780 = vmatprep.subr.mxu0 0.0
        %781 = vmatpush1.msra.mxu0 0.0
        %782 = vmatprep.subr.mxu0 0.0
        %783 = vmatpush1.msra.mxu0 0.0
        %784 = vmatprep.subr.mxu0 0.0
        %785 = vmatpush1.msra.mxu0 0.0
        %786 = vmatprep.subr.mxu0 0.0
        %787 = vmatpush1.msra.mxu0 0.0
        %788 = vmatprep.subr.mxu0 0.0
        %789 = vmatpush1.msra.mxu0 0.0
        %790 = vmatprep.subr.mxu0 0.0
        %791 = vmatpush1.msra.mxu0 0.0
        %792 = vmatprep.subr.mxu0 0.0
        %793 = vmatpush1.msra.mxu0 0.0
        %794 = vmatprep.subr.mxu0 0.0
        %795 = vmatpush1.msra.mxu0 0.0
        %796 = vmatprep.mubr.f32.mxu0 0.0
        %797 = vmatmul.mubr.f32.gmra.mrb[0].mxu0 %v679
        %v798 = vpop.f32.mrb[0].mxu0
        %v799 = vadd.f32 %v591, %v798
        %v800 = vpop.f32.mrb[0].mxu0
        %801 = vmatprep.mubr.f32.mxu0 0.0
        %802 = vmatmul.mubr.f32.gmra.mrb[0].mxu0 %v682
        %v803 = vpop.f32.mrb[0].mxu0
        %v804 = vadd.f32 %v596, %v803
        %v805 = vpop.f32.mrb[0].mxu0
        %806 = vmatprep.mubr.f32.mxu0 0.0
        %807 = vmatmul.mubr.f32.gmra.mrb[0].mxu0 %v685
        %v808 = vpop.f32.mrb[0].mxu0
        %v809 = vadd.f32 %v601, %v808
        %v810 = vpop.f32.mrb[0].mxu0
        %811 = vmatprep.mubr.f32.mxu0 0.0
        %812 = vmatmul.mubr.f32.gmra.mrb[0].mxu0 %v688
        %v813 = vpop.f32.mrb[0].mxu0
        %v814 = vadd.f32 %v606, %v813
        %v815 = vpop.f32.mrb[0].mxu0
        %816 = vmatprep.mubr.f32.mxu0 0.0
        %817 = vmatmul.mubr.f32.gmra.mrb[0].mxu0 %v691
        %v818 = vpop.f32.mrb[0].mxu0
        %v819 = vadd.f32 %v611, %v818
        %v820 = vpop.f32.mrb[0].mxu0
        %821 = vmatprep.mubr.f32.mxu0 0.0
        %822 = vmatmul.mubr.f32.gmra.mrb[0].mxu0 %v694
        %v823 = vpop.f32.mrb[0].mxu0
        %v824 = vadd.f32 %v616, %v823
        %v825 = vpop.f32.mrb[0].mxu0
        %826 = vmatprep.mubr.f32.mxu0 0.0
        %827 = vmatmul.mubr.f32.gmra.mrb[0].mxu0 %v697
        %v828 = vpop.f32.mrb[0].mxu0
        %v829 = vadd.f32 %v621, %v828
        %v830 = vpop.f32.mrb[0].mxu0
        %831 = vmatprep.mubr.f32.mxu0 0.0
        %832 = vmatmul.mubr.f32.gmra.mrb[0].mxu0 %v700
        %v833 = vpop.f32.mrb[0].mxu0
        %v834 = vadd.f32 %v626, %v833
        %v835 = vpop.f32.mrb[0].mxu0
        %836 = vmatprep.mubr.f32.mxu0 0.0
        %837 = vmatmul.mubr.f32.gmra.mrb[0].mxu0 %v703
        %v838 = vpop.f32.mrb[0].mxu0
        %v839 = vadd.f32 %v631, %v838
        %v840 = vpop.f32.mrb[0].mxu0
        %841 = vmatprep.mubr.f32.mxu0 0.0
        %842 = vmatmul.mubr.f32.gmra.mrb[0].mxu0 %v706
        %v843 = vpop.f32.mrb[0].mxu0
        %v844 = vadd.f32 %v636, %v843
        %v845 = vpop.f32.mrb[0].mxu0
        %846 = vmatprep.mubr.f32.mxu0 0.0
        %847 = vmatmul.mubr.f32.gmra.mrb[0].mxu0 %v709
        %v848 = vpop.f32.mrb[0].mxu0
        %v849 = vadd.f32 %v641, %v848
        %v850 = vpop.f32.mrb[0].mxu0
        %851 = vmatprep.mubr.f32.mxu0 0.0
        %852 = vmatmul.mubr.f32.gmra.mrb[0].mxu0 %v712
        %v853 = vpop.f32.mrb[0].mxu0
        %v854 = vadd.f32 %v646, %v853
        %v855 = vpop.f32.mrb[0].mxu0
        %856 = vmatprep.mubr.f32.mxu0 0.0
        %857 = vmatmul.mubr.f32.gmra.mrb[0].mxu0 %v715
        %v858 = vpop.f32.mrb[0].mxu0
        %v859 = vadd.f32 %v651, %v858
        %v860 = vpop.f32.mrb[0].mxu0
        %861 = vmatprep.mubr.f32.mxu0 0.0
        %862 = vmatmul.mubr.f32.gmra.mrb[0].mxu0 %v718
        %v863 = vpop.f32.mrb[0].mxu0
        %v864 = vadd.f32 %v656, %v863
        %v865 = vpop.f32.mrb[0].mxu0
        %866 = vmatprep.mubr.f32.mxu0 0.0
        %867 = vmatmul.mubr.f32.gmra.mrb[0].mxu0 %v721
        %v868 = vpop.f32.mrb[0].mxu0
        %v869 = vadd.f32 %v661, %v868
        %v870 = vpop.f32.mrb[0].mxu0
        %871 = vmatprep.mubr.f32.mxu0 0.0
        %872 = vmatmul.mubr.f32.gmra.mrb[0].mxu0 %v724
        %v873 = vpop.f32.mrb[0].mxu0
        %v874 = vadd.f32 %v666, %v873
        %v875 = vpop.f32.mrb[0].mxu0
        %876 = vmatprep.mubr.f32.mxu0 0.0
        %877 = vmatmul.mubr.f32.gmra.mrb[0].mxu0 %v727
        %v878 = vpop.f32.mrb[0].mxu0
        %v879 = vadd.f32 %v671, %v878
        %v880 = vpop.f32.mrb[0].mxu0
        %881 = vmatprep.mubr.f32.mxu0 0.0
        %882 = vmatmul.mubr.f32.gmra.mrb[0].mxu0 %v730
        %v883 = vpop.f32.mrb[0].mxu0
        %v884 = vadd.f32 %v676, %v883
        %v885 = vpop.f32.mrb[0].mxu0
        %886 = vdwg.mxu0
        %v887 = vld [vmem:[%s445] sm:$0xf]
        %vm888 = vcmask 3072
        %v889 = vsel %vm888, %v887, 0.0
        %v890 = vrot.slane %v889, 4
        %v891 = vadd.f32 %v889, %v890
        %v892 = vrot.slane %v891, 2
        %v893 = vadd.f32 %v891, %v892
        %v894 = vrot.slane %v893, 1
        %v895 = vadd.f32 %v893, %v894
        %v896 = vrcp.pop 4.0
        %v897 = vmul.f32 %v895, %v896
        %v898 = vsub.f32 %v887, %v897
        %v899 = vmul.f32 %v898, %v898
        %v900 = vsel %vm888, %v899, 0.0
        %v901 = vrot.slane %v900, 4
        %v902 = vadd.f32 %v900, %v901
        %v903 = vrot.slane %v902, 2
        %v904 = vadd.f32 %v902, %v903
        %v905 = vrot.slane %v904, 1
        %v906 = vadd.f32 %v904, %v905
        %v907 = vmul.f32 %v906, %v896
        %v908 = vadd.f32 %v907, 1e-05
        %v909 = vrsqrt.pop %v908
        %v910 = vmul.f32 %v898, %v909
        %912 = vset.pattern.permute.xlu0 0
        %913 = vperm.xlu0 %912, %v910
        %v914 = vpop.permute.xlu0 %913
        %v916 = vmul.f32 %v799, %v914
        %v917 = vadd.f32 %v916, %v804
        %v918 = vld [vmem:[%s6] sm:$0xff]
        %v919 = vld [vmem:[%s6 + $0x8] sm:$0xff]
        %v920 = vld [vmem:[%s6 + $0x10] sm:$0xff]
        %v921 = vld [vmem:[%s6 + $0x18] sm:$0xff]
        %v922 = vld [vmem:[%s7] sm:$0xff]
        %v923 = vld [vmem:[%s7 + $0x8] sm:$0xff]
        %v924 = vld [vmem:[%s7 + $0x10] sm:$0xff]
        %v925 = vld [vmem:[%s7 + $0x18] sm:$0xff]
        %927 = vset.pattern.permute.xlu0 0
        %928 = vperm.xlu0 %927, %v922
        %v929 = vpop.permute.xlu0 %928
        %932 = vset.pattern.permute.xlu0 0
        %933 = vperm.xlu0 %932, %v923
        %v934 = vpop.permute.xlu0 %933
        %937 = vset.pattern.permute.xlu0 0
        %938 = vperm.xlu0 %937, %v924
        %v939 = vpop.permute.xlu0 %938
        %942 = vset.pattern.permute.xlu0 0
        %943 = vperm.xlu0 %942, %v925
        %v944 = vpop.permute.xlu0 %943
        %vm946 = vcmask 31744
        %v948 = vsel %vm946, %v918, 0
        %v951 = vsel %vm946, %v919, 0
        %v954 = vsel %vm946, %v920, 0
        %v957 = vsel %vm946, %v921, 0
        %vm959 = vcmask 1043456
        %v961 = vsel %vm959, %v917, 0
        %963 = vmatprep.subr.mxu0 0.0
        %964 = vmatpush1.msra.mxu0 %v961
        %965 = vmatprep.subr.mxu0 0.0
        %966 = vmatpush1.msra.mxu0 0.0
        %967 = vmatprep.subr.mxu0 0.0
        %968 = vmatpush1.msra.mxu0 0.0
        %969 = vmatprep.subr.mxu0 0.0
        %970 = vmatpush1.msra.mxu0 0.0
        %971 = vmatprep.subr.mxu0 0.0
        %972 = vmatpush1.msra.mxu0 0.0
        %973 = vmatprep.subr.mxu0 0.0
        %974 = vmatpush1.msra.mxu0 0.0
        %975 = vmatprep.subr.mxu0 0.0
        %976 = vmatpush1.msra.mxu0 0.0
        %977 = vmatprep.subr.mxu0 0.0
        %978 = vmatpush1.msra.mxu0 0.0
        %979 = vmatprep.subr.mxu0 0.0
        %980 = vmatpush1.msra.mxu0 0.0
        %981 = vmatprep.subr.mxu0 0.0
        %982 = vmatpush1.msra.mxu0 0.0
        %983 = vmatprep.subr.mxu0 0.0
        %984 = vmatpush1.msra.mxu0 0.0
        %985 = vmatprep.subr.mxu0 0.0
        %986 = vmatpush1.msra.mxu0 0.0
        %987 = vmatprep.subr.mxu0 0.0
        %988 = vmatpush1.msra.mxu0 0.0
        %989 = vmatprep.subr.mxu0 0.0
        %990 = vmatpush1.msra.mxu0 0.0
        %991 = vmatprep.subr.mxu0 0.0
        %992 = vmatpush1.msra.mxu0 0.0
        %993 = vmatprep.subr.mxu0 0.0
        %994 = vmatpush1.msra.mxu0 0.0
        %995 = vmatprep.subr.mxu0 0.0
        %996 = vmatpush1.msra.mxu0 0.0
        %997 = vmatprep.subr.mxu0 0.0
        %998 = vmatpush1.msra.mxu0 0.0
        %999 = vmatprep.subr.mxu0 0.0
        %1000 = vmatpush1.msra.mxu0 0.0
        %1001 = vmatprep.subr.mxu0 0.0
        %1002 = vmatpush1.msra.mxu0 0.0
        %1003 = vmatprep.subr.mxu0 0.0
        %1004 = vmatpush1.msra.mxu0 0.0
        %1005 = vmatprep.subr.mxu0 0.0
        %1006 = vmatpush1.msra.mxu0 0.0
        %1007 = vmatprep.subr.mxu0 0.0
        %1008 = vmatpush1.msra.mxu0 0.0
        %1009 = vmatprep.subr.mxu0 0.0
        %1010 = vmatpush1.msra.mxu0 0.0
        %1011 = vmatprep.subr.mxu0 0.0
        %1012 = vmatpush1.msra.mxu0 0.0
        %1013 = vmatprep.subr.mxu0 0.0
        %1014 = vmatpush1.msra.mxu0 0.0
        %1015 = vmatprep.subr.mxu0 0.0
        %1016 = vmatpush1.msra.mxu0 0.0
        %1017 = vmatprep.subr.mxu0 0.0
        %1018 = vmatpush1.msra.mxu0 0.0
        %1019 = vmatprep.subr.mxu0 0.0
        %1020 = vmatpush1.msra.mxu0 0.0
        %1021 = vmatprep.subr.mxu0 0.0
        %1022 = vmatpush1.msra.mxu0 0.0
        %1023 = vmatprep.subr.mxu0 0.0
        %1024 = vmatpush1.msra.mxu0 0.0
        %1025 = vmatprep.subr.mxu0 0.0
        %1026 = vmatpush1.msra.mxu0 0.0
        %1027 = vmatprep.mubr.f32.mxu0 0.0
        %1028 = vmatmul.mubr.f32.gmra.mrb[0].mxu0 %v948
        %v1029 = vpop.f32.mrb[0].mxu0
        %v1030 = vadd.f32 %v929, %v1029
        %v1031 = vpop.f32.mrb[0].mxu0
        %1032 = vmatprep.mubr.f32.mxu0 0.0
        %1033 = vmatmul.mubr.f32.gmra.mrb[0].mxu0 %v951
        %v1034 = vpop.f32.mrb[0].mxu0
        %v1035 = vadd.f32 %v934, %v1034
        %v1036 = vpop.f32.mrb[0].mxu0
        %1037 = vmatprep.mubr.f32.mxu0 0.0
        %1038 = vmatmul.mubr.f32.gmra.mrb[0].mxu0 %v954
        %v1039 = vpop.f32.mrb[0].mxu0
        %v1040 = vadd.f32 %v939, %v1039
        %v1041 = vpop.f32.mrb[0].mxu0
        %1042 = vmatprep.mubr.f32.mxu0 0.0
        %1043 = vmatmul.mubr.f32.gmra.mrb[0].mxu0 %v957
        %v1044 = vpop.f32.mrb[0].mxu0
        %v1045 = vadd.f32 %v944, %v1044
        %v1046 = vpop.f32.mrb[0].mxu0
        %1047 = vdwg.mxu0
        %v1048 = vmax.f32 %v1030, 0.0
        %v1049 = vmax.f32 %v1035, 0.0
        %v1050 = vmax.f32 %v1040, 0.0
        %v1051 = vmax.f32 %v1045, 0.0
        %vm1052 = vcmask 64512
        %v1053 = vsel %vm1052, %v1048, 0.0
        %v1054 = vsel %vm1052, %v1049, 0.0
        %v1055 = vadd.f32 %v1053, %v1054
        %v1056 = vsel %vm1052, %v1050, 0.0
        %v1057 = vadd.f32 %v1055, %v1056
        %v1058 = vsel %vm1052, %v1051, 0.0
        %v1059 = vadd.f32 %v1057, %v1058
        %v1060 = vrot.slane %v1059, 4
        %v1061 = vadd.f32 %v1059, %v1060
        %v1062 = vrot.slane %v1061, 2
        %v1063 = vadd.f32 %v1061, %v1062
        %v1064 = vrot.slane %v1063, 1
        %v1065 = vadd.f32 %v1063, %v1064
        %v1066 = vrcp.pop 32.0
        %v1067 = vmul.f32 %v1065, %v1066
        %v1068 = vsub.f32 %v1048, %v1067
        %v1069 = vsub.f32 %v1049, %v1067
        %v1070 = vsub.f32 %v1050, %v1067
        %v1071 = vsub.f32 %v1051, %v1067
        %v1072 = vmul.f32 %v1068, %v1068
        %v1073 = vmul.f32 %v1069, %v1069
        %v1074 = vmul.f32 %v1070, %v1070
        %v1075 = vmul.f32 %v1071, %v1071
        %v1076 = vsel %vm1052, %v1072, 0.0
        %v1077 = vsel %vm1052, %v1073, 0.0
        %v1078 = vadd.f32 %v1076, %v1077
        %v1079 = vsel %vm1052, %v1074, 0.0
        %v1080 = vadd.f32 %v1078, %v1079
        %v1081 = vsel %vm1052, %v1075, 0.0
        %v1082 = vadd.f32 %v1080, %v1081
        %v1083 = vrot.slane %v1082, 4
        %v1084 = vadd.f32 %v1082, %v1083
        %v1085 = vrot.slane %v1084, 2
        %v1086 = vadd.f32 %v1084, %v1085
        %v1087 = vrot.slane %v1086, 1
        %v1088 = vadd.f32 %v1086, %v1087
        %v1089 = vmul.f32 %v1088, %v1066
        %v1090 = vadd.f32 %v1089, 1e-05
        %v1091 = vrsqrt.pop %v1090
        %v1092 = vmul.f32 %v1068, %v1091
        %v1093 = vmul.f32 %v1069, %v1091
        %v1094 = vmul.f32 %v1070, %v1091
        %v1095 = vmul.f32 %v1071, %v1091
        %v1096 = vmul.f32 %v809, %v1092
        %v1097 = vmul.f32 %v814, %v1093
        %v1098 = vmul.f32 %v819, %v1094
        %v1099 = vmul.f32 %v824, %v1095
        %v1100 = vadd.f32 %v1096, %v829
        %v1101 = vadd.f32 %v1097, %v834
        %v1102 = vadd.f32 %v1098, %v839
        %v1103 = vadd.f32 %v1099, %v844
        %v1104 = vld [vmem:[%s8] sm:$0xff]
        %v1105 = vld [vmem:[%s8 + $0x8] sm:$0xff]
        %v1106 = vld [vmem:[%s8 + $0x10] sm:$0xff]
        %v1107 = vld [vmem:[%s8 + $0x18] sm:$0xff]
        %v1108 = vld [vmem:[%s9] sm:$0xff]
        %v1109 = vld [vmem:[%s9 + $0x8] sm:$0xff]
        %v1110 = vld [vmem:[%s9 + $0x10] sm:$0xff]
        %v1111 = vld [vmem:[%s9 + $0x18] sm:$0xff]
        %1113 = vset.pattern.permute.xlu0 0
        %1114 = vperm.xlu0 %1113, %v1108
        %v1115 = vpop.permute.xlu0 %1114
        %1118 = vset.pattern.permute.xlu0 0
        %1119 = vperm.xlu0 %1118, %v1109
        %v1120 = vpop.permute.xlu0 %1119
        %1123 = vset.pattern.permute.xlu0 0
        %1124 = vperm.xlu0 %1123, %v1110
        %v1125 = vpop.permute.xlu0 %1124
        %1128 = vset.pattern.permute.xlu0 0
        %1129 = vperm.xlu0 %1128, %v1111
        %v1130 = vpop.permute.xlu0 %1129
        %vm1132 = vcmask 261120
        %v1134 = vsel %vm1132, %v1104, 0
        %v1137 = vsel %vm1132, %v1105, 0
        %v1140 = vsel %vm1132, %v1106, 0
        %v1143 = vsel %vm1132, %v1107, 0
        %1145 = vmatprep.subr.mxu0 0.0
        %1146 = vmatpush1.msra.mxu0 %v1100
        %1147 = vmatprep.subr.mxu0 0.0
        %1148 = vmatpush1.msra.mxu0 %v1101
        %1149 = vmatprep.subr.mxu0 0.0
        %1150 = vmatpush1.msra.mxu0 %v1102
        %1151 = vmatprep.subr.mxu0 0.0
        %1152 = vmatpush1.msra.mxu0 %v1103
        %1153 = vmatprep.subr.mxu0 0.0
        %1154 = vmatpush1.msra.mxu0 0.0
        %1155 = vmatprep.subr.mxu0 0.0
        %1156 = vmatpush1.msra.mxu0 0.0
        %1157 = vmatprep.subr.mxu0 0.0
        %1158 = vmatpush1.msra.mxu0 0.0
        %1159 = vmatprep.subr.mxu0 0.0
        %1160 = vmatpush1.msra.mxu0 0.0
        %1161 = vmatprep.subr.mxu0 0.0
        %1162 = vmatpush1.msra.mxu0 0.0
        %1163 = vmatprep.subr.mxu0 0.0
        %1164 = vmatpush1.msra.mxu0 0.0
        %1165 = vmatprep.subr.mxu0 0.0
        %1166 = vmatpush1.msra.mxu0 0.0
        %1167 = vmatprep.subr.mxu0 0.0
        %1168 = vmatpush1.msra.mxu0 0.0
        %1169 = vmatprep.subr.mxu0 0.0
        %1170 = vmatpush1.msra.mxu0 0.0
        %1171 = vmatprep.subr.mxu0 0.0
        %1172 = vmatpush1.msra.mxu0 0.0
        %1173 = vmatprep.subr.mxu0 0.0
        %1174 = vmatpush1.msra.mxu0 0.0
        %1175 = vmatprep.subr.mxu0 0.0
        %1176 = vmatpush1.msra.mxu0 0.0
        %1177 = vmatprep.subr.mxu0 0.0
        %1178 = vmatpush1.msra.mxu0 0.0
        %1179 = vmatprep.subr.mxu0 0.0
        %1180 = vmatpush1.msra.mxu0 0.0
        %1181 = vmatprep.subr.mxu0 0.0
        %1182 = vmatpush1.msra.mxu0 0.0
        %1183 = vmatprep.subr.mxu0 0.0
        %1184 = vmatpush1.msra.mxu0 0.0
        %1185 = vmatprep.subr.mxu0 0.0
        %1186 = vmatpush1.msra.mxu0 0.0
        %1187 = vmatprep.subr.mxu0 0.0
        %1188 = vmatpush1.msra.mxu0 0.0
        %1189 = vmatprep.subr.mxu0 0.0
        %1190 = vmatpush1.msra.mxu0 0.0
        %1191 = vmatprep.subr.mxu0 0.0
        %1192 = vmatpush1.msra.mxu0 0.0
        %1193 = vmatprep.subr.mxu0 0.0
        %1194 = vmatpush1.msra.mxu0 0.0
        %1195 = vmatprep.subr.mxu0 0.0
        %1196 = vmatpush1.msra.mxu0 0.0
        %1197 = vmatprep.subr.mxu0 0.0
        %1198 = vmatpush1.msra.mxu0 0.0
        %1199 = vmatprep.subr.mxu0 0.0
        %1200 = vmatpush1.msra.mxu0 0.0
        %1201 = vmatprep.subr.mxu0 0.0
        %1202 = vmatpush1.msra.mxu0 0.0
        %1203 = vmatprep.subr.mxu0 0.0
        %1204 = vmatpush1.msra.mxu0 0.0
        %1205 = vmatprep.subr.mxu0 0.0
        %1206 = vmatpush1.msra.mxu0 0.0
        %1207 = vmatprep.subr.mxu0 0.0
        %1208 = vmatpush1.msra.mxu0 0.0
        %1209 = vmatprep.mubr.f32.mxu0 0.0
        %1210 = vmatmul.mubr.f32.gmra.mrb[0].mxu0 %v1134
        %v1211 = vpop.f32.mrb[0].mxu0
        %v1212 = vadd.f32 %v1115, %v1211
        %v1213 = vpop.f32.mrb[0].mxu0
        %1214 = vmatprep.mubr.f32.mxu0 0.0
        %1215 = vmatmul.mubr.f32.gmra.mrb[0].mxu0 %v1137
        %v1216 = vpop.f32.mrb[0].mxu0
        %v1217 = vadd.f32 %v1120, %v1216
        %v1218 = vpop.f32.mrb[0].mxu0
        %1219 = vmatprep.mubr.f32.mxu0 0.0
        %1220 = vmatmul.mubr.f32.gmra.mrb[0].mxu0 %v1140
        %v1221 = vpop.f32.mrb[0].mxu0
        %v1222 = vadd.f32 %v1125, %v1221
        %v1223 = vpop.f32.mrb[0].mxu0
        %1224 = vmatprep.mubr.f32.mxu0 0.0
        %1225 = vmatmul.mubr.f32.gmra.mrb[0].mxu0 %v1143
        %v1226 = vpop.f32.mrb[0].mxu0
        %v1227 = vadd.f32 %v1130, %v1226
        %v1228 = vpop.f32.mrb[0].mxu0
        %1229 = vdwg.mxu0
        %v1230 = vmax.f32 %v1212, 0.0
        %v1231 = vmax.f32 %v1217, 0.0
        %v1232 = vmax.f32 %v1222, 0.0
        %v1233 = vmax.f32 %v1227, 0.0
        %v1234 = vsel %vm1052, %v1230, 0.0
        %v1235 = vsel %vm1052, %v1231, 0.0
        %v1236 = vadd.f32 %v1234, %v1235
        %v1237 = vsel %vm1052, %v1232, 0.0
        %v1238 = vadd.f32 %v1236, %v1237
        %v1239 = vsel %vm1052, %v1233, 0.0
        %v1240 = vadd.f32 %v1238, %v1239
        %v1241 = vrot.slane %v1240, 4
        %v1242 = vadd.f32 %v1240, %v1241
        %v1243 = vrot.slane %v1242, 2
        %v1244 = vadd.f32 %v1242, %v1243
        %v1245 = vrot.slane %v1244, 1
        %v1246 = vadd.f32 %v1244, %v1245
        %v1247 = vmul.f32 %v1246, %v1066
        %v1248 = vsub.f32 %v1230, %v1247
        %v1249 = vsub.f32 %v1231, %v1247
        %v1250 = vsub.f32 %v1232, %v1247
        %v1251 = vsub.f32 %v1233, %v1247
        %v1252 = vmul.f32 %v1248, %v1248
        %v1253 = vmul.f32 %v1249, %v1249
        %v1254 = vmul.f32 %v1250, %v1250
        %v1255 = vmul.f32 %v1251, %v1251
        %v1256 = vsel %vm1052, %v1252, 0.0
        %v1257 = vsel %vm1052, %v1253, 0.0
        %v1258 = vadd.f32 %v1256, %v1257
        %v1259 = vsel %vm1052, %v1254, 0.0
        %v1260 = vadd.f32 %v1258, %v1259
        %v1261 = vsel %vm1052, %v1255, 0.0
        %v1262 = vadd.f32 %v1260, %v1261
        %v1263 = vrot.slane %v1262, 4
        %v1264 = vadd.f32 %v1262, %v1263
        %v1265 = vrot.slane %v1264, 2
        %v1266 = vadd.f32 %v1264, %v1265
        %v1267 = vrot.slane %v1266, 1
        %v1268 = vadd.f32 %v1266, %v1267
        %v1269 = vmul.f32 %v1268, %v1066
        %v1270 = vadd.f32 %v1269, 1e-05
        %v1271 = vrsqrt.pop %v1270
        %v1272 = vmul.f32 %v1248, %v1271
        %v1273 = vmul.f32 %v1249, %v1271
        %v1274 = vmul.f32 %v1250, %v1271
        %v1275 = vmul.f32 %v1251, %v1271
        %v1276 = vmul.f32 %v849, %v1272
        %v1277 = vmul.f32 %v854, %v1273
        %v1278 = vmul.f32 %v859, %v1274
        %v1279 = vmul.f32 %v864, %v1275
        %v1280 = vadd.f32 %v1276, %v869
        %v1281 = vadd.f32 %v1277, %v874
        %v1282 = vadd.f32 %v1278, %v879
        %v1283 = vadd.f32 %v1279, %v884
        %v1284 = vld [vmem:[%s10] sm:$0x3]
        %v1285 = vld [vmem:[%s11] sm:$0x3]
        %1287 = vset.pattern.permute.xlu0 0
        %1288 = vperm.xlu0 %1287, %v1285
        %v1289 = vpop.permute.xlu0 %1288
        %v1292 = vsel %vm1132, %v1284, 0
        %1294 = vmatprep.subr.mxu0 0.0
        %1295 = vmatpush1.msra.mxu0 %v1280
        %1296 = vmatprep.subr.mxu0 0.0
        %1297 = vmatpush1.msra.mxu0 %v1281
        %1298 = vmatprep.subr.mxu0 0.0
        %1299 = vmatpush1.msra.mxu0 %v1282
        %1300 = vmatprep.subr.mxu0 0.0
        %1301 = vmatpush1.msra.mxu0 %v1283
        %1302 = vmatprep.subr.mxu0 0.0
        %1303 = vmatpush1.msra.mxu0 0.0
        %1304 = vmatprep.subr.mxu0 0.0
        %1305 = vmatpush1.msra.mxu0 0.0
        %1306 = vmatprep.subr.mxu0 0.0
        %1307 = vmatpush1.msra.mxu0 0.0
        %1308 = vmatprep.subr.mxu0 0.0
        %1309 = vmatpush1.msra.mxu0 0.0
        %1310 = vmatprep.subr.mxu0 0.0
        %1311 = vmatpush1.msra.mxu0 0.0
        %1312 = vmatprep.subr.mxu0 0.0
        %1313 = vmatpush1.msra.mxu0 0.0
        %1314 = vmatprep.subr.mxu0 0.0
        %1315 = vmatpush1.msra.mxu0 0.0
        %1316 = vmatprep.subr.mxu0 0.0
        %1317 = vmatpush1.msra.mxu0 0.0
        %1318 = vmatprep.subr.mxu0 0.0
        %1319 = vmatpush1.msra.mxu0 0.0
        %1320 = vmatprep.subr.mxu0 0.0
        %1321 = vmatpush1.msra.mxu0 0.0
        %1322 = vmatprep.subr.mxu0 0.0
        %1323 = vmatpush1.msra.mxu0 0.0
        %1324 = vmatprep.subr.mxu0 0.0
        %1325 = vmatpush1.msra.mxu0 0.0
        %1326 = vmatprep.subr.mxu0 0.0
        %1327 = vmatpush1.msra.mxu0 0.0
        %1328 = vmatprep.subr.mxu0 0.0
        %1329 = vmatpush1.msra.mxu0 0.0
        %1330 = vmatprep.subr.mxu0 0.0
        %1331 = vmatpush1.msra.mxu0 0.0
        %1332 = vmatprep.subr.mxu0 0.0
        %1333 = vmatpush1.msra.mxu0 0.0
        %1334 = vmatprep.subr.mxu0 0.0
        %1335 = vmatpush1.msra.mxu0 0.0
        %1336 = vmatprep.subr.mxu0 0.0
        %1337 = vmatpush1.msra.mxu0 0.0
        %1338 = vmatprep.subr.mxu0 0.0
        %1339 = vmatpush1.msra.mxu0 0.0
        %1340 = vmatprep.subr.mxu0 0.0
        %1341 = vmatpush1.msra.mxu0 0.0
        %1342 = vmatprep.subr.mxu0 0.0
        %1343 = vmatpush1.msra.mxu0 0.0
        %1344 = vmatprep.subr.mxu0 0.0
        %1345 = vmatpush1.msra.mxu0 0.0
        %1346 = vmatprep.subr.mxu0 0.0
        %1347 = vmatpush1.msra.mxu0 0.0
        %1348 = vmatprep.subr.mxu0 0.0
        %1349 = vmatpush1.msra.mxu0 0.0
        %1350 = vmatprep.subr.mxu0 0.0
        %1351 = vmatpush1.msra.mxu0 0.0
        %1352 = vmatprep.subr.mxu0 0.0
        %1353 = vmatpush1.msra.mxu0 0.0
        %1354 = vmatprep.subr.mxu0 0.0
        %1355 = vmatpush1.msra.mxu0 0.0
        %1356 = vmatprep.subr.mxu0 0.0
        %1357 = vmatpush1.msra.mxu0 0.0
        %1358 = vmatprep.mubr.f32.mxu0 0.0
        %1359 = vmatmul.mubr.f32.gmra.mrb[0].mxu0 %v1292
        %v1360 = vpop.f32.mrb[0].mxu0
        %v1361 = vadd.f32 %v1289, %v1360
        %v1362 = vpop.f32.mrb[0].mxu0
        %1363 = vdwg.mxu0
        %vm1364 = vcmask 58368
        %1365 = vst.msk [vmem:[%s441] sm:$0x3] %vm1364, %v1361
        %s1366 = sand.u32 %s312, 1
        %s1367 = scalar_lea.sflag [#allocation3], %s1366
        %s1368 = sand.u32 %s312, 1
        %s1369 = smul.addr %s1368, 2
        %s1370 = scalar_lea.vmem [#allocation2], %s1369
        // Predicated region
        $region69: #{tpu_custom_call.1} parent=67 // pred_check
          %p1371 = pneg %p322
        $region70: #{tpu_custom_call.1} parent=67 // pred_check_branch
          %1373 = sbr.rel (%p1371) target = $region72
        $region71: #{tpu_custom_call.1} parent=67 // pred_region
          %s1375 = ssub.s32 32, 32
          %1376 = vsyncadd %s1367, %s1375
          %s1377 = sadd.s32 %s31, %s30
          %s1378 = smul.addr %s1377, 32
          %s1379 = scalar_lea.hbm %s12, %s1378
          %s1381 = sshll.u32 %s1370, 4
          %s1382 = int_to_ptr.vmem [resolvable:$true] %s1381
          %1384 = dma.vmem_to_hbm [thread:$0]  %s1382, 32, %s1379, %s1367
        $region72: #{tpu_custom_call.1} parent=67 // pred_fallthru
          _
      $region68: #{tpu_custom_call.1} parent=5 // pred_fallthru
        _
      %p1385 = scmp.le.s32.totalorder 2, %s21
      // Predicated region
      $region73: #{tpu_custom_call.1} parent=5 // pred_check
        %p1386 = pneg %p1385
      $region74: #{tpu_custom_call.1} parent=5 // pred_check_branch
        %1388 = sbr.rel (%p1386) target = $region76
      $region75: #{tpu_custom_call.1} parent=5 // pred_region
        %s1389 = ssub.s32 %s21, 2
        // Predicated region
        $region77: #{tpu_custom_call.1} parent=75 // pred_check
          %p1390 = pneg %p328
        $region78: #{tpu_custom_call.1} parent=75 // pred_check_branch
          %1392 = sbr.rel (%p1390) target = $region80
        $region79: #{tpu_custom_call.1} parent=75 // pred_region
          %s1393 = sand.u32 %s313, 1
          %s1394 = scalar_lea.sflag [#allocation3], %s1393
          %s1395 = sand.u32 %s313, 1
          %s1396 = smul.addr %s1395, 2
          %s1397 = scalar_lea.vmem [#allocation2], %s1396
          %1398 = dma.done %s1394, 32
        $region80: #{tpu_custom_call.1} parent=75 // pred_fallthru
          _
      $region76: #{tpu_custom_call.1} parent=5 // pred_fallthru
        _
    $region6: #{tpu_custom_call.1} parent=1 // loop_footer
      %s25 = sadd.s32 1, %s21
    $region7: #{tpu_custom_call.1} parent=1 // loop_footer_branch
      %20 = sbr.rel target = $region3
    $region8: #{tpu_custom_call.1} parent=1 // loop_exit
      _
    %1399 = vsyncpa [#allocation3], 1
    %s1400 = scalar_lea.sflag [#allocation3], 1
    %1401 = vsyncpa %s1400, 1

// kernel: tpu_custom_call.1
$region0: #{tpu_custom_call.1}
  #allocation0 [shape = 'u32[]', space=smem, size = 0x4, offset = 0x4, fixed_abs, tag = 'smem constant byte address 0x4 - core index']
  #allocation1 [shape = 'u32[144,128]{1,0:T(1,128)}', space=vmem, size = 0x12000, scoped, tag = 'internal scratch']
  %s0 = inlined_call_operand.vmem [shape: f32[2,4,1], index: 0, kind: input, shape index: {}]
  %s1 = inlined_call_operand.vmem [shape: f32[2,16,8], index: 1, kind: input, shape index: {}]
  %s2 = inlined_call_operand.vmem [shape: f32[16,16], index: 2, kind: input, shape index: {}]
  %s3 = inlined_call_operand.vmem [shape: f32[16,1], index: 3, kind: input, shape index: {}]
  %s4 = inlined_call_operand.vmem [shape: f32[144,16], index: 4, kind: input, shape index: {}]
  %s5 = inlined_call_operand.vmem [shape: f32[144,1], index: 5, kind: input, shape index: {}]
  %s6 = inlined_call_operand.vmem [shape: f32[32,4], index: 6, kind: input, shape index: {}]
  %s7 = inlined_call_operand.vmem [shape: f32[32,1], index: 7, kind: input, shape index: {}]
  %s8 = inlined_call_operand.vmem [shape: f32[32,32], index: 8, kind: input, shape index: {}]
  %s9 = inlined_call_operand.vmem [shape: f32[32,1], index: 9, kind: input, shape index: {}]
  %s10 = inlined_call_operand.vmem [shape: f32[2,32], index: 10, kind: input, shape index: {}]
  %s11 = inlined_call_operand.vmem [shape: f32[2,1], index: 11, kind: input, shape index: {}]
  %s12 = inlined_call_operand.hbm [shape: f32[2,2,8], index: 12, kind: output, shape index: {}]
  %s13 = sld [smem:[#allocation0]]
  $region81: #{tpu_custom_call.1} parent=0
    _
  %s15 = ssub.s32 1, %s13
  %s16 = scalar_select 0, %s15, %s13
  $region1: #{tpu_custom_call.1} parent=0
    #allocation2 [shape = 'u8[2048]{0}', space=vmem, size = 0x800, scoped, tag = 'output window, operand 0']
    #allocation3 [shape = 's32[2]{0}', space=sflag, size = 0x8, scoped, tag = 'scoped memory for tpu_custom_call.1']
    %17 = vsyncpa [#allocation3], 0
    %s18 = scalar_lea.sflag [#allocation3], 1
    %19 = vsyncpa %s18, 0
    loop: start=0, step=1, limit=4
    $region2: #{tpu_custom_call.1} parent=1 // loop_pre_header
      _
    $region3: #{tpu_custom_call.1} parent=1 // loop_header
      %s21 = sphi 0, %s25
      %p22 = scmp.ge.s32.totalorder %s21, 4
      %s28 = sphi 0, %s40
      %s29 = sphi 0, %s36
      %s30 = sphi 0, %s28
      %s31 = sphi 0, %s29
      %s32 = sphi 0, %s30
      %s33 = sphi 0, %s31
      %s43 = sphi 0, %s45
      %s46 = sphi 0, %s43
      %s47 = sphi 0, %s46
      %s63 = sphi 0, %s47
      %s71 = sphi 0, %s73
      %s74 = sphi 0, %s71
      %s75 = sphi 0, %s74
      %s91 = sphi 0, %s75
      %s95 = sphi 0, %s95
      %s97 = sphi 0, %s95
      %s98 = sphi 0, %s97
      %s112 = sphi 0, %s98
      %s116 = sphi 0, %s116
      %s118 = sphi 0, %s116
      %s119 = sphi 0, %s118
      %s133 = sphi 0, %s119
      %s137 = sphi 0, %s137
      %s139 = sphi 0, %s137
      %s140 = sphi 0, %s139
      %s154 = sphi 0, %s140
      %s158 = sphi 0, %s158
      %s160 = sphi 0, %s158
      %s161 = sphi 0, %s160
      %s175 = sphi 0, %s161
      %s179 = sphi 0, %s179
      %s181 = sphi 0, %s179
      %s182 = sphi 0, %s181
      %s196 = sphi 0, %s182
      %s200 = sphi 0, %s200
      %s202 = sphi 0, %s200
      %s203 = sphi 0, %s202
      %s217 = sphi 0, %s203
      %s221 = sphi 0, %s221
      %s223 = sphi 0, %s221
      %s224 = sphi 0, %s223
      %s238 = sphi 0, %s224
      %s242 = sphi 0, %s242
      %s244 = sphi 0, %s242
      %s245 = sphi 0, %s244
      %s259 = sphi 0, %s245
      %s263 = sphi 0, %s263
      %s265 = sphi 0, %s263
      %s266 = sphi 0, %s265
      %s280 = sphi 0, %s266
      %s284 = sphi 0, %s284
      %s286 = sphi 0, %s284
      %s287 = sphi 0, %s286
      %s301 = sphi 0, %s287
      %s309 = sphi 0, %s311
      %s312 = sphi 0, %s309
      %s313 = sphi 0, %s312
      %s329 = sphi 0, %s313
    $region4: #{tpu_custom_call.1} parent=1 // loop_header_branch
      %24 = sbr.rel (%p22) target = $region8
    $region5: #{tpu_custom_call.1} parent=1 // loop_body
      %s26 = ssub.s32 %s21, 1
      %s27 = ssub.s32 %s21, 2
      %s34 = sadd.s32 1, %s29
      %p35 = scmp.ge.s32.totalorder %s34, 1
      %s36 = scalar_select %p35, 0, %s34
      %s37 = sadd.s32 1, %s28
      %s38 = scalar_select %p35, %s37, %s28
      %p39 = scmp.ge.s32.totalorder %s38, 2
      %s40 = scalar_select %p39, 0, %s38
      %s41 = ssub.s32 %s28, %s40
      %p42 = scmp.eq.s32.totalorder %s41, 0
      %s44 = sadd.s32 %s43, 1
      %s45 = scalar_select %p42, %s43, %s44
      %p48 = pneg %p42
      %p49 = scmp.eq.s32.totalorder %s21, 1
      %p50 = por %p48, %p49
      %p51 = scmp.ne.s32.totalorder %s43, %s46
      %p52 = scmp.eq.s32.totalorder %s21, 0
      %p53 = por %p51, %p52
      %p54 = scmp.ne.s32.totalorder %s43, %s46
      %p55 = scmp.eq.s32.totalorder %s26, 1
      %p56 = por %p54, %p55
      %p57 = scmp.ne.s32.totalorder %s46, %s47
      %p58 = scmp.eq.s32.totalorder %s26, 0
      %p59 = por %p57, %p58
      %p60 = scmp.ne.s32.totalorder %s46, %s47
      %p61 = scmp.eq.s32.totalorder %s27, 1
      %p62 = por %p60, %p61
      %p64 = scmp.ne.s32.totalorder %s47, %s63
      %p65 = scmp.eq.s32.totalorder %s27, 0
      %p66 = por %p64, %p65
      %s67 = ssub.s32 %s28, %s40
      %s68 = ssub.s32 %s29, %s36
      %s69 = sor.u32 %s67, %s68
      %p70 = scmp.eq.s32.totalorder %s69, 0
      %s72 = sadd.s32 %s71, 1
      %s73 = scalar_select %p70, %s71, %s72
      %p76 = pneg %p70
      %p77 = scmp.eq.s32.totalorder %s21, 1
      %p78 = por %p76, %p77
      %p79 = scmp.ne.s32.totalorder %s71, %s74
      %p80 = scmp.eq.s32.totalorder %s21, 0
      %p81 = por %p79, %p80
      %p82 = scmp.ne.s32.totalorder %s71, %s74
      %p83 = scmp.eq.s32.totalorder %s26, 1
      %p84 = por %p82, %p83
      %p85 = scmp.ne.s32.totalorder %s74, %s75
      %p86 = scmp.eq.s32.totalorder %s26, 0
      %p87 = por %p85, %p86
      %p88 = scmp.ne.s32.totalorder %s74, %s75
      %p89 = scmp.eq.s32.totalorder %s27, 1
      %p90 = por %p88, %p89
      %p92 = scmp.ne.s32.totalorder %s75, %s91
      %p93 = scmp.eq.s32.totalorder %s27, 0
      %p94 = por %p92, %p93
      %s96 = sadd.s32 %s95, 1
      %p99 = scmp.eq.s32.totalorder %s21, 1
      %p100 = scmp.ne.s32.totalorder %s95, %s97
      %p101 = scmp.eq.s32.totalorder %s21, 0
      %p102 = por %p100, %p101
      %p103 = scmp.ne.s32.totalorder %s95, %s97
      %p104 = scmp.eq.s32.totalorder %s26, 1
      %p105 = por %p103, %p104
      %p106 = scmp.ne.s32.totalorder %s97, %s98
      %p107 = scmp.eq.s32.totalorder %s26, 0
      %p108 = por %p106, %p107
      %p109 = scmp.ne.s32.totalorder %s97, %s98
      %p110 = scmp.eq.s32.totalorder %s27, 1
      %p111 = por %p109, %p110
      %p113 = scmp.ne.s32.totalorder %s98, %s112
      %p114 = scmp.eq.s32.totalorder %s27, 0
      %p115 = por %p113, %p114
      %s117 = sadd.s32 %s116, 1
      %p120 = scmp.eq.s32.totalorder %s21, 1
      %p121 = scmp.ne.s32.totalorder %s116, %s118
      %p122 = scmp.eq.s32.totalorder %s21, 0
      %p123 = por %p121, %p122
      %p124 = scmp.ne.s32.totalorder %s116, %s118
      %p125 = scmp.eq.s32.totalorder %s26, 1
      %p126 = por %p124, %p125
      %p127 = scmp.ne.s32.totalorder %s118, %s119
      %p128 = scmp.eq.s32.totalorder %s26, 0
      %p129 = por %p127, %p128
      %p130 = scmp.ne.s32.totalorder %s118, %s119
      %p131 = scmp.eq.s32.totalorder %s27, 1
      %p132 = por %p130, %p131
      %p134 = scmp.ne.s32.totalorder %s119, %s133
      %p135 = scmp.eq.s32.totalorder %s27, 0
      %p136 = por %p134, %p135
      %s138 = sadd.s32 %s137, 1
      %p141 = scmp.eq.s32.totalorder %s21, 1
      %p142 = scmp.ne.s32.totalorder %s137, %s139
      %p143 = scmp.eq.s32.totalorder %s21, 0
      %p144 = por %p142, %p143
      %p145 = scmp.ne.s32.totalorder %s137, %s139
      %p146 = scmp.eq.s32.totalorder %s26, 1
      %p147 = por %p145, %p146
      %p148 = scmp.ne.s32.totalorder %s139, %s140
      %p149 = scmp.eq.s32.totalorder %s26, 0
      %p150 = por %p148, %p149
      %p151 = scmp.ne.s32.totalorder %s139, %s140
      %p152 = scmp.eq.s32.totalorder %s27, 1
      %p153 = por %p151, %p152
      %p155 = scmp.ne.s32.totalorder %s140, %s154
      %p156 = scmp.eq.s32.totalorder %s27, 0
      %p157 = por %p155, %p156
      %s159 = sadd.s32 %s158, 1
      %p162 = scmp.eq.s32.totalorder %s21, 1
      %p163 = scmp.ne.s32.totalorder %s158, %s160
      %p164 = scmp.eq.s32.totalorder %s21, 0
      %p165 = por %p163, %p164
      %p166 = scmp.ne.s32.totalorder %s158, %s160
      %p167 = scmp.eq.s32.totalorder %s26, 1
      %p168 = por %p166, %p167
      %p169 = scmp.ne.s32.totalorder %s160, %s161
      %p170 = scmp.eq.s32.totalorder %s26, 0
      %p171 = por %p169, %p170
      %p172 = scmp.ne.s32.totalorder %s160, %s161
      %p173 = scmp.eq.s32.totalorder %s27, 1
      %p174 = por %p172, %p173
      %p176 = scmp.ne.s32.totalorder %s161, %s175
      %p177 = scmp.eq.s32.totalorder %s27, 0
      %p178 = por %p176, %p177
      %s180 = sadd.s32 %s179, 1
      %p183 = scmp.eq.s32.totalorder %s21, 1
      %p184 = scmp.ne.s32.totalorder %s179, %s181
      %p185 = scmp.eq.s32.totalorder %s21, 0
      %p186 = por %p184, %p185
      %p187 = scmp.ne.s32.totalorder %s179, %s181
      %p188 = scmp.eq.s32.totalorder %s26, 1
      %p189 = por %p187, %p188
      %p190 = scmp.ne.s32.totalorder %s181, %s182
      %p191 = scmp.eq.s32.totalorder %s26, 0
      %p192 = por %p190, %p191
      %p193 = scmp.ne.s32.totalorder %s181, %s182
      %p194 = scmp.eq.s32.totalorder %s27, 1
      %p195 = por %p193, %p194
      %p197 = scmp.ne.s32.totalorder %s182, %s196
      %p198 = scmp.eq.s32.totalorder %s27, 0
      %p199 = por %p197, %p198
      %s201 = sadd.s32 %s200, 1
      %p204 = scmp.eq.s32.totalorder %s21, 1
      %p205 = scmp.ne.s32.totalorder %s200, %s202
      %p206 = scmp.eq.s32.totalorder %s21, 0
      %p207 = por %p205, %p206
      %p208 = scmp.ne.s32.totalorder %s200, %s202
      %p209 = scmp.eq.s32.totalorder %s26, 1
      %p210 = por %p208, %p209
      %p211 = scmp.ne.s32.totalorder %s202, %s203
      %p212 = scmp.eq.s32.totalorder %s26, 0
      %p213 = por %p211, %p212
      %p214 = scmp.ne.s32.totalorder %s202, %s203
      %p215 = scmp.eq.s32.totalorder %s27, 1
      %p216 = por %p214, %p215
      %p218 = scmp.ne.s32.totalorder %s203, %s217
      %p219 = scmp.eq.s32.totalorder %s27, 0
      %p220 = por %p218, %p219
      %s222 = sadd.s32 %s221, 1
      %p225 = scmp.eq.s32.totalorder %s21, 1
      %p226 = scmp.ne.s32.totalorder %s221, %s223
      %p227 = scmp.eq.s32.totalorder %s21, 0
      %p228 = por %p226, %p227
      %p229 = scmp.ne.s32.totalorder %s221, %s223
      %p230 = scmp.eq.s32.totalorder %s26, 1
      %p231 = por %p229, %p230
      %p232 = scmp.ne.s32.totalorder %s223, %s224
      %p233 = scmp.eq.s32.totalorder %s26, 0
      %p234 = por %p232, %p233
      %p235 = scmp.ne.s32.totalorder %s223, %s224
      %p236 = scmp.eq.s32.totalorder %s27, 1
      %p237 = por %p235, %p236
      %p239 = scmp.ne.s32.totalorder %s224, %s238
      %p240 = scmp.eq.s32.totalorder %s27, 0
      %p241 = por %p239, %p240
      %s243 = sadd.s32 %s242, 1
      %p246 = scmp.eq.s32.totalorder %s21, 1
      %p247 = scmp.ne.s32.totalorder %s242, %s244
      %p248 = scmp.eq.s32.totalorder %s21, 0
      %p249 = por %p247, %p248
      %p250 = scmp.ne.s32.totalorder %s242, %s244
      %p251 = scmp.eq.s32.totalorder %s26, 1
      %p252 = por %p250, %p251
      %p253 = scmp.ne.s32.totalorder %s244, %s245
      %p254 = scmp.eq.s32.totalorder %s26, 0
      %p255 = por %p253, %p254
      %p256 = scmp.ne.s32.totalorder %s244, %s245
      %p257 = scmp.eq.s32.totalorder %s27, 1
      %p258 = por %p256, %p257
      %p260 = scmp.ne.s32.totalorder %s245, %s259
      %p261 = scmp.eq.s32.totalorder %s27, 0
      %p262 = por %p260, %p261
      %s264 = sadd.s32 %s263, 1
      %p267 = scmp.eq.s32.totalorder %s21, 1
      %p268 = scmp.ne.s32.totalorder %s263, %s265
      %p269 = scmp.eq.s32.totalorder %s21, 0
      %p270 = por %p268, %p269
      %p271 = scmp.ne.s32.totalorder %s263, %s265
      %p272 = scmp.eq.s32.totalorder %s26, 1
      %p273 = por %p271, %p272
      %p274 = scmp.ne.s32.totalorder %s265, %s266
      %p275 = scmp.eq.s32.totalorder %s26, 0
      %p276 = por %p274, %p275
      %p277 = scmp.ne.s32.totalorder %s265, %s266
      %p278 = scmp.eq.s32.totalorder %s27, 1
      %p279 = por %p277, %p278
      %p281 = scmp.ne.s32.totalorder %s266, %s280
      %p282 = scmp.eq.s32.totalorder %s27, 0
      %p283 = por %p281, %p282
      %s285 = sadd.s32 %s284, 1
      %p288 = scmp.eq.s32.totalorder %s21, 1
      %p289 = scmp.ne.s32.totalorder %s284, %s286
      %p290 = scmp.eq.s32.totalorder %s21, 0
      %p291 = por %p289, %p290
      %p292 = scmp.ne.s32.totalorder %s284, %s286
      %p293 = scmp.eq.s32.totalorder %s26, 1
      %p294 = por %p292, %p293
      %p295 = scmp.ne.s32.totalorder %s286, %s287
      %p296 = scmp.eq.s32.totalorder %s26, 0
      %p297 = por %p295, %p296
      %p298 = scmp.ne.s32.totalorder %s286, %s287
      %p299 = scmp.eq.s32.totalorder %s27, 1
      %p300 = por %p298, %p299
      %p302 = scmp.ne.s32.totalorder %s287, %s301
      %p303 = scmp.eq.s32.totalorder %s27, 0
      %p304 = por %p302, %p303
      %s305 = ssub.s32 %s28, %s40
      %s306 = ssub.s32 %s29, %s36
      %s307 = sor.u32 %s305, %s306
      %p308 = scmp.eq.s32.totalorder %s307, 0
      %s310 = sadd.s32 %s309, 1
      %s311 = scalar_select %p308, %s309, %s310
      %p314 = pneg %p308
      %p315 = scmp.eq.s32.totalorder %s21, 1
      %p316 = por %p314, %p315
      %p317 = scmp.ne.s32.totalorder %s309, %s312
      %p318 = scmp.eq.s32.totalorder %s21, 0
      %p319 = por %p317, %p318
      %p320 = scmp.ne.s32.totalorder %s309, %s312
      %p321 = scmp.eq.s32.totalorder %s26, 1
      %p322 = por %p320, %p321
      %p323 = scmp.ne.s32.totalorder %s312, %s313
      %p324 = scmp.eq.s32.totalorder %s26, 0
      %p325 = por %p323, %p324
      %p326 = scmp.ne.s32.totalorder %s312, %s313
      %p327 = scmp.eq.s32.totalorder %s27, 1
      %p328 = por %p326, %p327
      %p330 = scmp.ne.s32.totalorder %s313, %s329
      %p331 = scmp.eq.s32.totalorder %s27, 0
      %p332 = por %p330, %p331
      %p333 = scmp.le.s32.totalorder 1, %s21
      %p334 = scmp.lt.s32.totalorder %s21, 3
      %p335 = pnand %p333, %p334
      %p336 = pneg %p335
      // Predicated region
      $region9: #{tpu_custom_call.1} parent=5 // pred_check
        _
      $region10: #{tpu_custom_call.1} parent=5 // pred_check_branch
        %338 = sbr.rel (%p335) target = $region12
      $region11: #{tpu_custom_call.1} parent=5 // pred_region
        %s339 = ssub.s32 %s21, 1
        // Predicated region
        $region13: #{tpu_custom_call.1} parent=11 // pred_check
          %p340 = pneg %p108
        $region14: #{tpu_custom_call.1} parent=11 // pred_check_branch
          %342 = sbr.rel (%p340) target = $region16
        $region15: #{tpu_custom_call.1} parent=11 // pred_region
          _
        $region16: #{tpu_custom_call.1} parent=11 // pred_fallthru
          _
        // Predicated region
        $region17: #{tpu_custom_call.1} parent=11 // pred_check
          %p343 = pneg %p129
        $region18: #{tpu_custom_call.1} parent=11 // pred_check_branch
          %345 = sbr.rel (%p343) target = $region20
        $region19: #{tpu_custom_call.1} parent=11 // pred_region
          _
        $region20: #{tpu_custom_call.1} parent=11 // pred_fallthru
          _
        // Predicated region
        $region21: #{tpu_custom_call.1} parent=11 // pred_check
          %p346 = pneg %p150
        $region22: #{tpu_custom_call.1} parent=11 // pred_check_branch
          %348 = sbr.rel (%p346) target = $region24
        $region23: #{tpu_custom_call.1} parent=11 // pred_region
          _
        $region24: #{tpu_custom_call.1} parent=11 // pred_fallthru
          _
        // Predicated region
        $region25: #{tpu_custom_call.1} parent=11 // pred_check
          %p349 = pneg %p171
        $region26: #{tpu_custom_call.1} parent=11 // pred_check_branch
          %351 = sbr.rel (%p349) target = $region28
        $region27: #{tpu_custom_call.1} parent=11 // pred_region
          _
        $region28: #{tpu_custom_call.1} parent=11 // pred_fallthru
          _
        // Predicated region
        $region29: #{tpu_custom_call.1} parent=11 // pred_check
          %p352 = pneg %p192
        $region30: #{tpu_custom_call.1} parent=11 // pred_check_branch
          %354 = sbr.rel (%p352) target = $region32
        $region31: #{tpu_custom_call.1} parent=11 // pred_region
          _
        $region32: #{tpu_custom_call.1} parent=11 // pred_fallthru
          _
        // Predicated region
        $region33: #{tpu_custom_call.1} parent=11 // pred_check
          %p355 = pneg %p213
        $region34: #{tpu_custom_call.1} parent=11 // pred_check_branch
          %357 = sbr.rel (%p355) target = $region36
        $region35: #{tpu_custom_call.1} parent=11 // pred_region
          _
        $region36: #{tpu_custom_call.1} parent=11 // pred_fallthru
          _
        // Predicated region
        $region37: #{tpu_custom_call.1} parent=11 // pred_check
          %p358 = pneg %p234
        $region38: #{tpu_custom_call.1} parent=11 // pred_check_branch
          %360 = sbr.rel (%p358) target = $region40
        $region39: #{tpu_custom_call.1} parent=11 // pred_region
          _
        $region40: #{tpu_custom_call.1} parent=11 // pred_fallthru
          _
        // Predicated region
        $region41: #{tpu_custom_call.1} parent=11 // pred_check
          %p361 = pneg %p255
        $region42: #{tpu_custom_call.1} parent=11 // pred_check_branch
          %363 = sbr.rel (%p361) target = $region44
        $region43: #{tpu_custom_call.1} parent=11 // pred_region
          _
        $region44: #{tpu_custom_call.1} parent=11 // pred_fallthru
          _
        // Predicated region
        $region45: #{tpu_custom_call.1} parent=11 // pred_check
          %p364 = pneg %p276
        $region46: #{tpu_custom_call.1} parent=11 // pred_check_branch
          %366 = sbr.rel (%p364) target = $region48
        $region47: #{tpu_custom_call.1} parent=11 // pred_region
          _
        $region48: #{tpu_custom_call.1} parent=11 // pred_fallthru
          _
        // Predicated region
        $region49: #{tpu_custom_call.1} parent=11 // pred_check
          %p367 = pneg %p297
        $region50: #{tpu_custom_call.1} parent=11 // pred_check_branch
          %369 = sbr.rel (%p367) target = $region52
        $region51: #{tpu_custom_call.1} parent=11 // pred_region
          _
        $region52: #{tpu_custom_call.1} parent=11 // pred_fallthru
          _
      $region12: #{tpu_custom_call.1} parent=5 // pred_fallthru
        _
      %p370 = scmp.lt.s32.totalorder %s21, 2
      // Predicated region
      $region53: #{tpu_custom_call.1} parent=5 // pred_check
        %p371 = pneg %p370
      $region54: #{tpu_custom_call.1} parent=5 // pred_check_branch
        %373 = sbr.rel (%p371) target = $region56
      $region55: #{tpu_custom_call.1} parent=5 // pred_region
        // Predicated region
        $region57: #{tpu_custom_call.1} parent=55 // pred_check
          %p374 = pneg %p53
        $region58: #{tpu_custom_call.1} parent=55 // pred_check_branch
          %376 = sbr.rel (%p374) target = $region60
        $region59: #{tpu_custom_call.1} parent=55 // pred_region
          %p377 = scmp.lt.s32.totalorder %s28, 1
          %s378 = scalar_select %p377, %s28, 1
          %s379 = smul.addr %s378, 4
          %s380 = scalar_lea.vmem %s0, %s379
        $region60: #{tpu_custom_call.1} parent=55 // pred_fallthru
          _
        // Predicated region
        $region61: #{tpu_custom_call.1} parent=55 // pred_check
          %p381 = pneg %p81
        $region62: #{tpu_custom_call.1} parent=55 // pred_check_branch
          %383 = sbr.rel (%p381) target = $region64
        $region63: #{tpu_custom_call.1} parent=55 // pred_region
          %p384 = scmp.lt.s32.totalorder %s28, 1
          %s385 = scalar_select %p384, %s28, 1
          %p386 = scmp.lt.s32.totalorder %s29, 0
          %s387 = scalar_select %p386, %s29, 0
          %s388 = smul.addr %s385, 2
          %s389 = sadd.s32 %s387, %s388
          %s390 = smul.addr %s389, 8
          %s391 = scalar_lea.vmem %s1, %s390
        $region64: #{tpu_custom_call.1} parent=55 // pred_fallthru
          _
      $region56: #{tpu_custom_call.1} parent=5 // pred_fallthru
        _
      %p392 = scmp.le.s32.totalorder 1, %s21
      %p393 = scmp.lt.s32.totalorder %s21, 3
      %p394 = pnand %p392, %p393
      %p395 = pneg %p394
      // Predicated region
      $region65: #{tpu_custom_call.1} parent=5 // pred_check
        _
      $region66: #{tpu_custom_call.1} parent=5 // pred_check_branch
        %397 = sbr.rel (%p394) target = $region68
      $region67: #{tpu_custom_call.1} parent=5 // pred_region
        %s398 = ssub.s32 %s21, 1
        %p399 = scmp.lt.s32.totalorder %s30, 1
        %s400 = scalar_select %p399, %s30, 1
        %s401 = smul.addr %s400, 4
        %s402 = scalar_lea.vmem %s0, %s401
        %p403 = pneg %p59
        %p404 = pneg %p56
        %p405 = scmp.lt.s32.totalorder %s30, 1
        %s406 = scalar_select %p405, %s30, 1
        %p407 = scmp.lt.s32.totalorder %s31, 0
        %s408 = scalar_select %p407, %s31, 0
        %s409 = smul.addr %s406, 2
        %s410 = sadd.s32 %s408, %s409
        %s411 = smul.addr %s410, 8
        %s412 = scalar_lea.vmem %s1, %s411
        %p413 = pneg %p87
        %p414 = pneg %p84
        %p415 = pneg %p108
        %p416 = pneg %p105
        %p417 = pneg %p129
        %p418 = pneg %p126
        %p419 = pneg %p150
        %p420 = pneg %p147
        %p421 = pneg %p171
        %p422 = pneg %p168
        %p423 = pneg %p192
        %p424 = pneg %p189
        %p425 = pneg %p213
        %p426 = pneg %p210
        %p427 = pneg %p234
        %p428 = pneg %p231
        %p429 = pneg %p255
        %p430 = pneg %p252
        %p431 = pneg %p276
        %p432 = pneg %p273
        %p433 = pneg %p297
        %p434 = pneg %p294
        %p435 = pneg %p325
        %p436 = pneg %p322
        %s437 = sand.u32 %s312, 1
        %s438 = scalar_lea.sflag [#allocation3], %s437
        %s439 = sand.u32 %s312, 1
        %s440 = smul.addr %s439, 2
        %s441 = scalar_lea.vmem [#allocation2], %s440
        %p442 = scmp.lt.s32.totalorder %s30, 1
        %s443 = scalar_select %p442, %s30, 1
        %s444 = smul.addr %s443, 4
        %s445 = scalar_lea.vmem %s0, %s444
        %p446 = scmp.lt.s32.totalorder %s30, 1
        %s447 = scalar_select %p446, %s30, 1
        %p448 = scmp.lt.s32.totalorder %s31, 0
        %s449 = scalar_select %p448, %s31, 0
        %s450 = smul.addr %s447, 2
        %s451 = sadd.s32 %s449, %s450
        %s452 = smul.addr %s451, 8
        %s453 = scalar_lea.vmem %s1, %s452
        %v454 = vld [vmem:[%s2] sm:$0xff]
        %v455 = vld [vmem:[%s2 + $0x8] sm:$0xff]
        %v456 = vld [vmem:[%s453] sm:$0xff]
        %v457 = vld [vmem:[%s453 + $0x8] sm:$0xff]
        %v458 = vld [vmem:[%s3] sm:$0xff]
        %v459 = vld [vmem:[%s3 + $0x8] sm:$0xff]
        %461 = vset.pattern.permute.xlu0 0
        %462 = vperm.xlu0 %461, %v458
        %v463 = vpop.permute.xlu0 %462
        %466 = vset.pattern.permute.xlu0 0
        %467 = vperm.xlu0 %466, %v459
        %v468 = vpop.permute.xlu0 %467
        %vm470 = vcmask 130048
        %v472 = vsel %vm470, %v454, 0
        %v475 = vsel %vm470, %v455, 0
        %477 = vmatprep.subr.mxu0 0.0
        %478 = vmatpush1.msra.mxu0 %v456
        %479 = vmatprep.subr.mxu0 0.0
        %480 = vmatpush1.msra.mxu0 %v457
        %481 = vmatprep.subr.mxu0 0.0
        %482 = vmatpush1.msra.mxu0 0.0
        %483 = vmatprep.subr.mxu0 0.0
        %484 = vmatpush1.msra.mxu0 0.0
        %485 = vmatprep.subr.mxu0 0.0
        %486 = vmatpush1.msra.mxu0 0.0
        %487 = vmatprep.subr.mxu0 0.0
        %488 = vmatpush1.msra.mxu0 0.0
        %489 = vmatprep.subr.mxu0 0.0
        %490 = vmatpush1.msra.mxu0 0.0
        %491 = vmatprep.subr.mxu0 0.0
        %492 = vmatpush1.msra.mxu0 0.0
        %493 = vmatprep.subr.mxu0 0.0
        %494 = vmatpush1.msra.mxu0 0.0
        %495 = vmatprep.subr.mxu0 0.0
        %496 = vmatpush1.msra.mxu0 0.0
        %497 = vmatprep.subr.mxu0 0.0
        %498 = vmatpush1.msra.mxu0 0.0
        %499 = vmatprep.subr.mxu0 0.0
        %500 = vmatpush1.msra.mxu0 0.0
        %501 = vmatprep.subr.mxu0 0.0
        %502 = vmatpush1.msra.mxu0 0.0
        %503 = vmatprep.subr.mxu0 0.0
        %504 = vmatpush1.msra.mxu0 0.0
        %505 = vmatprep.subr.mxu0 0.0
        %506 = vmatpush1.msra.mxu0 0.0
        %507 = vmatprep.subr.mxu0 0.0
        %508 = vmatpush1.msra.mxu0 0.0
        %509 = vmatprep.subr.mxu0 0.0
        %510 = vmatpush1.msra.mxu0 0.0
        %511 = vmatprep.subr.mxu0 0.0
        %512 = vmatpush1.msra.mxu0 0.0
        %513 = vmatprep.subr.mxu0 0.0
        %514 = vmatpush1.msra.mxu0 0.0
        %515 = vmatprep.subr.mxu0 0.0
        %516 = vmatpush1.msra.mxu0 0.0
        %517 = vmatprep.subr.mxu0 0.0
        %518 = vmatpush1.msra.mxu0 0.0
        %519 = vmatprep.subr.mxu0 0.0
        %520 = vmatpush1.msra.mxu0 0.0
        %521 = vmatprep.subr.mxu0 0.0
        %522 = vmatpush1.msra.mxu0 0.0
        %523 = vmatprep.subr.mxu0 0.0
        %524 = vmatpush1.msra.mxu0 0.0
        %525 = vmatprep.subr.mxu0 0.0
        %526 = vmatpush1.msra.mxu0 0.0
        %527 = vmatprep.subr.mxu0 0.0
        %528 = vmatpush1.msra.mxu0 0.0
        %529 = vmatprep.subr.mxu0 0.0
        %530 = vmatpush1.msra.mxu0 0.0
        %531 = vmatprep.subr.mxu0 0.0
        %532 = vmatpush1.msra.mxu0 0.0
        %533 = vmatprep.subr.mxu0 0.0
        %534 = vmatpush1.msra.mxu0 0.0
        %535 = vmatprep.subr.mxu0 0.0
        %536 = vmatpush1.msra.mxu0 0.0
        %537 = vmatprep.subr.mxu0 0.0
        %538 = vmatpush1.msra.mxu0 0.0
        %539 = vmatprep.subr.mxu0 0.0
        %540 = vmatpush1.msra.mxu0 0.0
        %541 = vmatprep.mubr.f32.mxu0 0.0
        %542 = vmatmul.mubr.f32.gmra.mrb[0].mxu0 %v472
        %v543 = vpop.f32.mrb[0].mxu0
        %v544 = vadd.f32 %v463, %v543
        %v545 = vpop.f32.mrb[0].mxu0
        %546 = vmatprep.mubr.f32.mxu0 0.0
        %547 = vmatmul.mubr.f32.gmra.mrb[0].mxu0 %v475
        %v548 = vpop.f32.mrb[0].mxu0
        %v549 = vadd.f32 %v468, %v548
        %v550 = vpop.f32.mrb[0].mxu0
        %551 = vdwg.mxu0
        %v552 = vld [vmem:[%s4] sm:$0xff]
        %v553 = vld [vmem:[%s4 + $0x8] sm:$0xff]
        %v554 = vld [vmem:[%s4 + $0x10] sm:$0xff]
        %v555 = vld [vmem:[%s4 + $0x18] sm:$0xff]
        %v556 = vld [vmem:[%s4 + $0x20] sm:$0xff]
        %v557 = vld [vmem:[%s4 + $0x28] sm:$0xff]
        %v558 = vld [vmem:[%s4 + $0x30] sm:$0xff]
        %v559 = vld [vmem:[%s4 + $0x38] sm:$0xff]
        %v560 = vld [vmem:[%s4 + $0x40] sm:$0xff]
        %v561 = vld [vmem:[%s4 + $0x48] sm:$0xff]
        %v562 = vld [vmem:[%s4 + $0x50] sm:$0xff]
        %v563 = vld [vmem:[%s4 + $0x58] sm:$0xff]
        %v564 = vld [vmem:[%s4 + $0x60] sm:$0xff]
        %v565 = vld [vmem:[%s4 + $0x68] sm:$0xff]
        %v566 = vld [vmem:[%s4 + $0x70] sm:$0xff]
        %v567 = vld [vmem:[%s4 + $0x78] sm:$0xff]
        %v568 = vld [vmem:[%s4 + $0x80] sm:$0xff]
        %v569 = vld [vmem:[%s4 + $0x88] sm:$0xff]
        %v570 = vld [vmem:[%s5] sm:$0xff]
        %v571 = vld [vmem:[%s5 + $0x8] sm:$0xff]
        %v572 = vld [vmem:[%s5 + $0x10] sm:$0xff]
        %v573 = vld [vmem:[%s5 + $0x18] sm:$0xff]
        %v574 = vld [vmem:[%s5 + $0x20] sm:$0xff]
        %v575 = vld [vmem:[%s5 + $0x28] sm:$0xff]
        %v576 = vld [vmem:[%s5 + $0x30] sm:$0xff]
        %v577 = vld [vmem:[%s5 + $0x38] sm:$0xff]
        %v578 = vld [vmem:[%s5 + $0x40] sm:$0xff]
        %v579 = vld [vmem:[%s5 + $0x48] sm:$0xff]
        %v580 = vld [vmem:[%s5 + $0x50] sm:$0xff]
        %v581 = vld [vmem:[%s5 + $0x58] sm:$0xff]
        %v582 = vld [vmem:[%s5 + $0x60] sm:$0xff]
        %v583 = vld [vmem:[%s5 + $0x68] sm:$0xff]
        %v584 = vld [vmem:[%s5 + $0x70] sm:$0xff]
        %v585 = vld [vmem:[%s5 + $0x78] sm:$0xff]
        %v586 = vld [vmem:[%s5 + $0x80] sm:$0xff]
        %v587 = vld [vmem:[%s5 + $0x88] sm:$0xff]
        %589 = vset.pattern.permute.xlu0 0
        %590 = vperm.xlu0 %589, %v570
        %v591 = vpop.permute.xlu0 %590
        %594 = vset.pattern.permute.xlu0 0
        %595 = vperm.xlu0 %594, %v571
        %v596 = vpop.permute.xlu0 %595
        %599 = vset.pattern.permute.xlu0 0
        %600 = vperm.xlu0 %599, %v572
        %v601 = vpop.permute.xlu0 %600
        %604 = vset.pattern.permute.xlu0 0
        %605 = vperm.xlu0 %604, %v573
        %v606 = vpop.permute.xlu0 %605
        %609 = vset.pattern.permute.xlu0 0
        %610 = vperm.xlu0 %609, %v574
        %v611 = vpop.permute.xlu0 %610
        %614 = vset.pattern.permute.xlu0 0
        %615 = vperm.xlu0 %614, %v575
        %v616 = vpop.permute.xlu0 %615
        %619 = vset.pattern.permute.xlu0 0
        %620 = vperm.xlu0 %619, %v576
        %v621 = vpop.permute.xlu0 %620
        %624 = vset.pattern.permute.xlu0 0
        %625 = vperm.xlu0 %624, %v577
        %v626 = vpop.permute.xlu0 %625
        %629 = vset.pattern.permute.xlu0 0
        %630 = vperm.xlu0 %629, %v578
        %v631 = vpop.permute.xlu0 %630
        %634 = vset.pattern.permute.xlu0 0
        %635 = vperm.xlu0 %634, %v579
        %v636 = vpop.permute.xlu0 %635
        %639 = vset.pattern.permute.xlu0 0
        %640 = vperm.xlu0 %639, %v580
        %v641 = vpop.permute.xlu0 %640
        %644 = vset.pattern.permute.xlu0 0
        %645 = vperm.xlu0 %644, %v581
        %v646 = vpop.permute.xlu0 %645
        %649 = vset.pattern.permute.xlu0 0
        %650 = vperm.xlu0 %649, %v582
        %v651 = vpop.permute.xlu0 %650
        %654 = vset.pattern.permute.xlu0 0
        %655 = vperm.xlu0 %654, %v583
        %v656 = vpop.permute.xlu0 %655
        %659 = vset.pattern.permute.xlu0 0
        %660 = vperm.xlu0 %659, %v584
        %v661 = vpop.permute.xlu0 %660
        %664 = vset.pattern.permute.xlu0 0
        %665 = vperm.xlu0 %664, %v585
        %v666 = vpop.permute.xlu0 %665
        %669 = vset.pattern.permute.xlu0 0
        %670 = vperm.xlu0 %669, %v586
        %v671 = vpop.permute.xlu0 %670
        %674 = vset.pattern.permute.xlu0 0
        %675 = vperm.xlu0 %674, %v587
        %v676 = vpop.permute.xlu0 %675
        %v679 = vsel %vm470, %v552, 0
        %v682 = vsel %vm470, %v553, 0
        %v685 = vsel %vm470, %v554, 0
        %v688 = vsel %vm470, %v555, 0
        %v691 = vsel %vm470, %v556, 0
        %v694 = vsel %vm470, %v557, 0
        %v697 = vsel %vm470, %v558, 0
        %v700 = vsel %vm470, %v559, 0
        %v703 = vsel %vm470, %v560, 0
        %v706 = vsel %vm470, %v561, 0
        %v709 = vsel %vm470, %v562, 0
        %v712 = vsel %vm470, %v563, 0
        %v715 = vsel %vm470, %v564, 0
        %v718 = vsel %vm470, %v565, 0
        %v721 = vsel %vm470, %v566, 0
        %v724 = vsel %vm470, %v567, 0
        %v727 = vsel %vm470, %v568, 0
        %v730 = vsel %vm470, %v569, 0
        %732 = vmatprep.subr.mxu0 0.0
        %733 = vmatpush1.msra.mxu0 %v544
        %734 = vmatprep.subr.mxu0 0.0
        %735 = vmatpush1.msra.mxu0 %v549
        %736 = vmatprep.subr.mxu0 0.0
        %737 = vmatpush1.msra.mxu0 0.0
        %738 = vmatprep.subr.mxu0 0.0
        %739 = vmatpush1.msra.mxu0 0.0
        %740 = vmatprep.subr.mxu0 0.0
        %741 = vmatpush1.msra.mxu0 0.0
        %742 = vmatprep.subr.mxu0 0.0
        %743 = vmatpush1.msra.mxu0 0.0
        %744 = vmatprep.subr.mxu0 0.0
        %745 = vmatpush1.msra.mxu0 0.0
        %746 = vmatprep.subr.mxu0 0.0
        %747 = vmatpush1.msra.mxu0 0.0
        %748 = vmatprep.subr.mxu0 0.0
        %749 = vmatpush1.msra.mxu0 0.0
        %750 = vmatprep.subr.mxu0 0.0
        %751 = vmatpush1.msra.mxu0 0.0
        %752 = vmatprep.subr.mxu0 0.0
        %753 = vmatpush1.msra.mxu0 0.0
        %754 = vmatprep.subr.mxu0 0.0
        %755 = vmatpush1.msra.mxu0 0.0
        %756 = vmatprep.subr.mxu0 0.0
        %757 = vmatpush1.msra.mxu0 0.0
        %758 = vmatprep.subr.mxu0 0.0
        %759 = vmatpush1.msra.mxu0 0.0
        %760 = vmatprep.subr.mxu0 0.0
        %761 = vmatpush1.msra.mxu0 0.0
        %762 = vmatprep.subr.mxu0 0.0
        %763 = vmatpush1.msra.mxu0 0.0
        %764 = vmatprep.subr.mxu0 0.0
        %765 = vmatpush1.msra.mxu0 0.0
        %766 = vmatprep.subr.mxu0 0.0
        %767 = vmatpush1.msra.mxu0 0.0
        %768 = vmatprep.subr.mxu0 0.0
        %769 = vmatpush1.msra.mxu0 0.0
        %770 = vmatprep.subr.mxu0 0.0
        %771 = vmatpush1.msra.mxu0 0.0
        %772 = vmatprep.subr.mxu0 0.0
        %773 = vmatpush1.msra.mxu0 0.0
        %774 = vmatprep.subr.mxu0 0.0
        %775 = vmatpush1.msra.mxu0 0.0
        %776 = vmatprep.subr.mxu0 0.0
        %777 = vmatpush1.msra.mxu0 0.0
        %778 = vmatprep.subr.mxu0 0.0
        %779 = vmatpush1.msra.mxu0 0.0
        %780 = vmatprep.subr.mxu0 0.0
        %781 = vmatpush1.msra.mxu0 0.0
        %782 = vmatprep.subr.mxu0 0.0
        %783 = vmatpush1.msra.mxu0 0.0
        %784 = vmatprep.subr.mxu0 0.0
        %785 = vmatpush1.msra.mxu0 0.0
        %786 = vmatprep.subr.mxu0 0.0
        %787 = vmatpush1.msra.mxu0 0.0
        %788 = vmatprep.subr.mxu0 0.0
        %789 = vmatpush1.msra.mxu0 0.0
        %790 = vmatprep.subr.mxu0 0.0
        %791 = vmatpush1.msra.mxu0 0.0
        %792 = vmatprep.subr.mxu0 0.0
        %793 = vmatpush1.msra.mxu0 0.0
        %794 = vmatprep.subr.mxu0 0.0
        %795 = vmatpush1.msra.mxu0 0.0
        %796 = vmatprep.mubr.f32.mxu0 0.0
        %797 = vmatmul.mubr.f32.gmra.mrb[0].mxu0 %v679
        %v798 = vpop.f32.mrb[0].mxu0
        %v799 = vadd.f32 %v591, %v798
        %v800 = vpop.f32.mrb[0].mxu0
        %801 = vmatprep.mubr.f32.mxu0 0.0
        %802 = vmatmul.mubr.f32.gmra.mrb[0].mxu0 %v682
        %v803 = vpop.f32.mrb[0].mxu0
        %v804 = vadd.f32 %v596, %v803
        %v805 = vpop.f32.mrb[0].mxu0
        %806 = vmatprep.mubr.f32.mxu0 0.0
        %807 = vmatmul.mubr.f32.gmra.mrb[0].mxu0 %v685
        %v808 = vpop.f32.mrb[0].mxu0
        %v809 = vadd.f32 %v601, %v808
        %v810 = vpop.f32.mrb[0].mxu0
        %811 = vmatprep.mubr.f32.mxu0 0.0
        %812 = vmatmul.mubr.f32.gmra.mrb[0].mxu0 %v688
        %v813 = vpop.f32.mrb[0].mxu0
        %v814 = vadd.f32 %v606, %v813
        %v815 = vpop.f32.mrb[0].mxu0
        %816 = vmatprep.mubr.f32.mxu0 0.0
        %817 = vmatmul.mubr.f32.gmra.mrb[0].mxu0 %v691
        %v818 = vpop.f32.mrb[0].mxu0
        %v819 = vadd.f32 %v611, %v818
        %v820 = vpop.f32.mrb[0].mxu0
        %821 = vmatprep.mubr.f32.mxu0 0.0
        %822 = vmatmul.mubr.f32.gmra.mrb[0].mxu0 %v694
        %v823 = vpop.f32.mrb[0].mxu0
        %v824 = vadd.f32 %v616, %v823
        %v825 = vpop.f32.mrb[0].mxu0
        %826 = vmatprep.mubr.f32.mxu0 0.0
        %827 = vmatmul.mubr.f32.gmra.mrb[0].mxu0 %v697
        %v828 = vpop.f32.mrb[0].mxu0
        %v829 = vadd.f32 %v621, %v828
        %v830 = vpop.f32.mrb[0].mxu0
        %831 = vmatprep.mubr.f32.mxu0 0.0
        %832 = vmatmul.mubr.f32.gmra.mrb[0].mxu0 %v700
        %v833 = vpop.f32.mrb[0].mxu0
        %v834 = vadd.f32 %v626, %v833
        %v835 = vpop.f32.mrb[0].mxu0
        %836 = vmatprep.mubr.f32.mxu0 0.0
        %837 = vmatmul.mubr.f32.gmra.mrb[0].mxu0 %v703
        %v838 = vpop.f32.mrb[0].mxu0
        %v839 = vadd.f32 %v631, %v838
        %v840 = vpop.f32.mrb[0].mxu0
        %841 = vmatprep.mubr.f32.mxu0 0.0
        %842 = vmatmul.mubr.f32.gmra.mrb[0].mxu0 %v706
        %v843 = vpop.f32.mrb[0].mxu0
        %v844 = vadd.f32 %v636, %v843
        %v845 = vpop.f32.mrb[0].mxu0
        %846 = vmatprep.mubr.f32.mxu0 0.0
        %847 = vmatmul.mubr.f32.gmra.mrb[0].mxu0 %v709
        %v848 = vpop.f32.mrb[0].mxu0
        %v849 = vadd.f32 %v641, %v848
        %v850 = vpop.f32.mrb[0].mxu0
        %851 = vmatprep.mubr.f32.mxu0 0.0
        %852 = vmatmul.mubr.f32.gmra.mrb[0].mxu0 %v712
        %v853 = vpop.f32.mrb[0].mxu0
        %v854 = vadd.f32 %v646, %v853
        %v855 = vpop.f32.mrb[0].mxu0
        %856 = vmatprep.mubr.f32.mxu0 0.0
        %857 = vmatmul.mubr.f32.gmra.mrb[0].mxu0 %v715
        %v858 = vpop.f32.mrb[0].mxu0
        %v859 = vadd.f32 %v651, %v858
        %v860 = vpop.f32.mrb[0].mxu0
        %861 = vmatprep.mubr.f32.mxu0 0.0
        %862 = vmatmul.mubr.f32.gmra.mrb[0].mxu0 %v718
        %v863 = vpop.f32.mrb[0].mxu0
        %v864 = vadd.f32 %v656, %v863
        %v865 = vpop.f32.mrb[0].mxu0
        %866 = vmatprep.mubr.f32.mxu0 0.0
        %867 = vmatmul.mubr.f32.gmra.mrb[0].mxu0 %v721
        %v868 = vpop.f32.mrb[0].mxu0
        %v869 = vadd.f32 %v661, %v868
        %v870 = vpop.f32.mrb[0].mxu0
        %871 = vmatprep.mubr.f32.mxu0 0.0
        %872 = vmatmul.mubr.f32.gmra.mrb[0].mxu0 %v724
        %v873 = vpop.f32.mrb[0].mxu0
        %v874 = vadd.f32 %v666, %v873
        %v875 = vpop.f32.mrb[0].mxu0
        %876 = vmatprep.mubr.f32.mxu0 0.0
        %877 = vmatmul.mubr.f32.gmra.mrb[0].mxu0 %v727
        %v878 = vpop.f32.mrb[0].mxu0
        %v879 = vadd.f32 %v671, %v878
        %v880 = vpop.f32.mrb[0].mxu0
        %881 = vmatprep.mubr.f32.mxu0 0.0
        %882 = vmatmul.mubr.f32.gmra.mrb[0].mxu0 %v730
        %v883 = vpop.f32.mrb[0].mxu0
        %v884 = vadd.f32 %v676, %v883
        %v885 = vpop.f32.mrb[0].mxu0
        %886 = vdwg.mxu0
        %v887 = vld [vmem:[%s445] sm:$0xf]
        %vm888 = vcmask 3072
        %v889 = vsel %vm888, %v887, 0.0
        %v890 = vrot.slane %v889, 4
        %v891 = vadd.f32 %v889, %v890
        %v892 = vrot.slane %v891, 2
        %v893 = vadd.f32 %v891, %v892
        %v894 = vrot.slane %v893, 1
        %v895 = vadd.f32 %v893, %v894
        %v896 = vrcp.pop 4.0
        %v897 = vmul.f32 %v895, %v896
        %v898 = vsub.f32 %v887, %v897
        %v899 = vmul.f32 %v898, %v898
        %v900 = vsel %vm888, %v899, 0.0
        %v901 = vrot.slane %v900, 4
        %v902 = vadd.f32 %v900, %v901
        %v903 = vrot.slane %v902, 2
        %v904 = vadd.f32 %v902, %v903
        %v905 = vrot.slane %v904, 1
        %v906 = vadd.f32 %v904, %v905
        %v907 = vmul.f32 %v906, %v896
        %v908 = vadd.f32 %v907, 1e-05
        %v909 = vrsqrt.pop %v908
        %v910 = vmul.f32 %v898, %v909
        %912 = vset.pattern.permute.xlu0 0
        %913 = vperm.xlu0 %912, %v910
        %v914 = vpop.permute.xlu0 %913
        %v916 = vmul.f32 %v799, %v914
        %v917 = vadd.f32 %v916, %v804
        %v918 = vld [vmem:[%s6] sm:$0xff]
        %v919 = vld [vmem:[%s6 + $0x8] sm:$0xff]
        %v920 = vld [vmem:[%s6 + $0x10] sm:$0xff]
        %v921 = vld [vmem:[%s6 + $0x18] sm:$0xff]
        %v922 = vld [vmem:[%s7] sm:$0xff]
        %v923 = vld [vmem:[%s7 + $0x8] sm:$0xff]
        %v924 = vld [vmem:[%s7 + $0x10] sm:$0xff]
        %v925 = vld [vmem:[%s7 + $0x18] sm:$0xff]
        %927 = vset.pattern.permute.xlu0 0
        %928 = vperm.xlu0 %927, %v922
        %v929 = vpop.permute.xlu0 %928
        %932 = vset.pattern.permute.xlu0 0
        %933 = vperm.xlu0 %932, %v923
        %v934 = vpop.permute.xlu0 %933
        %937 = vset.pattern.permute.xlu0 0
        %938 = vperm.xlu0 %937, %v924
        %v939 = vpop.permute.xlu0 %938
        %942 = vset.pattern.permute.xlu0 0
        %943 = vperm.xlu0 %942, %v925
        %v944 = vpop.permute.xlu0 %943
        %vm946 = vcmask 31744
        %v948 = vsel %vm946, %v918, 0
        %v951 = vsel %vm946, %v919, 0
        %v954 = vsel %vm946, %v920, 0
        %v957 = vsel %vm946, %v921, 0
        %vm959 = vcmask 1043456
        %v961 = vsel %vm959, %v917, 0
        %963 = vmatprep.subr.mxu0 0.0
        %964 = vmatpush1.msra.mxu0 %v961
        %965 = vmatprep.subr.mxu0 0.0
        %966 = vmatpush1.msra.mxu0 0.0
        %967 = vmatprep.subr.mxu0 0.0
        %968 = vmatpush1.msra.mxu0 0.0
        %969 = vmatprep.subr.mxu0 0.0
        %970 = vmatpush1.msra.mxu0 0.0
        %971 = vmatprep.subr.mxu0 0.0
        %972 = vmatpush1.msra.mxu0 0.0
        %973 = vmatprep.subr.mxu0 0.0
        %974 = vmatpush1.msra.mxu0 0.0
        %975 = vmatprep.subr.mxu0 0.0
        %976 = vmatpush1.msra.mxu0 0.0
        %977 = vmatprep.subr.mxu0 0.0
        %978 = vmatpush1.msra.mxu0 0.0
        %979 = vmatprep.subr.mxu0 0.0
        %980 = vmatpush1.msra.mxu0 0.0
        %981 = vmatprep.subr.mxu0 0.0
        %982 = vmatpush1.msra.mxu0 0.0
        %983 = vmatprep.subr.mxu0 0.0
        %984 = vmatpush1.msra.mxu0 0.0
        %985 = vmatprep.subr.mxu0 0.0
        %986 = vmatpush1.msra.mxu0 0.0
        %987 = vmatprep.subr.mxu0 0.0
        %988 = vmatpush1.msra.mxu0 0.0
        %989 = vmatprep.subr.mxu0 0.0
        %990 = vmatpush1.msra.mxu0 0.0
        %991 = vmatprep.subr.mxu0 0.0
        %992 = vmatpush1.msra.mxu0 0.0
        %993 = vmatprep.subr.mxu0 0.0
        %994 = vmatpush1.msra.mxu0 0.0
        %995 = vmatprep.subr.mxu0 0.0
        %996 = vmatpush1.msra.mxu0 0.0
        %997 = vmatprep.subr.mxu0 0.0
        %998 = vmatpush1.msra.mxu0 0.0
        %999 = vmatprep.subr.mxu0 0.0
        %1000 = vmatpush1.msra.mxu0 0.0
        %1001 = vmatprep.subr.mxu0 0.0
        %1002 = vmatpush1.msra.mxu0 0.0
        %1003 = vmatprep.subr.mxu0 0.0
        %1004 = vmatpush1.msra.mxu0 0.0
        %1005 = vmatprep.subr.mxu0 0.0
        %1006 = vmatpush1.msra.mxu0 0.0
        %1007 = vmatprep.subr.mxu0 0.0
        %1008 = vmatpush1.msra.mxu0 0.0
        %1009 = vmatprep.subr.mxu0 0.0
        %1010 = vmatpush1.msra.mxu0 0.0
        %1011 = vmatprep.subr.mxu0 0.0
        %1012 = vmatpush1.msra.mxu0 0.0
        %1013 = vmatprep.subr.mxu0 0.0
        %1014 = vmatpush1.msra.mxu0 0.0
        %1015 = vmatprep.subr.mxu0 0.0
        %1016 = vmatpush1.msra.mxu0 0.0
        %1017 = vmatprep.subr.mxu0 0.0
        %1018 = vmatpush1.msra.mxu0 0.0
        %1019 = vmatprep.subr.mxu0 0.0
        %1020 = vmatpush1.msra.mxu0 0.0
        %1021 = vmatprep.subr.mxu0 0.0
        %1022 = vmatpush1.msra.mxu0 0.0
        %1023 = vmatprep.subr.mxu0 0.0
        %1024 = vmatpush1.msra.mxu0 0.0
        %1025 = vmatprep.subr.mxu0 0.0
        %1026 = vmatpush1.msra.mxu0 0.0
        %1027 = vmatprep.mubr.f32.mxu0 0.0
        %1028 = vmatmul.mubr.f32.gmra.mrb[0].mxu0 %v948
        %v1029 = vpop.f32.mrb[0].mxu0
        %v1030 = vadd.f32 %v929, %v1029
        %v1031 = vpop.f32.mrb[0].mxu0
        %1032 = vmatprep.mubr.f32.mxu0 0.0
        %1033 = vmatmul.mubr.f32.gmra.mrb[0].mxu0 %v951
        %v1034 = vpop.f32.mrb[0].mxu0
        %v1035 = vadd.f32 %v934, %v1034
        %v1036 = vpop.f32.mrb[0].mxu0
        %1037 = vmatprep.mubr.f32.mxu0 0.0
        %1038 = vmatmul.mubr.f32.gmra.mrb[0].mxu0 %v954
        %v1039 = vpop.f32.mrb[0].mxu0
        %v1040 = vadd.f32 %v939, %v1039
        %v1041 = vpop.f32.mrb[0].mxu0
        %1042 = vmatprep.mubr.f32.mxu0 0.0
        %1043 = vmatmul.mubr.f32.gmra.mrb[0].mxu0 %v957
        %v1044 = vpop.f32.mrb[0].mxu0
        %v1045 = vadd.f32 %v944, %v1044
        %v1046 = vpop.f32.mrb[0].mxu0
        %1047 = vdwg.mxu0
        %v1048 = vmax.f32 %v1030, 0.0
        %v1049 = vmax.f32 %v1035, 0.0
        %v1050 = vmax.f32 %v1040, 0.0
        %v1051 = vmax.f32 %v1045, 0.0
        %vm1052 = vcmask 64512
        %v1053 = vsel %vm1052, %v1048, 0.0
        %v1054 = vsel %vm1052, %v1049, 0.0
        %v1055 = vadd.f32 %v1053, %v1054
        %v1056 = vsel %vm1052, %v1050, 0.0
        %v1057 = vadd.f32 %v1055, %v1056
        %v1058 = vsel %vm1052, %v1051, 0.0
        %v1059 = vadd.f32 %v1057, %v1058
        %v1060 = vrot.slane %v1059, 4
        %v1061 = vadd.f32 %v1059, %v1060
        %v1062 = vrot.slane %v1061, 2
        %v1063 = vadd.f32 %v1061, %v1062
        %v1064 = vrot.slane %v1063, 1
        %v1065 = vadd.f32 %v1063, %v1064
        %v1066 = vrcp.pop 32.0
        %v1067 = vmul.f32 %v1065, %v1066
        %v1068 = vsub.f32 %v1048, %v1067
        %v1069 = vsub.f32 %v1049, %v1067
        %v1070 = vsub.f32 %v1050, %v1067
        %v1071 = vsub.f32 %v1051, %v1067
        %v1072 = vmul.f32 %v1068, %v1068
        %v1073 = vmul.f32 %v1069, %v1069
        %v1074 = vmul.f32 %v1070, %v1070
        %v1075 = vmul.f32 %v1071, %v1071
        %v1076 = vsel %vm1052, %v1072, 0.0
        %v1077 = vsel %vm1052, %v1073, 0.0
        %v1078 = vadd.f32 %v1076, %v1077
        %v1079 = vsel %vm1052, %v1074, 0.0
        %v1080 = vadd.f32 %v1078, %v1079
        %v1081 = vsel %vm1052, %v1075, 0.0
        %v1082 = vadd.f32 %v1080, %v1081
        %v1083 = vrot.slane %v1082, 4
        %v1084 = vadd.f32 %v1082, %v1083
        %v1085 = vrot.slane %v1084, 2
        %v1086 = vadd.f32 %v1084, %v1085
        %v1087 = vrot.slane %v1086, 1
        %v1088 = vadd.f32 %v1086, %v1087
        %v1089 = vmul.f32 %v1088, %v1066
        %v1090 = vadd.f32 %v1089, 1e-05
        %v1091 = vrsqrt.pop %v1090
        %v1092 = vmul.f32 %v1068, %v1091
        %v1093 = vmul.f32 %v1069, %v1091
        %v1094 = vmul.f32 %v1070, %v1091
        %v1095 = vmul.f32 %v1071, %v1091
        %v1096 = vmul.f32 %v809, %v1092
        %v1097 = vmul.f32 %v814, %v1093
        %v1098 = vmul.f32 %v819, %v1094
        %v1099 = vmul.f32 %v824, %v1095
        %v1100 = vadd.f32 %v1096, %v829
        %v1101 = vadd.f32 %v1097, %v834
        %v1102 = vadd.f32 %v1098, %v839
        %v1103 = vadd.f32 %v1099, %v844
        %v1104 = vld [vmem:[%s8] sm:$0xff]
        %v1105 = vld [vmem:[%s8 + $0x8] sm:$0xff]
        %v1106 = vld [vmem:[%s8 + $0x10] sm:$0xff]
        %v1107 = vld [vmem:[%s8 + $0x18] sm:$0xff]
        %v1108 = vld [vmem:[%s9] sm:$0xff]
        %v1109 = vld [vmem:[%s9 + $0x8] sm:$0xff]
        %v1110 = vld [vmem:[%s9 + $0x10] sm:$0xff]
        %v1111 = vld [vmem:[%s9 + $0x18] sm:$0xff]
        %1113 = vset.pattern.permute.xlu0 0
        %1114 = vperm.xlu0 %1113, %v1108
        %v1115 = vpop.permute.xlu0 %1114
        %1118 = vset.pattern.permute.xlu0 0
        %1119 = vperm.xlu0 %1118, %v1109
        %v1120 = vpop.permute.xlu0 %1119
        %1123 = vset.pattern.permute.xlu0 0
        %1124 = vperm.xlu0 %1123, %v1110
        %v1125 = vpop.permute.xlu0 %1124
        %1128 = vset.pattern.permute.xlu0 0
        %1129 = vperm.xlu0 %1128, %v1111
        %v1130 = vpop.permute.xlu0 %1129
        %vm1132 = vcmask 261120
        %v1134 = vsel %vm1132, %v1104, 0
        %v1137 = vsel %vm1132, %v1105, 0
        %v1140 = vsel %vm1132, %v1106, 0
        %v1143 = vsel %vm1132, %v1107, 0
        %1145 = vmatprep.subr.mxu0 0.0
        %1146 = vmatpush1.msra.mxu0 %v1100
        %1147 = vmatprep.subr.mxu0 0.0
        %1148 = vmatpush1.msra.mxu0 %v1101
        %1149 = vmatprep.subr.mxu0 0.0
        %1150 = vmatpush1.msra.mxu0 %v1102
        %1151 = vmatprep.subr.mxu0 0.0
        %1152 = vmatpush1.msra.mxu0 %v1103
        %1153 = vmatprep.subr.mxu0 0.0
        %1154 = vmatpush1.msra.mxu0 0.0
        %1155 = vmatprep.subr.mxu0 0.0
        %1156 = vmatpush1.msra.mxu0 0.0
        %1157 = vmatprep.subr.mxu0 0.0
        %1158 = vmatpush1.msra.mxu0 0.0
        %1159 = vmatprep.subr.mxu0 0.0
        %1160 = vmatpush1.msra.mxu0 0.0
        %1161 = vmatprep.subr.mxu0 0.0
        %1162 = vmatpush1.msra.mxu0 0.0
        %1163 = vmatprep.subr.mxu0 0.0
        %1164 = vmatpush1.msra.mxu0 0.0
        %1165 = vmatprep.subr.mxu0 0.0
        %1166 = vmatpush1.msra.mxu0 0.0
        %1167 = vmatprep.subr.mxu0 0.0
        %1168 = vmatpush1.msra.mxu0 0.0
        %1169 = vmatprep.subr.mxu0 0.0
        %1170 = vmatpush1.msra.mxu0 0.0
        %1171 = vmatprep.subr.mxu0 0.0
        %1172 = vmatpush1.msra.mxu0 0.0
        %1173 = vmatprep.subr.mxu0 0.0
        %1174 = vmatpush1.msra.mxu0 0.0
        %1175 = vmatprep.subr.mxu0 0.0
        %1176 = vmatpush1.msra.mxu0 0.0
        %1177 = vmatprep.subr.mxu0 0.0
        %1178 = vmatpush1.msra.mxu0 0.0
        %1179 = vmatprep.subr.mxu0 0.0
        %1180 = vmatpush1.msra.mxu0 0.0
        %1181 = vmatprep.subr.mxu0 0.0
        %1182 = vmatpush1.msra.mxu0 0.0
        %1183 = vmatprep.subr.mxu0 0.0
        %1184 = vmatpush1.msra.mxu0 0.0
        %1185 = vmatprep.subr.mxu0 0.0
        %1186 = vmatpush1.msra.mxu0 0.0
        %1187 = vmatprep.subr.mxu0 0.0
        %1188 = vmatpush1.msra.mxu0 0.0
        %1189 = vmatprep.subr.mxu0 0.0
        %1190 = vmatpush1.msra.mxu0 0.0
        %1191 = vmatprep.subr.mxu0 0.0
        %1192 = vmatpush1.msra.mxu0 0.0
        %1193 = vmatprep.subr.mxu0 0.0
        %1194 = vmatpush1.msra.mxu0 0.0
        %1195 = vmatprep.subr.mxu0 0.0
        %1196 = vmatpush1.msra.mxu0 0.0
        %1197 = vmatprep.subr.mxu0 0.0
        %1198 = vmatpush1.msra.mxu0 0.0
        %1199 = vmatprep.subr.mxu0 0.0
        %1200 = vmatpush1.msra.mxu0 0.0
        %1201 = vmatprep.subr.mxu0 0.0
        %1202 = vmatpush1.msra.mxu0 0.0
        %1203 = vmatprep.subr.mxu0 0.0
        %1204 = vmatpush1.msra.mxu0 0.0
        %1205 = vmatprep.subr.mxu0 0.0
        %1206 = vmatpush1.msra.mxu0 0.0
        %1207 = vmatprep.subr.mxu0 0.0
        %1208 = vmatpush1.msra.mxu0 0.0
        %1209 = vmatprep.mubr.f32.mxu0 0.0
        %1210 = vmatmul.mubr.f32.gmra.mrb[0].mxu0 %v1134
        %v1211 = vpop.f32.mrb[0].mxu0
        %v1212 = vadd.f32 %v1115, %v1211
        %v1213 = vpop.f32.mrb[0].mxu0
        %1214 = vmatprep.mubr.f32.mxu0 0.0
        %1215 = vmatmul.mubr.f32.gmra.mrb[0].mxu0 %v1137
        %v1216 = vpop.f32.mrb[0].mxu0
        %v1217 = vadd.f32 %v1120, %v1216
        %v1218 = vpop.f32.mrb[0].mxu0
        %1219 = vmatprep.mubr.f32.mxu0 0.0
        %1220 = vmatmul.mubr.f32.gmra.mrb[0].mxu0 %v1140
        %v1221 = vpop.f32.mrb[0].mxu0
        %v1222 = vadd.f32 %v1125, %v1221
        %v1223 = vpop.f32.mrb[0].mxu0
        %1224 = vmatprep.mubr.f32.mxu0 0.0
        %1225 = vmatmul.mubr.f32.gmra.mrb[0].mxu0 %v1143
        %v1226 = vpop.f32.mrb[0].mxu0
        %v1227 = vadd.f32 %v1130, %v1226
        %v1228 = vpop.f32.mrb[0].mxu0
        %1229 = vdwg.mxu0
        %v1230 = vmax.f32 %v1212, 0.0
        %v1231 = vmax.f32 %v1217, 0.0
        %v1232 = vmax.f32 %v1222, 0.0
        %v1233 = vmax.f32 %v1227, 0.0
        %v1234 = vsel %vm1052, %v1230, 0.0
        %v1235 = vsel %vm1052, %v1231, 0.0
        %v1236 = vadd.f32 %v1234, %v1235
        %v1237 = vsel %vm1052, %v1232, 0.0
        %v1238 = vadd.f32 %v1236, %v1237
        %v1239 = vsel %vm1052, %v1233, 0.0
        %v1240 = vadd.f32 %v1238, %v1239
        %v1241 = vrot.slane %v1240, 4
        %v1242 = vadd.f32 %v1240, %v1241
        %v1243 = vrot.slane %v1242, 2
        %v1244 = vadd.f32 %v1242, %v1243
        %v1245 = vrot.slane %v1244, 1
        %v1246 = vadd.f32 %v1244, %v1245
        %v1247 = vmul.f32 %v1246, %v1066
        %v1248 = vsub.f32 %v1230, %v1247
        %v1249 = vsub.f32 %v1231, %v1247
        %v1250 = vsub.f32 %v1232, %v1247
        %v1251 = vsub.f32 %v1233, %v1247
        %v1252 = vmul.f32 %v1248, %v1248
        %v1253 = vmul.f32 %v1249, %v1249
        %v1254 = vmul.f32 %v1250, %v1250
        %v1255 = vmul.f32 %v1251, %v1251
        %v1256 = vsel %vm1052, %v1252, 0.0
        %v1257 = vsel %vm1052, %v1253, 0.0
        %v1258 = vadd.f32 %v1256, %v1257
        %v1259 = vsel %vm1052, %v1254, 0.0
        %v1260 = vadd.f32 %v1258, %v1259
        %v1261 = vsel %vm1052, %v1255, 0.0
        %v1262 = vadd.f32 %v1260, %v1261
        %v1263 = vrot.slane %v1262, 4
        %v1264 = vadd.f32 %v1262, %v1263
        %v1265 = vrot.slane %v1264, 2
        %v1266 = vadd.f32 %v1264, %v1265
        %v1267 = vrot.slane %v1266, 1
        %v1268 = vadd.f32 %v1266, %v1267
        %v1269 = vmul.f32 %v1268, %v1066
        %v1270 = vadd.f32 %v1269, 1e-05
        %v1271 = vrsqrt.pop %v1270
        %v1272 = vmul.f32 %v1248, %v1271
        %v1273 = vmul.f32 %v1249, %v1271
        %v1274 = vmul.f32 %v1250, %v1271
        %v1275 = vmul.f32 %v1251, %v1271
        %v1276 = vmul.f32 %v849, %v1272
        %v1277 = vmul.f32 %v854, %v1273
        %v1278 = vmul.f32 %v859, %v1274
        %v1279 = vmul.f32 %v864, %v1275
        %v1280 = vadd.f32 %v1276, %v869
        %v1281 = vadd.f32 %v1277, %v874
        %v1282 = vadd.f32 %v1278, %v879
        %v1283 = vadd.f32 %v1279, %v884
        %v1284 = vld [vmem:[%s10] sm:$0x3]
        %v1285 = vld [vmem:[%s11] sm:$0x3]
        %1287 = vset.pattern.permute.xlu0 0
        %1288 = vperm.xlu0 %1287, %v1285
        %v1289 = vpop.permute.xlu0 %1288
        %v1292 = vsel %vm1132, %v1284, 0
        %1294 = vmatprep.subr.mxu0 0.0
        %1295 = vmatpush1.msra.mxu0 %v1280
        %1296 = vmatprep.subr.mxu0 0.0
        %1297 = vmatpush1.msra.mxu0 %v1281
        %1298 = vmatprep.subr.mxu0 0.0
        %1299 = vmatpush1.msra.mxu0 %v1282
        %1300 = vmatprep.subr.mxu0 0.0
        %1301 = vmatpush1.msra.mxu0 %v1283
        %1302 = vmatprep.subr.mxu0 0.0
        %1303 = vmatpush1.msra.mxu0 0.0
        %1304 = vmatprep.subr.mxu0 0.0
        %1305 = vmatpush1.msra.mxu0 0.0
        %1306 = vmatprep.subr.mxu0 0.0
        %1307 = vmatpush1.msra.mxu0 0.0
        %1308 = vmatprep.subr.mxu0 0.0
        %1309 = vmatpush1.msra.mxu0 0.0
        %1310 = vmatprep.subr.mxu0 0.0
        %1311 = vmatpush1.msra.mxu0 0.0
        %1312 = vmatprep.subr.mxu0 0.0
        %1313 = vmatpush1.msra.mxu0 0.0
        %1314 = vmatprep.subr.mxu0 0.0
        %1315 = vmatpush1.msra.mxu0 0.0
        %1316 = vmatprep.subr.mxu0 0.0
        %1317 = vmatpush1.msra.mxu0 0.0
        %1318 = vmatprep.subr.mxu0 0.0
        %1319 = vmatpush1.msra.mxu0 0.0
        %1320 = vmatprep.subr.mxu0 0.0
        %1321 = vmatpush1.msra.mxu0 0.0
        %1322 = vmatprep.subr.mxu0 0.0
        %1323 = vmatpush1.msra.mxu0 0.0
        %1324 = vmatprep.subr.mxu0 0.0
        %1325 = vmatpush1.msra.mxu0 0.0
        %1326 = vmatprep.subr.mxu0 0.0
        %1327 = vmatpush1.msra.mxu0 0.0
        %1328 = vmatprep.subr.mxu0 0.0
        %1329 = vmatpush1.msra.mxu0 0.0
        %1330 = vmatprep.subr.mxu0 0.0
        %1331 = vmatpush1.msra.mxu0 0.0
        %1332 = vmatprep.subr.mxu0 0.0
        %1333 = vmatpush1.msra.mxu0 0.0
        %1334 = vmatprep.subr.mxu0 0.0
        %1335 = vmatpush1.msra.mxu0 0.0
        %1336 = vmatprep.subr.mxu0 0.0
        %1337 = vmatpush1.msra.mxu0 0.0
        %1338 = vmatprep.subr.mxu0 0.0
        %1339 = vmatpush1.msra.mxu0 0.0
        %1340 = vmatprep.subr.mxu0 0.0
        %1341 = vmatpush1.msra.mxu0 0.0
        %1342 = vmatprep.subr.mxu0 0.0
        %1343 = vmatpush1.msra.mxu0 0.0
        %1344 = vmatprep.subr.mxu0 0.0
        %1345 = vmatpush1.msra.mxu0 0.0
        %1346 = vmatprep.subr.mxu0 0.0
        %1347 = vmatpush1.msra.mxu0 0.0
        %1348 = vmatprep.subr.mxu0 0.0
        %1349 = vmatpush1.msra.mxu0 0.0
        %1350 = vmatprep.subr.mxu0 0.0
        %1351 = vmatpush1.msra.mxu0 0.0
        %1352 = vmatprep.subr.mxu0 0.0
        %1353 = vmatpush1.msra.mxu0 0.0
        %1354 = vmatprep.subr.mxu0 0.0
        %1355 = vmatpush1.msra.mxu0 0.0
        %1356 = vmatprep.subr.mxu0 0.0
        %1357 = vmatpush1.msra.mxu0 0.0
        %1358 = vmatprep.mubr.f32.mxu0 0.0
        %1359 = vmatmul.mubr.f32.gmra.mrb[0].mxu0 %v1292
        %v1360 = vpop.f32.mrb[0].mxu0
        %v1361 = vadd.f32 %v1289, %v1360
        %v1362 = vpop.f32.mrb[0].mxu0
        %1363 = vdwg.mxu0
        %vm1364 = vcmask 58368
        %1365 = vst.msk [vmem:[%s441] sm:$0x3] %vm1364, %v1361
        %s1366 = sand.u32 %s312, 1
        %s1367 = scalar_lea.sflag [#allocation3], %s1366
        %s1368 = sand.u32 %s312, 1
        %s1369 = smul.addr %s1368, 2
        %s1370 = scalar_lea.vmem [#allocation2], %s1369
        // Predicated region
        $region69: #{tpu_custom_call.1} parent=67 // pred_check
          %p1371 = pneg %p322
        $region70: #{tpu_custom_call.1} parent=67 // pred_check_branch
          %1373 = sbr.rel (%p1371) target = $region72
        $region71: #{tpu_custom_call.1} parent=67 // pred_region
          %s1375 = ssub.s32 32, 32
          %1376 = vsyncadd %s1367, %s1375
          %s1377 = sadd.s32 %s31, %s30
          %s1378 = smul.addr %s1377, 32
          %s1379 = scalar_lea.hbm %s12, %s1378
          %s1381 = sshll.u32 %s1370, 4
          %s1382 = int_to_ptr.vmem [resolvable:$true] %s1381
          %1384 = dma.vmem_to_hbm [thread:$0]  %s1382, 32, %s1379, %s1367
        $region72: #{tpu_custom_call.1} parent=67 // pred_fallthru
          _
      $region68: #{tpu_custom_call.1} parent=5 // pred_fallthru
        _
      %p1385 = scmp.le.s32.totalorder 2, %s21
      // Predicated region
      $region73: #{tpu_custom_call.1} parent=5 // pred_check
        %p1386 = pneg %p1385
      $region74: #{tpu_custom_call.1} parent=5 // pred_check_branch
        %1388 = sbr.rel (%p1386) target = $region76
      $region75: #{tpu_custom_call.1} parent=5 // pred_region
        %s1389 = ssub.s32 %s21, 2
        // Predicated region
        $region77: #{tpu_custom_call.1} parent=75 // pred_check
          %p1390 = pneg %p328
        $region78: #{tpu_custom_call.1} parent=75 // pred_check_branch
          %1392 = sbr.rel (%p1390) target = $region80
        $region79: #{tpu_custom_call.1} parent=75 // pred_region
          %s1393 = sand.u32 %s313, 1
          %s1394 = scalar_lea.sflag [#allocation3], %s1393
          %s1395 = sand.u32 %s313, 1
          %s1396 = smul.addr %s1395, 2
          %s1397 = scalar_lea.vmem [#allocation2], %s1396
          %1398 = dma.done %s1394, 32
        $region80: #{tpu_custom_call.1} parent=75 // pred_fallthru
          _
      $region76: #{tpu_custom_call.1} parent=5 // pred_fallthru
        _
    $region6: #{tpu_custom_call.1} parent=1 // loop_footer
      %s25 = sadd.s32 1, %s21
    $region7: #{tpu_custom_call.1} parent=1 // loop_footer_branch
      %20 = sbr.rel target = $region3
    $region8: #{tpu_custom_call.1} parent=1 // loop_exit
      _
    %1399 = vsyncpa [#allocation3], 1
    %s1400 = scalar_lea.sflag [#allocation3], 1
    %1401 = vsyncpa %s1400, 1

</llo_original>
